<compile_context>
chip_gen: v5e
topology: v5e:2x2
jax: 0.10.0
libtpu: 0.0.40
codegen_flags: <defaults>
</compile_context>

<pallas_src>
import numpy as np
import jax
import jax.numpy as jnp
from jax.experimental import pallas as pl
from jax.experimental.pallas import tpu as pltpu


# ----------------------------------------------------------------------------
# Deterministic numpy glue: CQT kernel bank (nnAudio CQT1992v2-style).
# librosa normalization (x sqrt(length) per bin) is folded into the kernels.
# ----------------------------------------------------------------------------
def create_cqt_kernels(sr, fmin, n_bins, bins_per_octave, filter_scale=1.0):
    """Returns (w_real [L, K], w_imag [L, K], frame_len L), float32."""
    Q = float(filter_scale) / (2.0 ** (1.0 / bins_per_octave) - 1.0)
    freqs = fmin * 2.0 ** (np.arange(n_bins, dtype=np.float64) / bins_per_octave)
    if freqs[-1] > sr / 2.0:
        raise ValueError("highest CQT bin exceeds Nyquist")
    lengths = np.ceil(Q * sr / freqs).astype(np.int64)
    frame_len = int(2 ** int(np.ceil(np.log2(lengths.max()))))

    w_real = np.zeros((frame_len, n_bins), dtype=np.float64)
    w_imag = np.zeros((frame_len, n_bins), dtype=np.float64)
    for k in range(n_bins):
        l = int(lengths[k])
        start = (frame_len - l) // 2
        n = np.arange(l, dtype=np.float64)
        window = 0.5 - 0.5 * np.cos(2.0 * np.pi * n / l)           # periodic hann
        phase = 2.0 * np.pi * (n - l // 2) * freqs[k] / sr
        sig = window * np.exp(1j * phase) / l
        sig = sig * np.sqrt(l)          # librosa norm folded into the kernel
        w_real[start:start + l, k] = sig.real
        w_imag[start:start + l, k] = sig.imag
    return w_real.astype(np.float32), w_imag.astype(np.float32), frame_len


# ----------------------------------------------------------------------------
# Wrapper-side framing (center padding, reflect), like conv1d stride=hop.
# ----------------------------------------------------------------------------
def frame_audio(audio, frame_len, hop):
    """audio [B, N] -> centered overlapping frames [B, T, frame_len]."""
    B, n = audio.shape
    pad = frame_len // 2
    if pad < n:
        padded = jnp.pad(audio, ((0, 0), (pad, pad)), mode="reflect")
    else:
        # TODO(synk): nnAudio reflect-pads; signals shorter than frame_len//2
        # would need piecewise reflection — zero padding used as a fallback.
        padded = jnp.pad(audio, ((0, 0), (pad, pad)), mode="constant")
    n_frames = n // hop + 1
    idx = (jnp.arange(n_frames, dtype=jnp.int32)[:, None] * hop
           + jnp.arange(frame_len, dtype=jnp.int32)[None, :])
    return padded[:, idx]                                   # (B, T, L)


# ----------------------------------------------------------------------------
# Pallas kernel: one (batch, frame-tile) block per grid step.
#   frames tile (tT, L) bf16 @ W_fused (L, 2*Kp) bf16  -> (tT, 2*Kp) f32 on
#   the MXU -> split re/im (static lane-aligned slices) -> magnitude ->
#   (interior tiles) direct lane-dense store / (boundary tile) mask by olens.
# ----------------------------------------------------------------------------
def _cqt_kernel(olens_ref, frames_ref, w_ref, out_ref):
    b = pl.program_id(0)
    t = pl.program_id(1)
    t_tile = out_ref.shape[0]
    kp = out_ref.shape[1]
    tile_start = t * t_tile
    n_valid = olens_ref[b]

    @pl.when(tile_start < n_valid)
    def _compute():
        x = frames_ref[...]                                      # (tT, L) bf16
        y = jnp.dot(x, w_ref[...],
                    preferred_element_type=jnp.float32)          # (tT, 2*Kp) f32
        re = y[:, :kp]                                           # lane-aligned
        im = y[:, kp:]
        mag = jnp.sqrt(re * re + im * im)                        # (tT, Kp) f32

        @pl.when(tile_start + t_tile <= n_valid)                 # interior tile
        def _store_full():
            out_ref[...] = mag.astype(out_ref.dtype)

        @pl.when(tile_start + t_tile > n_valid)                  # boundary tile
        def _store_masked():
            row = jax.lax.broadcasted_iota(jnp.int32, mag.shape, 0) + tile_start
            out_ref[...] = jnp.where(row < n_valid, mag, 0.0).astype(out_ref.dtype)

    @pl.when(tile_start >= n_valid)
    def _skip():                                                 # fully padded tile
        out_ref[...] = jnp.zeros_like(out_ref)


def _round_up(x, m):
    return ((x + m - 1) // m) * m


def _vmem_capacity_bytes():
    """Physical VMEM per TensorCore; conservative fallback if query fails."""
    try:
        cap = int(getattr(pltpu.get_tpu_info(), "vmem_capacity_bytes"))
        if cap > 0:
            return cap
    except Exception:
        pass
    return 64 << 20   # v7x per-TC size — conservative default


def cqt_pallas(frames, w_real, w_imag, olens=None, *, t_tile=2048):
    """frames: [B, T, L], w_real/w_imag: [L, K], olens: [B] frame counts or None.

    Returns (cqt_feat [B, T, K] float32, olens [B] int32)."""
    B, T, L = frames.shape
    Lw, K = w_real.shape
    assert L == Lw and w_imag.shape == (L, K)

    if olens is None:
        olens = jnp.full((B,), T, dtype=jnp.int32)
    olens = olens.astype(jnp.int32)

    Kp = _round_up(K, 128)                   # lane-dense output stores

    # Fused weight matrix: [W_real | W_imag], each bank zero-padded to Kp.
    w_fused = np.zeros((L, 2 * Kp), dtype=np.float32)
    w_fused[:, :K] = np.asarray(w_real, dtype=np.float32)
    w_fused[:, Kp:Kp + K] = np.asarray(w_imag, dtype=np.float32)
    w_fused = jnp.asarray(w_fused, dtype=jnp.bfloat16)

    # bf16 LHS: native MXU dtype, halves the dominant frames stream.
    frames = frames.astype(jnp.bfloat16)

    vmem_cap = _vmem_capacity_bytes()
    # ~96 MiB working budget on 128 MiB parts (v5e/v6e); ~40 MiB on v7x.
    budget = (96 << 20) if vmem_cap >= (96 << 20) else (40 << 20)

    # T tile: multiple of 8, auto-shrunk against the generation-aware budget.
    tT = max(8, _round_up(min(t_tile, _round_up(T, 8)), 8))

    def vmem_est(tt):
        frames_b = 2 * tt * L * 2                 # double-buffered bf16 frames tile
        out_b = 2 * tt * Kp * 4                   # double-buffered f32 output tile
        w_b = 2 * L * (2 * Kp) * 2                # double-buffered bf16 fused weights
        interm = tt * (2 * Kp) * 4 + 3 * tt * Kp * 4   # dot result + mag/mask temps
        return frames_b + out_b + w_b + interm

    while tT > 8 and vmem_est(tT) > budget:
        tT //= 2
    tT = max(8, _round_up(tT, 8))

    # Never request more scoped VMEM than physically exists (v7x: 64 MiB).
    vmem_limit = int(max(32 << 20,
                         min(vmem_est(tT) + (16 << 20), vmem_cap - (8 << 20))))

    T_pad = _round_up(T, tT)
    if T_pad != T:
        frames = jnp.pad(frames, ((0, 0), (0, T_pad - T), (0, 0)))

    grid = (B, T_pad // tT)
    out = pl.pallas_call(
        _cqt_kernel,
        out_shape=jax.ShapeDtypeStruct((B, T_pad, Kp), jnp.float32),
        grid_spec=pltpu.PrefetchScalarGridSpec(
            num_scalar_prefetch=1,
            grid=grid,
            in_specs=[
                # batch dim squeezed (None) -> kernel sees 2-D (tT, L) tiles
                pl.BlockSpec((None, tT, L), lambda b, t, ol: (b, t, 0)),
                pl.BlockSpec((L, 2 * Kp), lambda b, t, ol: (0, 0)),
            ],
            out_specs=pl.BlockSpec((None, tT, Kp), lambda b, t, ol: (b, t, 0)),
        ),
        compiler_params=pltpu.CompilerParams(
            dimension_semantics=("parallel", "parallel"),
            vmem_limit_bytes=vmem_limit,
        ),
    )(olens, frames, w_fused)
    return out[:, :T, :K], olens


def cqt_forward(audio, w_real, w_imag, frame_len, hop, ilens=None, *, t_tile=2048):
    """Module-equivalent forward.

    audio [B, N] raw waveform, ilens [B] lengths in SAMPLES (or None).
    Returns (cqt_feat [B, T, n_bins] float32, olens [B] frame counts)."""
    frames = frame_audio(audio, frame_len, hop)              # (B, T, L)
    B, T, _ = frames.shape
    if ilens is None:
        olens = jnp.full((B,), T, dtype=jnp.int32)
    else:
        olens = jnp.minimum(ilens.astype(jnp.int32) // hop + 1, T).astype(jnp.int32)
    feat, _ = cqt_pallas(frames, w_real, w_imag, olens, t_tile=t_tile)
    return feat, olens


# ----------------------------------------------------------------------------
# Driver
# ----------------------------------------------------------------------------
if __name__ == "__main__":
    # Module-consistent config (sr=16000, n_bins=80, bins_per_octave=12,
    # hop_length=160).  fmin is raised from nnAudio's default 32.7 Hz to 80 Hz
    # so the CQT kernel length stays small (L=4096) for this quick demo; the
    # Pallas kernel itself is shape-agnostic.
    sr, hop = 16000, 160
    n_bins, bins_per_octave, fmin = 80, 12, 80.0
    B, n_samples = 2, 4000

    w_real, w_imag, frame_len = create_cqt_kernels(sr, fmin, n_bins,
                                                   bins_per_octave)

    key = jax.random.PRNGKey(0)
    audio = jax.random.uniform(key, (B, n_samples), dtype=jnp.float32,
                               minval=-1.0, maxval=1.0)

    ilens = jnp.array([n_samples, 3000], dtype=jnp.int32)    # lengths in samples

    cqt_feat, olens = cqt_forward(audio, w_real, w_imag, frame_len, hop, ilens)
    cqt_feat = jax.block_until_ready(cqt_feat)
    T = n_samples // hop + 1
    assert cqt_feat.shape == (B, T, n_bins), cqt_feat.shape

    # reference: float64 host matmul on bf16-quantized inputs (same
    # quantization the kernel applies) + magnitude + pad mask
    frames = frame_audio(audio, frame_len, hop)
    frames_q = np.asarray(frames.astype(jnp.bfloat16).astype(jnp.float32),
                          dtype=np.float64)
    wr_q = np.asarray(jnp.asarray(w_real, jnp.bfloat16).astype(jnp.float32),
                      dtype=np.float64)
    wi_q = np.asarray(jnp.asarray(w_imag, jnp.bfloat16).astype(jnp.float32),
                      dtype=np.float64)
    re = frames_q @ wr_q
    im = frames_q @ wi_q
    ref = np.sqrt(re * re + im * im)
    olens_np = np.asarray(olens)
    mask = np.arange(T)[None, :, None] < olens_np[:, None, None]
    ref = np.where(mask, ref, 0.0)
    np.testing.assert_allclose(np.asarray(cqt_feat, dtype=np.float64), ref,
                               rtol=2e-2, atol=5e-3)

    print("KERNEL_OK")
</pallas_src>

<mosaic_0001>
module attributes {stable_mosaic.version = 11 : i64} {
  func.func @_cqt_kernel(%arg0: i32, %arg1: i32, %arg2: memref<2xi32, #tpu.memory_space<smem>>, %arg3: memref<1x32x4096xbf16, #tpu.memory_space<vmem>>, %arg4: memref<4096x256xbf16, #tpu.memory_space<vmem>>, %arg5: memref<1x32x128xf32, #tpu.memory_space<vmem>>) attributes {dimension_semantics = [#tpu.dimension_semantics<parallel>, #tpu.dimension_semantics<parallel>], iteration_bounds = array<i64: 2, 1>, scalar_prefetch = 1 : i64, scratch_operands = 0 : i64, tpu.core_type = #tpu.core_type<tc>, window_params = [{transform_indices = @transform_0, window_bounds = array<i64: 1, 32, 4096>}, {pipeline_mode = #tpu.pipeline_mode<synchronous>, transform_indices = @transform_1, window_bounds = array<i64: 4096, 256>}, {transform_indices = @transform_2, window_bounds = array<i64: 1, 32, 128>}]} {
    %c32_i32 = arith.constant 32 : i32
    %0 = arith.muli %arg1, %c32_i32 : i32
    %1 = arith.index_cast %arg0 : i32 to index
    %2 = memref.load %arg2[%1] : memref<2xi32, #tpu.memory_space<smem>>
    %3 = arith.cmpi slt, %0, %2 : i32
    %4 = arith.extui %3 : i1 to i32
    %c0_i32 = arith.constant 0 : i32
    %5 = arith.cmpi ne, %4, %c0_i32 : i32
    scf.if %5 {
      %c0 = arith.constant 0 : index
      %c0_1 = arith.constant 0 : index
      %c0_2 = arith.constant 0 : index
      %9 = vector.load %arg3[%c0, %c0_1, %c0_2] : memref<1x32x4096xbf16, #tpu.memory_space<vmem>>, vector<1x32x4096xbf16>
      %10 = vector.shape_cast %9 : vector<1x32x4096xbf16> to vector<32x4096xbf16>
      %c0_3 = arith.constant 0 : index
      %c0_4 = arith.constant 0 : index
      %11 = vector.load %arg4[%c0_3, %c0_4] : memref<4096x256xbf16, #tpu.memory_space<vmem>>, vector<4096x256xbf16>
      %cst = arith.constant dense<0.000000e+00> : vector<32x256xf32>
      %12 = tpu.matmul %10, %11, %cst {dimension_numbers = #tpu.dot_dimension_numbers<[1], [0], [0], [1], [0, 0, 1, 1], [], []>} : vector<32x4096xbf16>, vector<4096x256xbf16>, vector<32x256xf32> -> vector<32x256xf32>
      %13 = vector.extract_strided_slice %12 {offsets = [0, 0], sizes = [32, 128], strides = [1, 1]} : vector<32x256xf32> to vector<32x128xf32>
      %14 = vector.extract_strided_slice %12 {offsets = [0, 128], sizes = [32, 128], strides = [1, 1]} : vector<32x256xf32> to vector<32x128xf32>
      %15 = arith.mulf %13, %13 : vector<32x128xf32>
      %16 = arith.mulf %14, %14 : vector<32x128xf32>
      %17 = arith.addf %15, %16 : vector<32x128xf32>
      %18 = math.sqrt %17 : vector<32x128xf32>
      %c32_i32_5 = arith.constant 32 : i32
      %19 = arith.addi %0, %c32_i32_5 : i32
      %20 = arith.cmpi sle, %19, %2 : i32
      %21 = arith.extui %20 : i1 to i32
      %c0_i32_6 = arith.constant 0 : i32
      %22 = arith.cmpi ne, %21, %c0_i32_6 : i32
      scf.if %22 {
        %c0_9 = arith.constant 0 : index
        %c0_10 = arith.constant 0 : index
        %c0_11 = arith.constant 0 : index
        %27 = vector.load %arg5[%c0_9, %c0_10, %c0_11] : memref<1x32x128xf32, #tpu.memory_space<vmem>>, vector<1x32x128xf32>
        %28 = vector.shape_cast %27 : vector<1x32x128xf32> to vector<32x128xf32>
        %29 = vector.shape_cast %18 : vector<32x128xf32> to vector<1x32x128xf32>
        tpu.vector_store %arg5[%c0_9, %c0_10, %c0_11], %29 {strides = array<i32>} : memref<1x32x128xf32, #tpu.memory_space<vmem>>, vector<1x32x128xf32>,
      } else {
      }
      %c32_i32_7 = arith.constant 32 : i32
      %23 = arith.addi %0, %c32_i32_7 : i32
      %24 = arith.cmpi sgt, %23, %2 : i32
      %25 = arith.extui %24 : i1 to i32
      %c0_i32_8 = arith.constant 0 : i32
      %26 = arith.cmpi ne, %25, %c0_i32_8 : i32
      scf.if %26 {
        %27 = tpu.iota {dimensions = array<i32: 0>} : vector<32x128xi32>
        %28 = vector.broadcast %0 : i32 to vector<32x128xi32>
        %29 = arith.addi %27, %28 : vector<32x128xi32>
        %30 = vector.broadcast %2 : i32 to vector<32x128xi32>
        %31 = arith.cmpi slt, %29, %30 : vector<32x128xi32>
        %cst_9 = arith.constant 0.000000e+00 : f32
        %32 = vector.broadcast %cst_9 : f32 to vector<32x128xf32>
        %33 = arith.select %31, %18, %32 : vector<32x128xi1>, vector<32x128xf32>
        %c0_10 = arith.constant 0 : index
        %c0_11 = arith.constant 0 : index
        %c0_12 = arith.constant 0 : index
        %34 = vector.load %arg5[%c0_10, %c0_11, %c0_12] : memref<1x32x128xf32, #tpu.memory_space<vmem>>, vector<1x32x128xf32>
        %35 = vector.shape_cast %34 : vector<1x32x128xf32> to vector<32x128xf32>
        %36 = vector.shape_cast %33 : vector<32x128xf32> to vector<1x32x128xf32>
        tpu.vector_store %arg5[%c0_10, %c0_11, %c0_12], %36 {strides = array<i32>} : memref<1x32x128xf32, #tpu.memory_space<vmem>>, vector<1x32x128xf32>,
      } else {
      }
    } else {
    }
    %6 = arith.cmpi sge, %0, %2 : i32
    %7 = arith.extui %6 : i1 to i32
    %c0_i32_0 = arith.constant 0 : i32
    %8 = arith.cmpi ne, %7, %c0_i32_0 : i32
    scf.if %8 {
      %cst = arith.constant 0.000000e+00 : f32
      %9 = vector.broadcast %cst : f32 to vector<32x128xf32>
      %c0 = arith.constant 0 : index
      %c0_1 = arith.constant 0 : index
      %c0_2 = arith.constant 0 : index
      %10 = vector.load %arg5[%c0, %c0_1, %c0_2] : memref<1x32x128xf32, #tpu.memory_space<vmem>>, vector<1x32x128xf32>
      %11 = vector.shape_cast %10 : vector<1x32x128xf32> to vector<32x128xf32>
      %12 = vector.shape_cast %9 : vector<32x128xf32> to vector<1x32x128xf32>
      tpu.vector_store %arg5[%c0, %c0_1, %c0_2], %12 {strides = array<i32>} : memref<1x32x128xf32, #tpu.memory_space<vmem>>, vector<1x32x128xf32>,
    } else {
    }
    return
  }
  func.func @transform_0(%arg0: i32, %arg1: i32, %arg2: memref<2xi32, #tpu.memory_space<smem>>) -> (i32, i32, i32) {
    %c0_i32 = arith.constant 0 : i32
    %c0_i32_0 = arith.constant 0 : i32
    return %arg0, %arg1, %c0_i32 : i32, i32, i32
  }
  func.func @transform_1(%arg0: i32, %arg1: i32, %arg2: memref<2xi32, #tpu.memory_space<smem>>) -> (i32, i32) {
    %c0_i32 = arith.constant 0 : i32
    %c0_i32_0 = arith.constant 0 : i32
    %c0_i32_1 = arith.constant 0 : i32
    return %c0_i32, %c0_i32_0 : i32, i32
  }
  func.func @transform_2(%arg0: i32, %arg1: i32, %arg2: memref<2xi32, #tpu.memory_space<smem>>) -> (i32, i32, i32) {
    %c0_i32 = arith.constant 0 : i32
    %c0_i32_0 = arith.constant 0 : i32
    return %arg0, %arg1, %c0_i32 : i32, i32, i32
  }
}

</mosaic_0001>

<llo_original>
// kernel: tpu_custom_call.1
$region0: #{tpu_custom_call.1}
  #allocation0 [shape = 'u32[]', space=smem, size = 0x4, offset = 0x4, fixed_abs, tag = 'smem constant byte address 0x4 - core index']
  #allocation1 [shape = 'u32[72,128]{1,0:T(1,128)}', space=vmem, size = 0x9000, scoped, tag = 'internal scratch']
  #allocation2 [shape = 's32[1]{0}', space=sflag, size = 0x4, scoped, tag = 'scoped memory for tpu_custom_call.1']
  #allocation3 [shape = 'u8[512]{0}', space=smem, size = 0x200, scoped, tag = 'prefetched SMEM operand 0']
  %s0 = inlined_call_operand.hbm [shape: s32[2], index: 0, kind: input, shape index: {}]
  %s1 = inlined_call_operand.hbm [shape: bf16[2,32,4096], index: 1, kind: input, shape index: {}]
  %s2 = inlined_call_operand.hbm [shape: bf16[4096,256], index: 2, kind: input, shape index: {}]
  %s3 = inlined_call_operand.hbm [shape: f32[2,32,128], index: 3, kind: output, shape index: {}]
  %s4 = sld [smem:[#allocation0]]
  $region65: #{tpu_custom_call.1} parent=0
    _
  %s6 = ssub.s32 1, %s4
  %s7 = scalar_select 0, %s6, %s4
  %s9 = sshll.u32 %s0, 4
  %s10 = int_to_ptr.hbm [resolvable:$true] %s9
  %12 = dma.hbm_to_smem %s10, 16, [#allocation3], [#allocation2]
  %14 = dma.done [#allocation2], 16
  %15 = sfence
  $region1: #{tpu_custom_call.1} parent=0
    #allocation4 [shape = 'u8[524288]{0}', space=vmem, size = 0x80000, scoped, tag = 'input window, operand 1']
    #allocation5 [shape = 's32[2]{0}', space=sflag, size = 0x8, scoped, tag = 'scoped memory for tpu_custom_call.1']
    #allocation6 [shape = 's32[2]{0}', space=sflag, size = 0x8, scoped, tag = 'scoped memory for tpu_custom_call.1']
    #allocation7 [shape = 'u8[2097152]{0}', space=vmem, size = 0x200000, scoped, tag = 'input window, operand 2, single buffered']
    #allocation8 [shape = 's32[1]{0}', space=sflag, size = 0x4, scoped, tag = 'scoped memory for tpu_custom_call.1']
    #allocation9 [shape = 'u8[32768]{0}', space=vmem, size = 0x8000, scoped, tag = 'output window, operand 0']
    %16 = vsyncpa [#allocation5], 0
    %s17 = scalar_lea.sflag [#allocation5], 1
    %18 = vsyncpa %s17, 0
    %19 = vsyncpa [#allocation8], 0
    %20 = vsyncpa [#allocation6], 0
    %s21 = scalar_lea.sflag [#allocation6], 1
    %22 = vsyncpa %s21, 0
    loop: start=0, step=1, limit=4
    $region2: #{tpu_custom_call.1} parent=1 // loop_pre_header
      _
    $region3: #{tpu_custom_call.1} parent=1 // loop_header
      %s24 = sphi 0, %s28
      %p25 = scmp.ge.s32.totalorder %s24, 4
      %s31 = sphi 0, %s43
      %s32 = sphi 0, %s39
      %s33 = sphi 0, %s31
      %s34 = sphi 0, %s32
      %s35 = sphi 0, %s33
      %s36 = sphi 0, %s34
      %s48 = sphi 0, %s50
      %s51 = sphi 0, %s48
      %s52 = sphi 0, %s51
      %s68 = sphi 0, %s52
      %s72 = sphi 0, %s72
      %s74 = sphi 0, %s72
      %s75 = sphi 0, %s74
      %s89 = sphi 0, %s75
      %s97 = sphi 0, %s99
      %s100 = sphi 0, %s97
      %s101 = sphi 0, %s100
      %s117 = sphi 0, %s101
    $region4: #{tpu_custom_call.1} parent=1 // loop_header_branch
      %27 = sbr.rel (%p25) target = $region8
    $region5: #{tpu_custom_call.1} parent=1 // loop_body
      %s29 = ssub.s32 %s24, 1
      %s30 = ssub.s32 %s24, 2
      %s37 = sadd.s32 1, %s32
      %p38 = scmp.ge.s32.totalorder %s37, 1
      %s39 = scalar_select %p38, 0, %s37
      %s40 = sadd.s32 1, %s31
      %s41 = scalar_select %p38, %s40, %s31
      %p42 = scmp.ge.s32.totalorder %s41, 2
      %s43 = scalar_select %p42, 0, %s41
      %s44 = ssub.s32 %s31, %s43
      %s45 = ssub.s32 %s32, %s39
      %s46 = sor.u32 %s44, %s45
      %p47 = scmp.eq.s32.totalorder %s46, 0
      %s49 = sadd.s32 %s48, 1
      %s50 = scalar_select %p47, %s48, %s49
      %p53 = pneg %p47
      %p54 = scmp.eq.s32.totalorder %s24, 1
      %p55 = por %p53, %p54
      %p56 = scmp.ne.s32.totalorder %s48, %s51
      %p57 = scmp.eq.s32.totalorder %s24, 0
      %p58 = por %p56, %p57
      %p59 = scmp.ne.s32.totalorder %s48, %s51
      %p60 = scmp.eq.s32.totalorder %s29, 1
      %p61 = por %p59, %p60
      %p62 = scmp.ne.s32.totalorder %s51, %s52
      %p63 = scmp.eq.s32.totalorder %s29, 0
      %p64 = por %p62, %p63
      %p65 = scmp.ne.s32.totalorder %s51, %s52
      %p66 = scmp.eq.s32.totalorder %s30, 1
      %p67 = por %p65, %p66
      %p69 = scmp.ne.s32.totalorder %s52, %s68
      %p70 = scmp.eq.s32.totalorder %s30, 0
      %p71 = por %p69, %p70
      %s73 = sadd.s32 %s72, 1
      %p76 = scmp.eq.s32.totalorder %s24, 1
      %p77 = scmp.ne.s32.totalorder %s72, %s74
      %p78 = scmp.eq.s32.totalorder %s24, 0
      %p79 = por %p77, %p78
      %p80 = scmp.ne.s32.totalorder %s72, %s74
      %p81 = scmp.eq.s32.totalorder %s29, 1
      %p82 = por %p80, %p81
      %p83 = scmp.ne.s32.totalorder %s74, %s75
      %p84 = scmp.eq.s32.totalorder %s29, 0
      %p85 = por %p83, %p84
      %p86 = scmp.ne.s32.totalorder %s74, %s75
      %p87 = scmp.eq.s32.totalorder %s30, 1
      %p88 = por %p86, %p87
      %p90 = scmp.ne.s32.totalorder %s75, %s89
      %p91 = scmp.eq.s32.totalorder %s30, 0
      %p92 = por %p90, %p91
      %s93 = ssub.s32 %s31, %s43
      %s94 = ssub.s32 %s32, %s39
      %s95 = sor.u32 %s93, %s94
      %p96 = scmp.eq.s32.totalorder %s95, 0
      %s98 = sadd.s32 %s97, 1
      %s99 = scalar_select %p96, %s97, %s98
      %p102 = pneg %p96
      %p103 = scmp.eq.s32.totalorder %s24, 1
      %p104 = por %p102, %p103
      %p105 = scmp.ne.s32.totalorder %s97, %s100
      %p106 = scmp.eq.s32.totalorder %s24, 0
      %p107 = por %p105, %p106
      %p108 = scmp.ne.s32.totalorder %s97, %s100
      %p109 = scmp.eq.s32.totalorder %s29, 1
      %p110 = por %p108, %p109
      %p111 = scmp.ne.s32.totalorder %s100, %s101
      %p112 = scmp.eq.s32.totalorder %s29, 0
      %p113 = por %p111, %p112
      %p114 = scmp.ne.s32.totalorder %s100, %s101
      %p115 = scmp.eq.s32.totalorder %s30, 1
      %p116 = por %p114, %p115
      %p118 = scmp.ne.s32.totalorder %s101, %s117
      %p119 = scmp.eq.s32.totalorder %s30, 0
      %p120 = por %p118, %p119
      %p121 = scmp.le.s32.totalorder 1, %s24
      %p122 = scmp.lt.s32.totalorder %s24, 3
      %p123 = pnand %p121, %p122
      %p124 = pneg %p123
      // Predicated region
      $region9: #{tpu_custom_call.1} parent=5 // pred_check
        _
      $region10: #{tpu_custom_call.1} parent=5 // pred_check_branch
        %126 = sbr.rel (%p123) target = $region12
      $region11: #{tpu_custom_call.1} parent=5 // pred_region
        %s127 = ssub.s32 %s24, 1
        // Predicated region
        $region13: #{tpu_custom_call.1} parent=11 // pred_check
          %p128 = pneg %p85
        $region14: #{tpu_custom_call.1} parent=11 // pred_check_branch
          %130 = sbr.rel (%p128) target = $region16
        $region15: #{tpu_custom_call.1} parent=11 // pred_region
          %132 = vsyncadd [#allocation8], 0
          %s133 = sshll.u32 %s2, 4
          %s134 = int_to_ptr.hbm [resolvable:$true] %s133
          %s135 = sshll.u32 [#allocation7], 4
          %s136 = int_to_ptr.vmem [resolvable:$true] %s135
          %141 = dma.hbm_to_vmem [thread:$0]  %s134, 65536, %s136, [#allocation8], 128, 128, 8
        $region16: #{tpu_custom_call.1} parent=11 // pred_fallthru
          _
      $region12: #{tpu_custom_call.1} parent=5 // pred_fallthru
        _
      %p142 = scmp.lt.s32.totalorder %s24, 2
      // Predicated region
      $region17: #{tpu_custom_call.1} parent=5 // pred_check
        %p143 = pneg %p142
      $region18: #{tpu_custom_call.1} parent=5 // pred_check_branch
        %145 = sbr.rel (%p143) target = $region20
      $region19: #{tpu_custom_call.1} parent=5 // pred_region
        // Predicated region
        $region21: #{tpu_custom_call.1} parent=19 // pred_check
          %p146 = pneg %p58
        $region22: #{tpu_custom_call.1} parent=19 // pred_check_branch
          %148 = sbr.rel (%p146) target = $region24
        $region23: #{tpu_custom_call.1} parent=19 // pred_region
          %s149 = sand.u32 %s48, 1
          %s150 = scalar_lea.sflag [#allocation5], %s149
          %s151 = sand.u32 %s48, 1
          %s152 = smul.addr %s151, 512
          %s153 = scalar_lea.vmem [#allocation4], %s152
          %s154 = smul.u32 4, %s32
          %156 = vsyncadd %s150, 0
          %s157 = smul.addr %s154, 32
          %s158 = smul.addr %s31, 128
          %s159 = sadd.s32 %s157, %s158
          %s160 = smul.addr %s159, 4
          %s161 = scalar_lea.hbm %s1, %s160
          %s162 = sshll.u32 %s161, 4
          %s163 = int_to_ptr.hbm [resolvable:$true] %s162
          %s164 = sshll.u32 %s153, 4
          %s165 = int_to_ptr.vmem [resolvable:$true] %s164
          %170 = dma.hbm_to_vmem [thread:$0]  %s163, 8192, %s165, %s150, 2048, 2048, 128
        $region24: #{tpu_custom_call.1} parent=19 // pred_fallthru
          _
      $region20: #{tpu_custom_call.1} parent=5 // pred_fallthru
        _
      %p171 = scmp.le.s32.totalorder 1, %s24
      %p172 = scmp.lt.s32.totalorder %s24, 3
      %p173 = pnand %p171, %p172
      %p174 = pneg %p173
      // Predicated region
      $region25: #{tpu_custom_call.1} parent=5 // pred_check
        _
      $region26: #{tpu_custom_call.1} parent=5 // pred_check_branch
        %176 = sbr.rel (%p173) target = $region28
      $region27: #{tpu_custom_call.1} parent=5 // pred_region
        %s177 = ssub.s32 %s24, 1
        %s178 = sand.u32 %s51, 1
        %s179 = scalar_lea.sflag [#allocation5], %s178
        %s180 = sand.u32 %s51, 1
        %s181 = smul.addr %s180, 512
        %s182 = scalar_lea.vmem [#allocation4], %s181
        // Predicated region
        $region29: #{tpu_custom_call.1} parent=27 // pred_check
          %p183 = pneg %p64
        $region30: #{tpu_custom_call.1} parent=27 // pred_check_branch
          %185 = sbr.rel (%p183) target = $region32
        $region31: #{tpu_custom_call.1} parent=27 // pred_region
          %187 = dma.done %s179, 8192
        $region32: #{tpu_custom_call.1} parent=27 // pred_fallthru
          _
        // Predicated region
        $region33: #{tpu_custom_call.1} parent=27 // pred_check
          %p188 = pneg %p85
        $region34: #{tpu_custom_call.1} parent=27 // pred_check_branch
          %190 = sbr.rel (%p188) target = $region36
        $region35: #{tpu_custom_call.1} parent=27 // pred_region
          %192 = dma.done [#allocation8], 65536
        $region36: #{tpu_custom_call.1} parent=27 // pred_fallthru
          _
        %s193 = sand.u32 %s51, 1
        %s194 = scalar_lea.sflag [#allocation5], %s193
        %s195 = sand.u32 %s51, 1
        %s196 = smul.addr %s195, 512
        %s197 = scalar_lea.vmem [#allocation4], %s196
        %p198 = pneg %p64
        %p199 = pneg %p61
        %p200 = pneg %p85
        %p201 = pneg %p82
        %p202 = pneg %p113
        %p203 = pneg %p110
        %s204 = sand.u32 %s100, 1
        %s205 = scalar_lea.sflag [#allocation6], %s204
        %s206 = sand.u32 %s100, 1
        %s207 = smul.addr %s206, 32
        %s208 = scalar_lea.vmem [#allocation9], %s207
        %s209 = smul.u32 4, %s34
        %s210 = smul.u32 4, %s34
        %s211 = smul.u32 %s34, 32
        %s212 = sld [smem:[#allocation3 + %s33]]
        %p213 = scmp.lt.s32.totalorder %s211, %s212
        // Predicated region
        $region37: #{tpu_custom_call.1} parent=27 // pred_check
          %p214 = pneg %p213
        $region38: #{tpu_custom_call.1} parent=27 // pred_check_branch
          %216 = sbr.rel (%p214) target = $region40
        $region39: #{tpu_custom_call.1} parent=27 // pred_region
          %v217 = vld [vmem:[%s182] sm:$0xff]
          %v218 = vld [vmem:[%s182 + $0x8] sm:$0xff]
          %v219 = vld [vmem:[%s182 + $0x10] sm:$0xff]
          %v220 = vld [vmem:[%s182 + $0x18] sm:$0xff]
          %v221 = vld [vmem:[%s182 + $0x20] sm:$0xff]
          %v222 = vld [vmem:[%s182 + $0x28] sm:$0xff]
          %v223 = vld [vmem:[%s182 + $0x30] sm:$0xff]
          %v224 = vld [vmem:[%s182 + $0x38] sm:$0xff]
          %v225 = vld [vmem:[%s182 + $0x40] sm:$0xff]
          %v226 = vld [vmem:[%s182 + $0x48] sm:$0xff]
          %v227 = vld [vmem:[%s182 + $0x50] sm:$0xff]
          %v228 = vld [vmem:[%s182 + $0x58] sm:$0xff]
          %v229 = vld [vmem:[%s182 + $0x60] sm:$0xff]
          %v230 = vld [vmem:[%s182 + $0x68] sm:$0xff]
          %v231 = vld [vmem:[%s182 + $0x70] sm:$0xff]
          %v232 = vld [vmem:[%s182 + $0x78] sm:$0xff]
          %v233 = vld [vmem:[%s182 + $0x80] sm:$0xff]
          %v234 = vld [vmem:[%s182 + $0x88] sm:$0xff]
          %v235 = vld [vmem:[%s182 + $0x90] sm:$0xff]
          %v236 = vld [vmem:[%s182 + $0x98] sm:$0xff]
          %v237 = vld [vmem:[%s182 + $0xa0] sm:$0xff]
          %v238 = vld [vmem:[%s182 + $0xa8] sm:$0xff]
          %v239 = vld [vmem:[%s182 + $0xb0] sm:$0xff]
          %v240 = vld [vmem:[%s182 + $0xb8] sm:$0xff]
          %v241 = vld [vmem:[%s182 + $0xc0] sm:$0xff]
          %v242 = vld [vmem:[%s182 + $0xc8] sm:$0xff]
          %v243 = vld [vmem:[%s182 + $0xd0] sm:$0xff]
          %v244 = vld [vmem:[%s182 + $0xd8] sm:$0xff]
          %v245 = vld [vmem:[%s182 + $0xe0] sm:$0xff]
          %v246 = vld [vmem:[%s182 + $0xe8] sm:$0xff]
          %v247 = vld [vmem:[%s182 + $0xf0] sm:$0xff]
          %v248 = vld [vmem:[%s182 + $0xf8] sm:$0xff]
          %v249 = vld [vmem:[%s182 + $0x100] sm:$0xff]
          %v250 = vld [vmem:[%s182 + $0x108] sm:$0xff]
          %v251 = vld [vmem:[%s182 + $0x110] sm:$0xff]
          %v252 = vld [vmem:[%s182 + $0x118] sm:$0xff]
          %v253 = vld [vmem:[%s182 + $0x120] sm:$0xff]
          %v254 = vld [vmem:[%s182 + $0x128] sm:$0xff]
          %v255 = vld [vmem:[%s182 + $0x130] sm:$0xff]
          %v256 = vld [vmem:[%s182 + $0x138] sm:$0xff]
          %v257 = vld [vmem:[%s182 + $0x140] sm:$0xff]
          %v258 = vld [vmem:[%s182 + $0x148] sm:$0xff]
          %v259 = vld [vmem:[%s182 + $0x150] sm:$0xff]
          %v260 = vld [vmem:[%s182 + $0x158] sm:$0xff]
          %v261 = vld [vmem:[%s182 + $0x160] sm:$0xff]
          %v262 = vld [vmem:[%s182 + $0x168] sm:$0xff]
          %v263 = vld [vmem:[%s182 + $0x170] sm:$0xff]
          %v264 = vld [vmem:[%s182 + $0x178] sm:$0xff]
          %v265 = vld [vmem:[%s182 + $0x180] sm:$0xff]
          %v266 = vld [vmem:[%s182 + $0x188] sm:$0xff]
          %v267 = vld [vmem:[%s182 + $0x190] sm:$0xff]
          %v268 = vld [vmem:[%s182 + $0x198] sm:$0xff]
          %v269 = vld [vmem:[%s182 + $0x1a0] sm:$0xff]
          %v270 = vld [vmem:[%s182 + $0x1a8] sm:$0xff]
          %v271 = vld [vmem:[%s182 + $0x1b0] sm:$0xff]
          %v272 = vld [vmem:[%s182 + $0x1b8] sm:$0xff]
          %v273 = vld [vmem:[%s182 + $0x1c0] sm:$0xff]
          %v274 = vld [vmem:[%s182 + $0x1c8] sm:$0xff]
          %v275 = vld [vmem:[%s182 + $0x1d0] sm:$0xff]
          %v276 = vld [vmem:[%s182 + $0x1d8] sm:$0xff]
          %v277 = vld [vmem:[%s182 + $0x1e0] sm:$0xff]
          %v278 = vld [vmem:[%s182 + $0x1e8] sm:$0xff]
          %v279 = vld [vmem:[%s182 + $0x1f0] sm:$0xff]
          %v280 = vld [vmem:[%s182 + $0x1f8] sm:$0xff]
          %v281 = vld [vmem:[#allocation7] sm:$0xff]
          %v282 = vld [vmem:[#allocation7 + $0x8] sm:$0xff]
          %v283 = vld [vmem:[#allocation7 + $0x10] sm:$0xff]
          %v284 = vld [vmem:[#allocation7 + $0x18] sm:$0xff]
          %v285 = vld [vmem:[#allocation7 + $0x20] sm:$0xff]
          %v286 = vld [vmem:[#allocation7 + $0x28] sm:$0xff]
          %v287 = vld [vmem:[#allocation7 + $0x30] sm:$0xff]
          %v288 = vld [vmem:[#allocation7 + $0x38] sm:$0xff]
          %v289 = vld [vmem:[#allocation7 + $0x40] sm:$0xff]
          %v290 = vld [vmem:[#allocation7 + $0x48] sm:$0xff]
          %v291 = vld [vmem:[#allocation7 + $0x50] sm:$0xff]
          %v292 = vld [vmem:[#allocation7 + $0x58] sm:$0xff]
          %v293 = vld [vmem:[#allocation7 + $0x60] sm:$0xff]
          %v294 = vld [vmem:[#allocation7 + $0x68] sm:$0xff]
          %v295 = vld [vmem:[#allocation7 + $0x70] sm:$0xff]
          %v296 = vld [vmem:[#allocation7 + $0x78] sm:$0xff]
          %v297 = vld [vmem:[#allocation7 + $0x80] sm:$0xff]
          %v298 = vld [vmem:[#allocation7 + $0x88] sm:$0xff]
          %v299 = vld [vmem:[#allocation7 + $0x90] sm:$0xff]
          %v300 = vld [vmem:[#allocation7 + $0x98] sm:$0xff]
          %v301 = vld [vmem:[#allocation7 + $0xa0] sm:$0xff]
          %v302 = vld [vmem:[#allocation7 + $0xa8] sm:$0xff]
          %v303 = vld [vmem:[#allocation7 + $0xb0] sm:$0xff]
          %v304 = vld [vmem:[#allocation7 + $0xb8] sm:$0xff]
          %v305 = vld [vmem:[#allocation7 + $0xc0] sm:$0xff]
          %v306 = vld [vmem:[#allocation7 + $0xc8] sm:$0xff]
          %v307 = vld [vmem:[#allocation7 + $0xd0] sm:$0xff]
          %v308 = vld [vmem:[#allocation7 + $0xd8] sm:$0xff]
          %v309 = vld [vmem:[#allocation7 + $0xe0] sm:$0xff]
          %v310 = vld [vmem:[#allocation7 + $0xe8] sm:$0xff]
          %v311 = vld [vmem:[#allocation7 + $0xf0] sm:$0xff]
          %v312 = vld [vmem:[#allocation7 + $0xf8] sm:$0xff]
          %v313 = vld [vmem:[#allocation7 + $0x100] sm:$0xff]
          %v314 = vld [vmem:[#allocation7 + $0x108] sm:$0xff]
          %v315 = vld [vmem:[#allocation7 + $0x110] sm:$0xff]
          %v316 = vld [vmem:[#allocation7 + $0x118] sm:$0xff]
          %v317 = vld [vmem:[#allocation7 + $0x120] sm:$0xff]
          %v318 = vld [vmem:[#allocation7 + $0x128] sm:$0xff]
          %v319 = vld [vmem:[#allocation7 + $0x130] sm:$0xff]
          %v320 = vld [vmem:[#allocation7 + $0x138] sm:$0xff]
          %v321 = vld [vmem:[#allocation7 + $0x140] sm:$0xff]
          %v322 = vld [vmem:[#allocation7 + $0x148] sm:$0xff]
          %v323 = vld [vmem:[#allocation7 + $0x150] sm:$0xff]
          %v324 = vld [vmem:[#allocation7 + $0x158] sm:$0xff]
          %v325 = vld [vmem:[#allocation7 + $0x160] sm:$0xff]
          %v326 = vld [vmem:[#allocation7 + $0x168] sm:$0xff]
          %v327 = vld [vmem:[#allocation7 + $0x170] sm:$0xff]
          %v328 = vld [vmem:[#allocation7 + $0x178] sm:$0xff]
          %v329 = vld [vmem:[#allocation7 + $0x180] sm:$0xff]
          %v330 = vld [vmem:[#allocation7 + $0x188] sm:$0xff]
          %v331 = vld [vmem:[#allocation7 + $0x190] sm:$0xff]
          %v332 = vld [vmem:[#allocation7 + $0x198] sm:$0xff]
          %v333 = vld [vmem:[#allocation7 + $0x1a0] sm:$0xff]
          %v334 = vld [vmem:[#allocation7 + $0x1a8] sm:$0xff]
          %v335 = vld [vmem:[#allocation7 + $0x1b0] sm:$0xff]
          %v336 = vld [vmem:[#allocation7 + $0x1b8] sm:$0xff]
          %v337 = vld [vmem:[#allocation7 + $0x1c0] sm:$0xff]
          %v338 = vld [vmem:[#allocation7 + $0x1c8] sm:$0xff]
          %v339 = vld [vmem:[#allocation7 + $0x1d0] sm:$0xff]
          %v340 = vld [vmem:[#allocation7 + $0x1d8] sm:$0xff]
          %v341 = vld [vmem:[#allocation7 + $0x1e0] sm:$0xff]
          %v342 = vld [vmem:[#allocation7 + $0x1e8] sm:$0xff]
          %v343 = vld [vmem:[#allocation7 + $0x1f0] sm:$0xff]
          %v344 = vld [vmem:[#allocation7 + $0x1f8] sm:$0xff]
          %v345 = vld [vmem:[#allocation7 + $0x200] sm:$0xff]
          %v346 = vld [vmem:[#allocation7 + $0x208] sm:$0xff]
          %v347 = vld [vmem:[#allocation7 + $0x210] sm:$0xff]
          %v348 = vld [vmem:[#allocation7 + $0x218] sm:$0xff]
          %v349 = vld [vmem:[#allocation7 + $0x220] sm:$0xff]
          %v350 = vld [vmem:[#allocation7 + $0x228] sm:$0xff]
          %v351 = vld [vmem:[#allocation7 + $0x230] sm:$0xff]
          %v352 = vld [vmem:[#allocation7 + $0x238] sm:$0xff]
          %v353 = vld [vmem:[#allocation7 + $0x240] sm:$0xff]
          %v354 = vld [vmem:[#allocation7 + $0x248] sm:$0xff]
          %v355 = vld [vmem:[#allocation7 + $0x250] sm:$0xff]
          %v356 = vld [vmem:[#allocation7 + $0x258] sm:$0xff]
          %v357 = vld [vmem:[#allocation7 + $0x260] sm:$0xff]
          %v358 = vld [vmem:[#allocation7 + $0x268] sm:$0xff]
          %v359 = vld [vmem:[#allocation7 + $0x270] sm:$0xff]
          %v360 = vld [vmem:[#allocation7 + $0x278] sm:$0xff]
          %v361 = vld [vmem:[#allocation7 + $0x280] sm:$0xff]
          %v362 = vld [vmem:[#allocation7 + $0x288] sm:$0xff]
          %v363 = vld [vmem:[#allocation7 + $0x290] sm:$0xff]
          %v364 = vld [vmem:[#allocation7 + $0x298] sm:$0xff]
          %v365 = vld [vmem:[#allocation7 + $0x2a0] sm:$0xff]
          %v366 = vld [vmem:[#allocation7 + $0x2a8] sm:$0xff]
          %v367 = vld [vmem:[#allocation7 + $0x2b0] sm:$0xff]
          %v368 = vld [vmem:[#allocation7 + $0x2b8] sm:$0xff]
          %v369 = vld [vmem:[#allocation7 + $0x2c0] sm:$0xff]
          %v370 = vld [vmem:[#allocation7 + $0x2c8] sm:$0xff]
          %v371 = vld [vmem:[#allocation7 + $0x2d0] sm:$0xff]
          %v372 = vld [vmem:[#allocation7 + $0x2d8] sm:$0xff]
          %v373 = vld [vmem:[#allocation7 + $0x2e0] sm:$0xff]
          %v374 = vld [vmem:[#allocation7 + $0x2e8] sm:$0xff]
          %v375 = vld [vmem:[#allocation7 + $0x2f0] sm:$0xff]
          %v376 = vld [vmem:[#allocation7 + $0x2f8] sm:$0xff]
          %v377 = vld [vmem:[#allocation7 + $0x300] sm:$0xff]
          %v378 = vld [vmem:[#allocation7 + $0x308] sm:$0xff]
          %v379 = vld [vmem:[#allocation7 + $0x310] sm:$0xff]
          %v380 = vld [vmem:[#allocation7 + $0x318] sm:$0xff]
          %v381 = vld [vmem:[#allocation7 + $0x320] sm:$0xff]
          %v382 = vld [vmem:[#allocation7 + $0x328] sm:$0xff]
          %v383 = vld [vmem:[#allocation7 + $0x330] sm:$0xff]
          %v384 = vld [vmem:[#allocation7 + $0x338] sm:$0xff]
          %v385 = vld [vmem:[#allocation7 + $0x340] sm:$0xff]
          %v386 = vld [vmem:[#allocation7 + $0x348] sm:$0xff]
          %v387 = vld [vmem:[#allocation7 + $0x350] sm:$0xff]
          %v388 = vld [vmem:[#allocation7 + $0x358] sm:$0xff]
          %v389 = vld [vmem:[#allocation7 + $0x360] sm:$0xff]
          %v390 = vld [vmem:[#allocation7 + $0x368] sm:$0xff]
          %v391 = vld [vmem:[#allocation7 + $0x370] sm:$0xff]
          %v392 = vld [vmem:[#allocation7 + $0x378] sm:$0xff]
          %v393 = vld [vmem:[#allocation7 + $0x380] sm:$0xff]
          %v394 = vld [vmem:[#allocation7 + $0x388] sm:$0xff]
          %v395 = vld [vmem:[#allocation7 + $0x390] sm:$0xff]
          %v396 = vld [vmem:[#allocation7 + $0x398] sm:$0xff]
          %v397 = vld [vmem:[#allocation7 + $0x3a0] sm:$0xff]
          %v398 = vld [vmem:[#allocation7 + $0x3a8] sm:$0xff]
          %v399 = vld [vmem:[#allocation7 + $0x3b0] sm:$0xff]
          %v400 = vld [vmem:[#allocation7 + $0x3b8] sm:$0xff]
          %v401 = vld [vmem:[#allocation7 + $0x3c0] sm:$0xff]
          %v402 = vld [vmem:[#allocation7 + $0x3c8] sm:$0xff]
          %v403 = vld [vmem:[#allocation7 + $0x3d0] sm:$0xff]
          %v404 = vld [vmem:[#allocation7 + $0x3d8] sm:$0xff]
          %v405 = vld [vmem:[#allocation7 + $0x3e0] sm:$0xff]
          %v406 = vld [vmem:[#allocation7 + $0x3e8] sm:$0xff]
          %v407 = vld [vmem:[#allocation7 + $0x3f0] sm:$0xff]
          %v408 = vld [vmem:[#allocation7 + $0x3f8] sm:$0xff]
          %v409 = vld [vmem:[#allocation7 + $0x400] sm:$0xff]
          %v410 = vld [vmem:[#allocation7 + $0x408] sm:$0xff]
          %v411 = vld [vmem:[#allocation7 + $0x410] sm:$0xff]
          %v412 = vld [vmem:[#allocation7 + $0x418] sm:$0xff]
          %v413 = vld [vmem:[#allocation7 + $0x420] sm:$0xff]
          %v414 = vld [vmem:[#allocation7 + $0x428] sm:$0xff]
          %v415 = vld [vmem:[#allocation7 + $0x430] sm:$0xff]
          %v416 = vld [vmem:[#allocation7 + $0x438] sm:$0xff]
          %v417 = vld [vmem:[#allocation7 + $0x440] sm:$0xff]
          %v418 = vld [vmem:[#allocation7 + $0x448] sm:$0xff]
          %v419 = vld [vmem:[#allocation7 + $0x450] sm:$0xff]
          %v420 = vld [vmem:[#allocation7 + $0x458] sm:$0xff]
          %v421 = vld [vmem:[#allocation7 + $0x460] sm:$0xff]
          %v422 = vld [vmem:[#allocation7 + $0x468] sm:$0xff]
          %v423 = vld [vmem:[#allocation7 + $0x470] sm:$0xff]
          %v424 = vld [vmem:[#allocation7 + $0x478] sm:$0xff]
          %v425 = vld [vmem:[#allocation7 + $0x480] sm:$0xff]
          %v426 = vld [vmem:[#allocation7 + $0x488] sm:$0xff]
          %v427 = vld [vmem:[#allocation7 + $0x490] sm:$0xff]
          %v428 = vld [vmem:[#allocation7 + $0x498] sm:$0xff]
          %v429 = vld [vmem:[#allocation7 + $0x4a0] sm:$0xff]
          %v430 = vld [vmem:[#allocation7 + $0x4a8] sm:$0xff]
          %v431 = vld [vmem:[#allocation7 + $0x4b0] sm:$0xff]
          %v432 = vld [vmem:[#allocation7 + $0x4b8] sm:$0xff]
          %v433 = vld [vmem:[#allocation7 + $0x4c0] sm:$0xff]
          %v434 = vld [vmem:[#allocation7 + $0x4c8] sm:$0xff]
          %v435 = vld [vmem:[#allocation7 + $0x4d0] sm:$0xff]
          %v436 = vld [vmem:[#allocation7 + $0x4d8] sm:$0xff]
          %v437 = vld [vmem:[#allocation7 + $0x4e0] sm:$0xff]
          %v438 = vld [vmem:[#allocation7 + $0x4e8] sm:$0xff]
          %v439 = vld [vmem:[#allocation7 + $0x4f0] sm:$0xff]
          %v440 = vld [vmem:[#allocation7 + $0x4f8] sm:$0xff]
          %v441 = vld [vmem:[#allocation7 + $0x500] sm:$0xff]
          %v442 = vld [vmem:[#allocation7 + $0x508] sm:$0xff]
          %v443 = vld [vmem:[#allocation7 + $0x510] sm:$0xff]
          %v444 = vld [vmem:[#allocation7 + $0x518] sm:$0xff]
          %v445 = vld [vmem:[#allocation7 + $0x520] sm:$0xff]
          %v446 = vld [vmem:[#allocation7 + $0x528] sm:$0xff]
          %v447 = vld [vmem:[#allocation7 + $0x530] sm:$0xff]
          %v448 = vld [vmem:[#allocation7 + $0x538] sm:$0xff]
          %v449 = vld [vmem:[#allocation7 + $0x540] sm:$0xff]
          %v450 = vld [vmem:[#allocation7 + $0x548] sm:$0xff]
          %v451 = vld [vmem:[#allocation7 + $0x550] sm:$0xff]
          %v452 = vld [vmem:[#allocation7 + $0x558] sm:$0xff]
          %v453 = vld [vmem:[#allocation7 + $0x560] sm:$0xff]
          %v454 = vld [vmem:[#allocation7 + $0x568] sm:$0xff]
          %v455 = vld [vmem:[#allocation7 + $0x570] sm:$0xff]
          %v456 = vld [vmem:[#allocation7 + $0x578] sm:$0xff]
          %v457 = vld [vmem:[#allocation7 + $0x580] sm:$0xff]
          %v458 = vld [vmem:[#allocation7 + $0x588] sm:$0xff]
          %v459 = vld [vmem:[#allocation7 + $0x590] sm:$0xff]
          %v460 = vld [vmem:[#allocation7 + $0x598] sm:$0xff]
          %v461 = vld [vmem:[#allocation7 + $0x5a0] sm:$0xff]
          %v462 = vld [vmem:[#allocation7 + $0x5a8] sm:$0xff]
          %v463 = vld [vmem:[#allocation7 + $0x5b0] sm:$0xff]
          %v464 = vld [vmem:[#allocation7 + $0x5b8] sm:$0xff]
          %v465 = vld [vmem:[#allocation7 + $0x5c0] sm:$0xff]
          %v466 = vld [vmem:[#allocation7 + $0x5c8] sm:$0xff]
          %v467 = vld [vmem:[#allocation7 + $0x5d0] sm:$0xff]
          %v468 = vld [vmem:[#allocation7 + $0x5d8] sm:$0xff]
          %v469 = vld [vmem:[#allocation7 + $0x5e0] sm:$0xff]
          %v470 = vld [vmem:[#allocation7 + $0x5e8] sm:$0xff]
          %v471 = vld [vmem:[#allocation7 + $0x5f0] sm:$0xff]
          %v472 = vld [vmem:[#allocation7 + $0x5f8] sm:$0xff]
          %v473 = vld [vmem:[#allocation7 + $0x600] sm:$0xff]
          %v474 = vld [vmem:[#allocation7 + $0x608] sm:$0xff]
          %v475 = vld [vmem:[#allocation7 + $0x610] sm:$0xff]
          %v476 = vld [vmem:[#allocation7 + $0x618] sm:$0xff]
          %v477 = vld [vmem:[#allocation7 + $0x620] sm:$0xff]
          %v478 = vld [vmem:[#allocation7 + $0x628] sm:$0xff]
          %v479 = vld [vmem:[#allocation7 + $0x630] sm:$0xff]
          %v480 = vld [vmem:[#allocation7 + $0x638] sm:$0xff]
          %v481 = vld [vmem:[#allocation7 + $0x640] sm:$0xff]
          %v482 = vld [vmem:[#allocation7 + $0x648] sm:$0xff]
          %v483 = vld [vmem:[#allocation7 + $0x650] sm:$0xff]
          %v484 = vld [vmem:[#allocation7 + $0x658] sm:$0xff]
          %v485 = vld [vmem:[#allocation7 + $0x660] sm:$0xff]
          %v486 = vld [vmem:[#allocation7 + $0x668] sm:$0xff]
          %v487 = vld [vmem:[#allocation7 + $0x670] sm:$0xff]
          %v488 = vld [vmem:[#allocation7 + $0x678] sm:$0xff]
          %v489 = vld [vmem:[#allocation7 + $0x680] sm:$0xff]
          %v490 = vld [vmem:[#allocation7 + $0x688] sm:$0xff]
          %v491 = vld [vmem:[#allocation7 + $0x690] sm:$0xff]
          %v492 = vld [vmem:[#allocation7 + $0x698] sm:$0xff]
          %v493 = vld [vmem:[#allocation7 + $0x6a0] sm:$0xff]
          %v494 = vld [vmem:[#allocation7 + $0x6a8] sm:$0xff]
          %v495 = vld [vmem:[#allocation7 + $0x6b0] sm:$0xff]
          %v496 = vld [vmem:[#allocation7 + $0x6b8] sm:$0xff]
          %v497 = vld [vmem:[#allocation7 + $0x6c0] sm:$0xff]
          %v498 = vld [vmem:[#allocation7 + $0x6c8] sm:$0xff]
          %v499 = vld [vmem:[#allocation7 + $0x6d0] sm:$0xff]
          %v500 = vld [vmem:[#allocation7 + $0x6d8] sm:$0xff]
          %v501 = vld [vmem:[#allocation7 + $0x6e0] sm:$0xff]
          %v502 = vld [vmem:[#allocation7 + $0x6e8] sm:$0xff]
          %v503 = vld [vmem:[#allocation7 + $0x6f0] sm:$0xff]
          %v504 = vld [vmem:[#allocation7 + $0x6f8] sm:$0xff]
          %v505 = vld [vmem:[#allocation7 + $0x700] sm:$0xff]
          %v506 = vld [vmem:[#allocation7 + $0x708] sm:$0xff]
          %v507 = vld [vmem:[#allocation7 + $0x710] sm:$0xff]
          %v508 = vld [vmem:[#allocation7 + $0x718] sm:$0xff]
          %v509 = vld [vmem:[#allocation7 + $0x720] sm:$0xff]
          %v510 = vld [vmem:[#allocation7 + $0x728] sm:$0xff]
          %v511 = vld [vmem:[#allocation7 + $0x730] sm:$0xff]
          %v512 = vld [vmem:[#allocation7 + $0x738] sm:$0xff]
          %v513 = vld [vmem:[#allocation7 + $0x740] sm:$0xff]
          %v514 = vld [vmem:[#allocation7 + $0x748] sm:$0xff]
          %v515 = vld [vmem:[#allocation7 + $0x750] sm:$0xff]
          %v516 = vld [vmem:[#allocation7 + $0x758] sm:$0xff]
          %v517 = vld [vmem:[#allocation7 + $0x760] sm:$0xff]
          %v518 = vld [vmem:[#allocation7 + $0x768] sm:$0xff]
          %v519 = vld [vmem:[#allocation7 + $0x770] sm:$0xff]
          %v520 = vld [vmem:[#allocation7 + $0x778] sm:$0xff]
          %v521 = vld [vmem:[#allocation7 + $0x780] sm:$0xff]
          %v522 = vld [vmem:[#allocation7 + $0x788] sm:$0xff]
          %v523 = vld [vmem:[#allocation7 + $0x790] sm:$0xff]
          %v524 = vld [vmem:[#allocation7 + $0x798] sm:$0xff]
          %v525 = vld [vmem:[#allocation7 + $0x7a0] sm:$0xff]
          %v526 = vld [vmem:[#allocation7 + $0x7a8] sm:$0xff]
          %v527 = vld [vmem:[#allocation7 + $0x7b0] sm:$0xff]
          %v528 = vld [vmem:[#allocation7 + $0x7b8] sm:$0xff]
          %v529 = vld [vmem:[#allocation7 + $0x7c0] sm:$0xff]
          %v530 = vld [vmem:[#allocation7 + $0x7c8] sm:$0xff]
          %v531 = vld [vmem:[#allocation7 + $0x7d0] sm:$0xff]
          %v532 = vld [vmem:[#allocation7 + $0x7d8] sm:$0xff]
          %v533 = vld [vmem:[#allocation7 + $0x7e0] sm:$0xff]
          %v534 = vld [vmem:[#allocation7 + $0x7e8] sm:$0xff]
          %v535 = vld [vmem:[#allocation7 + $0x7f0] sm:$0xff]
          %v536 = vld [vmem:[#allocation7 + $0x7f8] sm:$0xff]
          %v537 = vld [vmem:[#allocation7 + $0x800] sm:$0xff]
          %v538 = vld [vmem:[#allocation7 + $0x808] sm:$0xff]
          %v539 = vld [vmem:[#allocation7 + $0x810] sm:$0xff]
          %v540 = vld [vmem:[#allocation7 + $0x818] sm:$0xff]
          %v541 = vld [vmem:[#allocation7 + $0x820] sm:$0xff]
          %v542 = vld [vmem:[#allocation7 + $0x828] sm:$0xff]
          %v543 = vld [vmem:[#allocation7 + $0x830] sm:$0xff]
          %v544 = vld [vmem:[#allocation7 + $0x838] sm:$0xff]
          %v545 = vld [vmem:[#allocation7 + $0x840] sm:$0xff]
          %v546 = vld [vmem:[#allocation7 + $0x848] sm:$0xff]
          %v547 = vld [vmem:[#allocation7 + $0x850] sm:$0xff]
          %v548 = vld [vmem:[#allocation7 + $0x858] sm:$0xff]
          %v549 = vld [vmem:[#allocation7 + $0x860] sm:$0xff]
          %v550 = vld [vmem:[#allocation7 + $0x868] sm:$0xff]
          %v551 = vld [vmem:[#allocation7 + $0x870] sm:$0xff]
          %v552 = vld [vmem:[#allocation7 + $0x878] sm:$0xff]
          %v553 = vld [vmem:[#allocation7 + $0x880] sm:$0xff]
          %v554 = vld [vmem:[#allocation7 + $0x888] sm:$0xff]
          %v555 = vld [vmem:[#allocation7 + $0x890] sm:$0xff]
          %v556 = vld [vmem:[#allocation7 + $0x898] sm:$0xff]
          %v557 = vld [vmem:[#allocation7 + $0x8a0] sm:$0xff]
          %v558 = vld [vmem:[#allocation7 + $0x8a8] sm:$0xff]
          %v559 = vld [vmem:[#allocation7 + $0x8b0] sm:$0xff]
          %v560 = vld [vmem:[#allocation7 + $0x8b8] sm:$0xff]
          %v561 = vld [vmem:[#allocation7 + $0x8c0] sm:$0xff]
          %v562 = vld [vmem:[#allocation7 + $0x8c8] sm:$0xff]
          %v563 = vld [vmem:[#allocation7 + $0x8d0] sm:$0xff]
          %v564 = vld [vmem:[#allocation7 + $0x8d8] sm:$0xff]
          %v565 = vld [vmem:[#allocation7 + $0x8e0] sm:$0xff]
          %v566 = vld [vmem:[#allocation7 + $0x8e8] sm:$0xff]
          %v567 = vld [vmem:[#allocation7 + $0x8f0] sm:$0xff]
          %v568 = vld [vmem:[#allocation7 + $0x8f8] sm:$0xff]
          %v569 = vld [vmem:[#allocation7 + $0x900] sm:$0xff]
          %v570 = vld [vmem:[#allocation7 + $0x908] sm:$0xff]
          %v571 = vld [vmem:[#allocation7 + $0x910] sm:$0xff]
          %v572 = vld [vmem:[#allocation7 + $0x918] sm:$0xff]
          %v573 = vld [vmem:[#allocation7 + $0x920] sm:$0xff]
          %v574 = vld [vmem:[#allocation7 + $0x928] sm:$0xff]
          %v575 = vld [vmem:[#allocation7 + $0x930] sm:$0xff]
          %v576 = vld [vmem:[#allocation7 + $0x938] sm:$0xff]
          %v577 = vld [vmem:[#allocation7 + $0x940] sm:$0xff]
          %v578 = vld [vmem:[#allocation7 + $0x948] sm:$0xff]
          %v579 = vld [vmem:[#allocation7 + $0x950] sm:$0xff]
          %v580 = vld [vmem:[#allocation7 + $0x958] sm:$0xff]
          %v581 = vld [vmem:[#allocation7 + $0x960] sm:$0xff]
          %v582 = vld [vmem:[#allocation7 + $0x968] sm:$0xff]
          %v583 = vld [vmem:[#allocation7 + $0x970] sm:$0xff]
          %v584 = vld [vmem:[#allocation7 + $0x978] sm:$0xff]
          %v585 = vld [vmem:[#allocation7 + $0x980] sm:$0xff]
          %v586 = vld [vmem:[#allocation7 + $0x988] sm:$0xff]
          %v587 = vld [vmem:[#allocation7 + $0x990] sm:$0xff]
          %v588 = vld [vmem:[#allocation7 + $0x998] sm:$0xff]
          %v589 = vld [vmem:[#allocation7 + $0x9a0] sm:$0xff]
          %v590 = vld [vmem:[#allocation7 + $0x9a8] sm:$0xff]
          %v591 = vld [vmem:[#allocation7 + $0x9b0] sm:$0xff]
          %v592 = vld [vmem:[#allocation7 + $0x9b8] sm:$0xff]
          %v593 = vld [vmem:[#allocation7 + $0x9c0] sm:$0xff]
          %v594 = vld [vmem:[#allocation7 + $0x9c8] sm:$0xff]
          %v595 = vld [vmem:[#allocation7 + $0x9d0] sm:$0xff]
          %v596 = vld [vmem:[#allocation7 + $0x9d8] sm:$0xff]
          %v597 = vld [vmem:[#allocation7 + $0x9e0] sm:$0xff]
          %v598 = vld [vmem:[#allocation7 + $0x9e8] sm:$0xff]
          %v599 = vld [vmem:[#allocation7 + $0x9f0] sm:$0xff]
          %v600 = vld [vmem:[#allocation7 + $0x9f8] sm:$0xff]
          %v601 = vld [vmem:[#allocation7 + $0xa00] sm:$0xff]
          %v602 = vld [vmem:[#allocation7 + $0xa08] sm:$0xff]
          %v603 = vld [vmem:[#allocation7 + $0xa10] sm:$0xff]
          %v604 = vld [vmem:[#allocation7 + $0xa18] sm:$0xff]
          %v605 = vld [vmem:[#allocation7 + $0xa20] sm:$0xff]
          %v606 = vld [vmem:[#allocation7 + $0xa28] sm:$0xff]
          %v607 = vld [vmem:[#allocation7 + $0xa30] sm:$0xff]
          %v608 = vld [vmem:[#allocation7 + $0xa38] sm:$0xff]
          %v609 = vld [vmem:[#allocation7 + $0xa40] sm:$0xff]
          %v610 = vld [vmem:[#allocation7 + $0xa48] sm:$0xff]
          %v611 = vld [vmem:[#allocation7 + $0xa50] sm:$0xff]
          %v612 = vld [vmem:[#allocation7 + $0xa58] sm:$0xff]
          %v613 = vld [vmem:[#allocation7 + $0xa60] sm:$0xff]
          %v614 = vld [vmem:[#allocation7 + $0xa68] sm:$0xff]
          %v615 = vld [vmem:[#allocation7 + $0xa70] sm:$0xff]
          %v616 = vld [vmem:[#allocation7 + $0xa78] sm:$0xff]
          %v617 = vld [vmem:[#allocation7 + $0xa80] sm:$0xff]
          %v618 = vld [vmem:[#allocation7 + $0xa88] sm:$0xff]
          %v619 = vld [vmem:[#allocation7 + $0xa90] sm:$0xff]
          %v620 = vld [vmem:[#allocation7 + $0xa98] sm:$0xff]
          %v621 = vld [vmem:[#allocation7 + $0xaa0] sm:$0xff]
          %v622 = vld [vmem:[#allocation7 + $0xaa8] sm:$0xff]
          %v623 = vld [vmem:[#allocation7 + $0xab0] sm:$0xff]
          %v624 = vld [vmem:[#allocation7 + $0xab8] sm:$0xff]
          %v625 = vld [vmem:[#allocation7 + $0xac0] sm:$0xff]
          %v626 = vld [vmem:[#allocation7 + $0xac8] sm:$0xff]
          %v627 = vld [vmem:[#allocation7 + $0xad0] sm:$0xff]
          %v628 = vld [vmem:[#allocation7 + $0xad8] sm:$0xff]
          %v629 = vld [vmem:[#allocation7 + $0xae0] sm:$0xff]
          %v630 = vld [vmem:[#allocation7 + $0xae8] sm:$0xff]
          %v631 = vld [vmem:[#allocation7 + $0xaf0] sm:$0xff]
          %v632 = vld [vmem:[#allocation7 + $0xaf8] sm:$0xff]
          %v633 = vld [vmem:[#allocation7 + $0xb00] sm:$0xff]
          %v634 = vld [vmem:[#allocation7 + $0xb08] sm:$0xff]
          %v635 = vld [vmem:[#allocation7 + $0xb10] sm:$0xff]
          %v636 = vld [vmem:[#allocation7 + $0xb18] sm:$0xff]
          %v637 = vld [vmem:[#allocation7 + $0xb20] sm:$0xff]
          %v638 = vld [vmem:[#allocation7 + $0xb28] sm:$0xff]
          %v639 = vld [vmem:[#allocation7 + $0xb30] sm:$0xff]
          %v640 = vld [vmem:[#allocation7 + $0xb38] sm:$0xff]
          %v641 = vld [vmem:[#allocation7 + $0xb40] sm:$0xff]
          %v642 = vld [vmem:[#allocation7 + $0xb48] sm:$0xff]
          %v643 = vld [vmem:[#allocation7 + $0xb50] sm:$0xff]
          %v644 = vld [vmem:[#allocation7 + $0xb58] sm:$0xff]
          %v645 = vld [vmem:[#allocation7 + $0xb60] sm:$0xff]
          %v646 = vld [vmem:[#allocation7 + $0xb68] sm:$0xff]
          %v647 = vld [vmem:[#allocation7 + $0xb70] sm:$0xff]
          %v648 = vld [vmem:[#allocation7 + $0xb78] sm:$0xff]
          %v649 = vld [vmem:[#allocation7 + $0xb80] sm:$0xff]
          %v650 = vld [vmem:[#allocation7 + $0xb88] sm:$0xff]
          %v651 = vld [vmem:[#allocation7 + $0xb90] sm:$0xff]
          %v652 = vld [vmem:[#allocation7 + $0xb98] sm:$0xff]
          %v653 = vld [vmem:[#allocation7 + $0xba0] sm:$0xff]
          %v654 = vld [vmem:[#allocation7 + $0xba8] sm:$0xff]
          %v655 = vld [vmem:[#allocation7 + $0xbb0] sm:$0xff]
          %v656 = vld [vmem:[#allocation7 + $0xbb8] sm:$0xff]
          %v657 = vld [vmem:[#allocation7 + $0xbc0] sm:$0xff]
          %v658 = vld [vmem:[#allocation7 + $0xbc8] sm:$0xff]
          %v659 = vld [vmem:[#allocation7 + $0xbd0] sm:$0xff]
          %v660 = vld [vmem:[#allocation7 + $0xbd8] sm:$0xff]
          %v661 = vld [vmem:[#allocation7 + $0xbe0] sm:$0xff]
          %v662 = vld [vmem:[#allocation7 + $0xbe8] sm:$0xff]
          %v663 = vld [vmem:[#allocation7 + $0xbf0] sm:$0xff]
          %v664 = vld [vmem:[#allocation7 + $0xbf8] sm:$0xff]
          %v665 = vld [vmem:[#allocation7 + $0xc00] sm:$0xff]
          %v666 = vld [vmem:[#allocation7 + $0xc08] sm:$0xff]
          %v667 = vld [vmem:[#allocation7 + $0xc10] sm:$0xff]
          %v668 = vld [vmem:[#allocation7 + $0xc18] sm:$0xff]
          %v669 = vld [vmem:[#allocation7 + $0xc20] sm:$0xff]
          %v670 = vld [vmem:[#allocation7 + $0xc28] sm:$0xff]
          %v671 = vld [vmem:[#allocation7 + $0xc30] sm:$0xff]
          %v672 = vld [vmem:[#allocation7 + $0xc38] sm:$0xff]
          %v673 = vld [vmem:[#allocation7 + $0xc40] sm:$0xff]
          %v674 = vld [vmem:[#allocation7 + $0xc48] sm:$0xff]
          %v675 = vld [vmem:[#allocation7 + $0xc50] sm:$0xff]
          %v676 = vld [vmem:[#allocation7 + $0xc58] sm:$0xff]
          %v677 = vld [vmem:[#allocation7 + $0xc60] sm:$0xff]
          %v678 = vld [vmem:[#allocation7 + $0xc68] sm:$0xff]
          %v679 = vld [vmem:[#allocation7 + $0xc70] sm:$0xff]
          %v680 = vld [vmem:[#allocation7 + $0xc78] sm:$0xff]
          %v681 = vld [vmem:[#allocation7 + $0xc80] sm:$0xff]
          %v682 = vld [vmem:[#allocation7 + $0xc88] sm:$0xff]
          %v683 = vld [vmem:[#allocation7 + $0xc90] sm:$0xff]
          %v684 = vld [vmem:[#allocation7 + $0xc98] sm:$0xff]
          %v685 = vld [vmem:[#allocation7 + $0xca0] sm:$0xff]
          %v686 = vld [vmem:[#allocation7 + $0xca8] sm:$0xff]
          %v687 = vld [vmem:[#allocation7 + $0xcb0] sm:$0xff]
          %v688 = vld [vmem:[#allocation7 + $0xcb8] sm:$0xff]
          %v689 = vld [vmem:[#allocation7 + $0xcc0] sm:$0xff]
          %v690 = vld [vmem:[#allocation7 + $0xcc8] sm:$0xff]
          %v691 = vld [vmem:[#allocation7 + $0xcd0] sm:$0xff]
          %v692 = vld [vmem:[#allocation7 + $0xcd8] sm:$0xff]
          %v693 = vld [vmem:[#allocation7 + $0xce0] sm:$0xff]
          %v694 = vld [vmem:[#allocation7 + $0xce8] sm:$0xff]
          %v695 = vld [vmem:[#allocation7 + $0xcf0] sm:$0xff]
          %v696 = vld [vmem:[#allocation7 + $0xcf8] sm:$0xff]
          %v697 = vld [vmem:[#allocation7 + $0xd00] sm:$0xff]
          %v698 = vld [vmem:[#allocation7 + $0xd08] sm:$0xff]
          %v699 = vld [vmem:[#allocation7 + $0xd10] sm:$0xff]
          %v700 = vld [vmem:[#allocation7 + $0xd18] sm:$0xff]
          %v701 = vld [vmem:[#allocation7 + $0xd20] sm:$0xff]
          %v702 = vld [vmem:[#allocation7 + $0xd28] sm:$0xff]
          %v703 = vld [vmem:[#allocation7 + $0xd30] sm:$0xff]
          %v704 = vld [vmem:[#allocation7 + $0xd38] sm:$0xff]
          %v705 = vld [vmem:[#allocation7 + $0xd40] sm:$0xff]
          %v706 = vld [vmem:[#allocation7 + $0xd48] sm:$0xff]
          %v707 = vld [vmem:[#allocation7 + $0xd50] sm:$0xff]
          %v708 = vld [vmem:[#allocation7 + $0xd58] sm:$0xff]
          %v709 = vld [vmem:[#allocation7 + $0xd60] sm:$0xff]
          %v710 = vld [vmem:[#allocation7 + $0xd68] sm:$0xff]
          %v711 = vld [vmem:[#allocation7 + $0xd70] sm:$0xff]
          %v712 = vld [vmem:[#allocation7 + $0xd78] sm:$0xff]
          %v713 = vld [vmem:[#allocation7 + $0xd80] sm:$0xff]
          %v714 = vld [vmem:[#allocation7 + $0xd88] sm:$0xff]
          %v715 = vld [vmem:[#allocation7 + $0xd90] sm:$0xff]
          %v716 = vld [vmem:[#allocation7 + $0xd98] sm:$0xff]
          %v717 = vld [vmem:[#allocation7 + $0xda0] sm:$0xff]
          %v718 = vld [vmem:[#allocation7 + $0xda8] sm:$0xff]
          %v719 = vld [vmem:[#allocation7 + $0xdb0] sm:$0xff]
          %v720 = vld [vmem:[#allocation7 + $0xdb8] sm:$0xff]
          %v721 = vld [vmem:[#allocation7 + $0xdc0] sm:$0xff]
          %v722 = vld [vmem:[#allocation7 + $0xdc8] sm:$0xff]
          %v723 = vld [vmem:[#allocation7 + $0xdd0] sm:$0xff]
          %v724 = vld [vmem:[#allocation7 + $0xdd8] sm:$0xff]
          %v725 = vld [vmem:[#allocation7 + $0xde0] sm:$0xff]
          %v726 = vld [vmem:[#allocation7 + $0xde8] sm:$0xff]
          %v727 = vld [vmem:[#allocation7 + $0xdf0] sm:$0xff]
          %v728 = vld [vmem:[#allocation7 + $0xdf8] sm:$0xff]
          %v729 = vld [vmem:[#allocation7 + $0xe00] sm:$0xff]
          %v730 = vld [vmem:[#allocation7 + $0xe08] sm:$0xff]
          %v731 = vld [vmem:[#allocation7 + $0xe10] sm:$0xff]
          %v732 = vld [vmem:[#allocation7 + $0xe18] sm:$0xff]
          %v733 = vld [vmem:[#allocation7 + $0xe20] sm:$0xff]
          %v734 = vld [vmem:[#allocation7 + $0xe28] sm:$0xff]
          %v735 = vld [vmem:[#allocation7 + $0xe30] sm:$0xff]
          %v736 = vld [vmem:[#allocation7 + $0xe38] sm:$0xff]
          %v737 = vld [vmem:[#allocation7 + $0xe40] sm:$0xff]
          %v738 = vld [vmem:[#allocation7 + $0xe48] sm:$0xff]
          %v739 = vld [vmem:[#allocation7 + $0xe50] sm:$0xff]
          %v740 = vld [vmem:[#allocation7 + $0xe58] sm:$0xff]
          %v741 = vld [vmem:[#allocation7 + $0xe60] sm:$0xff]
          %v742 = vld [vmem:[#allocation7 + $0xe68] sm:$0xff]
          %v743 = vld [vmem:[#allocation7 + $0xe70] sm:$0xff]
          %v744 = vld [vmem:[#allocation7 + $0xe78] sm:$0xff]
          %v745 = vld [vmem:[#allocation7 + $0xe80] sm:$0xff]
          %v746 = vld [vmem:[#allocation7 + $0xe88] sm:$0xff]
          %v747 = vld [vmem:[#allocation7 + $0xe90] sm:$0xff]
          %v748 = vld [vmem:[#allocation7 + $0xe98] sm:$0xff]
          %v749 = vld [vmem:[#allocation7 + $0xea0] sm:$0xff]
          %v750 = vld [vmem:[#allocation7 + $0xea8] sm:$0xff]
          %v751 = vld [vmem:[#allocation7 + $0xeb0] sm:$0xff]
          %v752 = vld [vmem:[#allocation7 + $0xeb8] sm:$0xff]
          %v753 = vld [vmem:[#allocation7 + $0xec0] sm:$0xff]
          %v754 = vld [vmem:[#allocation7 + $0xec8] sm:$0xff]
          %v755 = vld [vmem:[#allocation7 + $0xed0] sm:$0xff]
          %v756 = vld [vmem:[#allocation7 + $0xed8] sm:$0xff]
          %v757 = vld [vmem:[#allocation7 + $0xee0] sm:$0xff]
          %v758 = vld [vmem:[#allocation7 + $0xee8] sm:$0xff]
          %v759 = vld [vmem:[#allocation7 + $0xef0] sm:$0xff]
          %v760 = vld [vmem:[#allocation7 + $0xef8] sm:$0xff]
          %v761 = vld [vmem:[#allocation7 + $0xf00] sm:$0xff]
          %v762 = vld [vmem:[#allocation7 + $0xf08] sm:$0xff]
          %v763 = vld [vmem:[#allocation7 + $0xf10] sm:$0xff]
          %v764 = vld [vmem:[#allocation7 + $0xf18] sm:$0xff]
          %v765 = vld [vmem:[#allocation7 + $0xf20] sm:$0xff]
          %v766 = vld [vmem:[#allocation7 + $0xf28] sm:$0xff]
          %v767 = vld [vmem:[#allocation7 + $0xf30] sm:$0xff]
          %v768 = vld [vmem:[#allocation7 + $0xf38] sm:$0xff]
          %v769 = vld [vmem:[#allocation7 + $0xf40] sm:$0xff]
          %v770 = vld [vmem:[#allocation7 + $0xf48] sm:$0xff]
          %v771 = vld [vmem:[#allocation7 + $0xf50] sm:$0xff]
          %v772 = vld [vmem:[#allocation7 + $0xf58] sm:$0xff]
          %v773 = vld [vmem:[#allocation7 + $0xf60] sm:$0xff]
          %v774 = vld [vmem:[#allocation7 + $0xf68] sm:$0xff]
          %v775 = vld [vmem:[#allocation7 + $0xf70] sm:$0xff]
          %v776 = vld [vmem:[#allocation7 + $0xf78] sm:$0xff]
          %v777 = vld [vmem:[#allocation7 + $0xf80] sm:$0xff]
          %v778 = vld [vmem:[#allocation7 + $0xf88] sm:$0xff]
          %v779 = vld [vmem:[#allocation7 + $0xf90] sm:$0xff]
          %v780 = vld [vmem:[#allocation7 + $0xf98] sm:$0xff]
          %v781 = vld [vmem:[#allocation7 + $0xfa0] sm:$0xff]
          %v782 = vld [vmem:[#allocation7 + $0xfa8] sm:$0xff]
          %v783 = vld [vmem:[#allocation7 + $0xfb0] sm:$0xff]
          %v784 = vld [vmem:[#allocation7 + $0xfb8] sm:$0xff]
          %v785 = vld [vmem:[#allocation7 + $0xfc0] sm:$0xff]
          %v786 = vld [vmem:[#allocation7 + $0xfc8] sm:$0xff]
          %v787 = vld [vmem:[#allocation7 + $0xfd0] sm:$0xff]
          %v788 = vld [vmem:[#allocation7 + $0xfd8] sm:$0xff]
          %v789 = vld [vmem:[#allocation7 + $0xfe0] sm:$0xff]
          %v790 = vld [vmem:[#allocation7 + $0xfe8] sm:$0xff]
          %v791 = vld [vmem:[#allocation7 + $0xff0] sm:$0xff]
          %v792 = vld [vmem:[#allocation7 + $0xff8] sm:$0xff]
          %v857 = vunpack.c.l.b16 %v217
          %v858 = vunpack.c.h.b16 %v217
          %v859 = vunpack.c.l.b16 %v218
          %v860 = vunpack.c.h.b16 %v218
          %v861 = vunpack.c.l.b16 %v219
          %v862 = vunpack.c.h.b16 %v219
          %v863 = vunpack.c.l.b16 %v220
          %v864 = vunpack.c.h.b16 %v220
          %v865 = vunpack.c.l.b16 %v221
          %v866 = vunpack.c.h.b16 %v221
          %v867 = vunpack.c.l.b16 %v222
          %v868 = vunpack.c.h.b16 %v222
          %v869 = vunpack.c.l.b16 %v223
          %v870 = vunpack.c.h.b16 %v223
          %v871 = vunpack.c.l.b16 %v224
          %v872 = vunpack.c.h.b16 %v224
          %v873 = vunpack.c.l.b16 %v225
          %v874 = vunpack.c.h.b16 %v225
          %v875 = vunpack.c.l.b16 %v226
          %v876 = vunpack.c.h.b16 %v226
          %v877 = vunpack.c.l.b16 %v227
          %v878 = vunpack.c.h.b16 %v227
          %v879 = vunpack.c.l.b16 %v228
          %v880 = vunpack.c.h.b16 %v228
          %v881 = vunpack.c.l.b16 %v229
          %v882 = vunpack.c.h.b16 %v229
          %v883 = vunpack.c.l.b16 %v230
          %v884 = vunpack.c.h.b16 %v230
          %v885 = vunpack.c.l.b16 %v231
          %v886 = vunpack.c.h.b16 %v231
          %v887 = vunpack.c.l.b16 %v232
          %v888 = vunpack.c.h.b16 %v232
          %v889 = vunpack.c.l.b16 %v233
          %v890 = vunpack.c.h.b16 %v233
          %v891 = vunpack.c.l.b16 %v234
          %v892 = vunpack.c.h.b16 %v234
          %v893 = vunpack.c.l.b16 %v235
          %v894 = vunpack.c.h.b16 %v235
          %v895 = vunpack.c.l.b16 %v236
          %v896 = vunpack.c.h.b16 %v236
          %v897 = vunpack.c.l.b16 %v237
          %v898 = vunpack.c.h.b16 %v237
          %v899 = vunpack.c.l.b16 %v238
          %v900 = vunpack.c.h.b16 %v238
          %v901 = vunpack.c.l.b16 %v239
          %v902 = vunpack.c.h.b16 %v239
          %v903 = vunpack.c.l.b16 %v240
          %v904 = vunpack.c.h.b16 %v240
          %v905 = vunpack.c.l.b16 %v241
          %v906 = vunpack.c.h.b16 %v241
          %v907 = vunpack.c.l.b16 %v242
          %v908 = vunpack.c.h.b16 %v242
          %v909 = vunpack.c.l.b16 %v243
          %v910 = vunpack.c.h.b16 %v243
          %v911 = vunpack.c.l.b16 %v244
          %v912 = vunpack.c.h.b16 %v244
          %v913 = vunpack.c.l.b16 %v245
          %v914 = vunpack.c.h.b16 %v245
          %v915 = vunpack.c.l.b16 %v246
          %v916 = vunpack.c.h.b16 %v246
          %v917 = vunpack.c.l.b16 %v247
          %v918 = vunpack.c.h.b16 %v247
          %v919 = vunpack.c.l.b16 %v248
          %v920 = vunpack.c.h.b16 %v248
          %v921 = vunpack.c.l.b16 %v249
          %v922 = vunpack.c.h.b16 %v249
          %v923 = vunpack.c.l.b16 %v250
          %v924 = vunpack.c.h.b16 %v250
          %v925 = vunpack.c.l.b16 %v251
          %v926 = vunpack.c.h.b16 %v251
          %v927 = vunpack.c.l.b16 %v252
          %v928 = vunpack.c.h.b16 %v252
          %v929 = vunpack.c.l.b16 %v253
          %v930 = vunpack.c.h.b16 %v253
          %v931 = vunpack.c.l.b16 %v254
          %v932 = vunpack.c.h.b16 %v254
          %v933 = vunpack.c.l.b16 %v255
          %v934 = vunpack.c.h.b16 %v255
          %v935 = vunpack.c.l.b16 %v256
          %v936 = vunpack.c.h.b16 %v256
          %v937 = vunpack.c.l.b16 %v257
          %v938 = vunpack.c.h.b16 %v257
          %v939 = vunpack.c.l.b16 %v258
          %v940 = vunpack.c.h.b16 %v258
          %v941 = vunpack.c.l.b16 %v259
          %v942 = vunpack.c.h.b16 %v259
          %v943 = vunpack.c.l.b16 %v260
          %v944 = vunpack.c.h.b16 %v260
          %v945 = vunpack.c.l.b16 %v261
          %v946 = vunpack.c.h.b16 %v261
          %v947 = vunpack.c.l.b16 %v262
          %v948 = vunpack.c.h.b16 %v262
          %v949 = vunpack.c.l.b16 %v263
          %v950 = vunpack.c.h.b16 %v263
          %v951 = vunpack.c.l.b16 %v264
          %v952 = vunpack.c.h.b16 %v264
          %v953 = vunpack.c.l.b16 %v265
          %v954 = vunpack.c.h.b16 %v265
          %v955 = vunpack.c.l.b16 %v266
          %v956 = vunpack.c.h.b16 %v266
          %v957 = vunpack.c.l.b16 %v267
          %v958 = vunpack.c.h.b16 %v267
          %v959 = vunpack.c.l.b16 %v268
          %v960 = vunpack.c.h.b16 %v268
          %v961 = vunpack.c.l.b16 %v269
          %v962 = vunpack.c.h.b16 %v269
          %v963 = vunpack.c.l.b16 %v270
          %v964 = vunpack.c.h.b16 %v270
          %v965 = vunpack.c.l.b16 %v271
          %v966 = vunpack.c.h.b16 %v271
          %v967 = vunpack.c.l.b16 %v272
          %v968 = vunpack.c.h.b16 %v272
          %v969 = vunpack.c.l.b16 %v273
          %v970 = vunpack.c.h.b16 %v273
          %v971 = vunpack.c.l.b16 %v274
          %v972 = vunpack.c.h.b16 %v274
          %v973 = vunpack.c.l.b16 %v275
          %v974 = vunpack.c.h.b16 %v275
          %v975 = vunpack.c.l.b16 %v276
          %v976 = vunpack.c.h.b16 %v276
          %v977 = vunpack.c.l.b16 %v277
          %v978 = vunpack.c.h.b16 %v277
          %v979 = vunpack.c.l.b16 %v278
          %v980 = vunpack.c.h.b16 %v278
          %v981 = vunpack.c.l.b16 %v279
          %v982 = vunpack.c.h.b16 %v279
          %v983 = vunpack.c.l.b16 %v280
          %v984 = vunpack.c.h.b16 %v280
          %v985 = vpack.c.b16 %v889, %v857
          %v986 = vpack.c.b16 %v890, %v858
          %v987 = vpack.c.b16 %v891, %v859
          %v988 = vpack.c.b16 %v892, %v860
          %v989 = vpack.c.b16 %v893, %v861
          %v990 = vpack.c.b16 %v894, %v862
          %v991 = vpack.c.b16 %v895, %v863
          %v992 = vpack.c.b16 %v896, %v864
          %v993 = vpack.c.b16 %v897, %v865
          %v994 = vpack.c.b16 %v898, %v866
          %v995 = vpack.c.b16 %v899, %v867
          %v996 = vpack.c.b16 %v900, %v868
          %v997 = vpack.c.b16 %v901, %v869
          %v998 = vpack.c.b16 %v902, %v870
          %v999 = vpack.c.b16 %v903, %v871
          %v1000 = vpack.c.b16 %v904, %v872
          %v1001 = vpack.c.b16 %v905, %v873
          %v1002 = vpack.c.b16 %v906, %v874
          %v1003 = vpack.c.b16 %v907, %v875
          %v1004 = vpack.c.b16 %v908, %v876
          %v1005 = vpack.c.b16 %v909, %v877
          %v1006 = vpack.c.b16 %v910, %v878
          %v1007 = vpack.c.b16 %v911, %v879
          %v1008 = vpack.c.b16 %v912, %v880
          %v1009 = vpack.c.b16 %v913, %v881
          %v1010 = vpack.c.b16 %v914, %v882
          %v1011 = vpack.c.b16 %v915, %v883
          %v1012 = vpack.c.b16 %v916, %v884
          %v1013 = vpack.c.b16 %v917, %v885
          %v1014 = vpack.c.b16 %v918, %v886
          %v1015 = vpack.c.b16 %v919, %v887
          %v1016 = vpack.c.b16 %v920, %v888
          %v1017 = vpack.c.b16 %v953, %v921
          %v1018 = vpack.c.b16 %v954, %v922
          %v1019 = vpack.c.b16 %v955, %v923
          %v1020 = vpack.c.b16 %v956, %v924
          %v1021 = vpack.c.b16 %v957, %v925
          %v1022 = vpack.c.b16 %v958, %v926
          %v1023 = vpack.c.b16 %v959, %v927
          %v1024 = vpack.c.b16 %v960, %v928
          %v1025 = vpack.c.b16 %v961, %v929
          %v1026 = vpack.c.b16 %v962, %v930
          %v1027 = vpack.c.b16 %v963, %v931
          %v1028 = vpack.c.b16 %v964, %v932
          %v1029 = vpack.c.b16 %v965, %v933
          %v1030 = vpack.c.b16 %v966, %v934
          %v1031 = vpack.c.b16 %v967, %v935
          %v1032 = vpack.c.b16 %v968, %v936
          %v1033 = vpack.c.b16 %v969, %v937
          %v1034 = vpack.c.b16 %v970, %v938
          %v1035 = vpack.c.b16 %v971, %v939
          %v1036 = vpack.c.b16 %v972, %v940
          %v1037 = vpack.c.b16 %v973, %v941
          %v1038 = vpack.c.b16 %v974, %v942
          %v1039 = vpack.c.b16 %v975, %v943
          %v1040 = vpack.c.b16 %v976, %v944
          %v1041 = vpack.c.b16 %v977, %v945
          %v1042 = vpack.c.b16 %v978, %v946
          %v1043 = vpack.c.b16 %v979, %v947
          %v1044 = vpack.c.b16 %v980, %v948
          %v1045 = vpack.c.b16 %v981, %v949
          %v1046 = vpack.c.b16 %v982, %v950
          %v1047 = vpack.c.b16 %v983, %v951
          %v1048 = vpack.c.b16 %v984, %v952
          %v1625 = vunpack.c.l.b16 %v281
          %v1626 = vunpack.c.h.b16 %v281
          %v1627 = vunpack.c.l.b16 %v282
          %v1628 = vunpack.c.h.b16 %v282
          %v1629 = vunpack.c.l.b16 %v283
          %v1630 = vunpack.c.h.b16 %v283
          %v1631 = vunpack.c.l.b16 %v284
          %v1632 = vunpack.c.h.b16 %v284
          %v1633 = vunpack.c.l.b16 %v285
          %v1634 = vunpack.c.h.b16 %v285
          %v1635 = vunpack.c.l.b16 %v286
          %v1636 = vunpack.c.h.b16 %v286
          %v1637 = vunpack.c.l.b16 %v287
          %v1638 = vunpack.c.h.b16 %v287
          %v1639 = vunpack.c.l.b16 %v288
          %v1640 = vunpack.c.h.b16 %v288
          %v1641 = vunpack.c.l.b16 %v289
          %v1642 = vunpack.c.h.b16 %v289
          %v1643 = vunpack.c.l.b16 %v290
          %v1644 = vunpack.c.h.b16 %v290
          %v1645 = vunpack.c.l.b16 %v291
          %v1646 = vunpack.c.h.b16 %v291
          %v1647 = vunpack.c.l.b16 %v292
          %v1648 = vunpack.c.h.b16 %v292
          %v1649 = vunpack.c.l.b16 %v293
          %v1650 = vunpack.c.h.b16 %v293
          %v1651 = vunpack.c.l.b16 %v294
          %v1652 = vunpack.c.h.b16 %v294
          %v1653 = vunpack.c.l.b16 %v295
          %v1654 = vunpack.c.h.b16 %v295
          %v1655 = vunpack.c.l.b16 %v296
          %v1656 = vunpack.c.h.b16 %v296
          %v1657 = vunpack.c.l.b16 %v297
          %v1658 = vunpack.c.h.b16 %v297
          %v1659 = vunpack.c.l.b16 %v298
          %v1660 = vunpack.c.h.b16 %v298
          %v1661 = vunpack.c.l.b16 %v299
          %v1662 = vunpack.c.h.b16 %v299
          %v1663 = vunpack.c.l.b16 %v300
          %v1664 = vunpack.c.h.b16 %v300
          %v1665 = vunpack.c.l.b16 %v301
          %v1666 = vunpack.c.h.b16 %v301
          %v1667 = vunpack.c.l.b16 %v302
          %v1668 = vunpack.c.h.b16 %v302
          %v1669 = vunpack.c.l.b16 %v303
          %v1670 = vunpack.c.h.b16 %v303
          %v1671 = vunpack.c.l.b16 %v304
          %v1672 = vunpack.c.h.b16 %v304
          %v1673 = vunpack.c.l.b16 %v305
          %v1674 = vunpack.c.h.b16 %v305
          %v1675 = vunpack.c.l.b16 %v306
          %v1676 = vunpack.c.h.b16 %v306
          %v1677 = vunpack.c.l.b16 %v307
          %v1678 = vunpack.c.h.b16 %v307
          %v1679 = vunpack.c.l.b16 %v308
          %v1680 = vunpack.c.h.b16 %v308
          %v1681 = vunpack.c.l.b16 %v309
          %v1682 = vunpack.c.h.b16 %v309
          %v1683 = vunpack.c.l.b16 %v310
          %v1684 = vunpack.c.h.b16 %v310
          %v1685 = vunpack.c.l.b16 %v311
          %v1686 = vunpack.c.h.b16 %v311
          %v1687 = vunpack.c.l.b16 %v312
          %v1688 = vunpack.c.h.b16 %v312
          %v1689 = vunpack.c.l.b16 %v313
          %v1690 = vunpack.c.h.b16 %v313
          %v1691 = vunpack.c.l.b16 %v314
          %v1692 = vunpack.c.h.b16 %v314
          %v1693 = vunpack.c.l.b16 %v315
          %v1694 = vunpack.c.h.b16 %v315
          %v1695 = vunpack.c.l.b16 %v316
          %v1696 = vunpack.c.h.b16 %v316
          %v1697 = vunpack.c.l.b16 %v317
          %v1698 = vunpack.c.h.b16 %v317
          %v1699 = vunpack.c.l.b16 %v318
          %v1700 = vunpack.c.h.b16 %v318
          %v1701 = vunpack.c.l.b16 %v319
          %v1702 = vunpack.c.h.b16 %v319
          %v1703 = vunpack.c.l.b16 %v320
          %v1704 = vunpack.c.h.b16 %v320
          %v1705 = vunpack.c.l.b16 %v321
          %v1706 = vunpack.c.h.b16 %v321
          %v1707 = vunpack.c.l.b16 %v322
          %v1708 = vunpack.c.h.b16 %v322
          %v1709 = vunpack.c.l.b16 %v323
          %v1710 = vunpack.c.h.b16 %v323
          %v1711 = vunpack.c.l.b16 %v324
          %v1712 = vunpack.c.h.b16 %v324
          %v1713 = vunpack.c.l.b16 %v325
          %v1714 = vunpack.c.h.b16 %v325
          %v1715 = vunpack.c.l.b16 %v326
          %v1716 = vunpack.c.h.b16 %v326
          %v1717 = vunpack.c.l.b16 %v327
          %v1718 = vunpack.c.h.b16 %v327
          %v1719 = vunpack.c.l.b16 %v328
          %v1720 = vunpack.c.h.b16 %v328
          %v1721 = vunpack.c.l.b16 %v329
          %v1722 = vunpack.c.h.b16 %v329
          %v1723 = vunpack.c.l.b16 %v330
          %v1724 = vunpack.c.h.b16 %v330
          %v1725 = vunpack.c.l.b16 %v331
          %v1726 = vunpack.c.h.b16 %v331
          %v1727 = vunpack.c.l.b16 %v332
          %v1728 = vunpack.c.h.b16 %v332
          %v1729 = vunpack.c.l.b16 %v333
          %v1730 = vunpack.c.h.b16 %v333
          %v1731 = vunpack.c.l.b16 %v334
          %v1732 = vunpack.c.h.b16 %v334
          %v1733 = vunpack.c.l.b16 %v335
          %v1734 = vunpack.c.h.b16 %v335
          %v1735 = vunpack.c.l.b16 %v336
          %v1736 = vunpack.c.h.b16 %v336
          %v1737 = vunpack.c.l.b16 %v337
          %v1738 = vunpack.c.h.b16 %v337
          %v1739 = vunpack.c.l.b16 %v338
          %v1740 = vunpack.c.h.b16 %v338
          %v1741 = vunpack.c.l.b16 %v339
          %v1742 = vunpack.c.h.b16 %v339
          %v1743 = vunpack.c.l.b16 %v340
          %v1744 = vunpack.c.h.b16 %v340
          %v1745 = vunpack.c.l.b16 %v341
          %v1746 = vunpack.c.h.b16 %v341
          %v1747 = vunpack.c.l.b16 %v342
          %v1748 = vunpack.c.h.b16 %v342
          %v1749 = vunpack.c.l.b16 %v343
          %v1750 = vunpack.c.h.b16 %v343
          %v1751 = vunpack.c.l.b16 %v344
          %v1752 = vunpack.c.h.b16 %v344
          %v1753 = vunpack.c.l.b16 %v345
          %v1754 = vunpack.c.h.b16 %v345
          %v1755 = vunpack.c.l.b16 %v346
          %v1756 = vunpack.c.h.b16 %v346
          %v1757 = vunpack.c.l.b16 %v347
          %v1758 = vunpack.c.h.b16 %v347
          %v1759 = vunpack.c.l.b16 %v348
          %v1760 = vunpack.c.h.b16 %v348
          %v1761 = vunpack.c.l.b16 %v349
          %v1762 = vunpack.c.h.b16 %v349
          %v1763 = vunpack.c.l.b16 %v350
          %v1764 = vunpack.c.h.b16 %v350
          %v1765 = vunpack.c.l.b16 %v351
          %v1766 = vunpack.c.h.b16 %v351
          %v1767 = vunpack.c.l.b16 %v352
          %v1768 = vunpack.c.h.b16 %v352
          %v1769 = vunpack.c.l.b16 %v353
          %v1770 = vunpack.c.h.b16 %v353
          %v1771 = vunpack.c.l.b16 %v354
          %v1772 = vunpack.c.h.b16 %v354
          %v1773 = vunpack.c.l.b16 %v355
          %v1774 = vunpack.c.h.b16 %v355
          %v1775 = vunpack.c.l.b16 %v356
          %v1776 = vunpack.c.h.b16 %v356
          %v1777 = vunpack.c.l.b16 %v357
          %v1778 = vunpack.c.h.b16 %v357
          %v1779 = vunpack.c.l.b16 %v358
          %v1780 = vunpack.c.h.b16 %v358
          %v1781 = vunpack.c.l.b16 %v359
          %v1782 = vunpack.c.h.b16 %v359
          %v1783 = vunpack.c.l.b16 %v360
          %v1784 = vunpack.c.h.b16 %v360
          %v1785 = vunpack.c.l.b16 %v361
          %v1786 = vunpack.c.h.b16 %v361
          %v1787 = vunpack.c.l.b16 %v362
          %v1788 = vunpack.c.h.b16 %v362
          %v1789 = vunpack.c.l.b16 %v363
          %v1790 = vunpack.c.h.b16 %v363
          %v1791 = vunpack.c.l.b16 %v364
          %v1792 = vunpack.c.h.b16 %v364
          %v1793 = vunpack.c.l.b16 %v365
          %v1794 = vunpack.c.h.b16 %v365
          %v1795 = vunpack.c.l.b16 %v366
          %v1796 = vunpack.c.h.b16 %v366
          %v1797 = vunpack.c.l.b16 %v367
          %v1798 = vunpack.c.h.b16 %v367
          %v1799 = vunpack.c.l.b16 %v368
          %v1800 = vunpack.c.h.b16 %v368
          %v1801 = vunpack.c.l.b16 %v369
          %v1802 = vunpack.c.h.b16 %v369
          %v1803 = vunpack.c.l.b16 %v370
          %v1804 = vunpack.c.h.b16 %v370
          %v1805 = vunpack.c.l.b16 %v371
          %v1806 = vunpack.c.h.b16 %v371
          %v1807 = vunpack.c.l.b16 %v372
          %v1808 = vunpack.c.h.b16 %v372
          %v1809 = vunpack.c.l.b16 %v373
          %v1810 = vunpack.c.h.b16 %v373
          %v1811 = vunpack.c.l.b16 %v374
          %v1812 = vunpack.c.h.b16 %v374
          %v1813 = vunpack.c.l.b16 %v375
          %v1814 = vunpack.c.h.b16 %v375
          %v1815 = vunpack.c.l.b16 %v376
          %v1816 = vunpack.c.h.b16 %v376
          %v1817 = vunpack.c.l.b16 %v377
          %v1818 = vunpack.c.h.b16 %v377
          %v1819 = vunpack.c.l.b16 %v378
          %v1820 = vunpack.c.h.b16 %v378
          %v1821 = vunpack.c.l.b16 %v379
          %v1822 = vunpack.c.h.b16 %v379
          %v1823 = vunpack.c.l.b16 %v380
          %v1824 = vunpack.c.h.b16 %v380
          %v1825 = vunpack.c.l.b16 %v381
          %v1826 = vunpack.c.h.b16 %v381
          %v1827 = vunpack.c.l.b16 %v382
          %v1828 = vunpack.c.h.b16 %v382
          %v1829 = vunpack.c.l.b16 %v383
          %v1830 = vunpack.c.h.b16 %v383
          %v1831 = vunpack.c.l.b16 %v384
          %v1832 = vunpack.c.h.b16 %v384
          %v1833 = vunpack.c.l.b16 %v385
          %v1834 = vunpack.c.h.b16 %v385
          %v1835 = vunpack.c.l.b16 %v386
          %v1836 = vunpack.c.h.b16 %v386
          %v1837 = vunpack.c.l.b16 %v387
          %v1838 = vunpack.c.h.b16 %v387
          %v1839 = vunpack.c.l.b16 %v388
          %v1840 = vunpack.c.h.b16 %v388
          %v1841 = vunpack.c.l.b16 %v389
          %v1842 = vunpack.c.h.b16 %v389
          %v1843 = vunpack.c.l.b16 %v390
          %v1844 = vunpack.c.h.b16 %v390
          %v1845 = vunpack.c.l.b16 %v391
          %v1846 = vunpack.c.h.b16 %v391
          %v1847 = vunpack.c.l.b16 %v392
          %v1848 = vunpack.c.h.b16 %v392
          %v1849 = vunpack.c.l.b16 %v393
          %v1850 = vunpack.c.h.b16 %v393
          %v1851 = vunpack.c.l.b16 %v394
          %v1852 = vunpack.c.h.b16 %v394
          %v1853 = vunpack.c.l.b16 %v395
          %v1854 = vunpack.c.h.b16 %v395
          %v1855 = vunpack.c.l.b16 %v396
          %v1856 = vunpack.c.h.b16 %v396
          %v1857 = vunpack.c.l.b16 %v397
          %v1858 = vunpack.c.h.b16 %v397
          %v1859 = vunpack.c.l.b16 %v398
          %v1860 = vunpack.c.h.b16 %v398
          %v1861 = vunpack.c.l.b16 %v399
          %v1862 = vunpack.c.h.b16 %v399
          %v1863 = vunpack.c.l.b16 %v400
          %v1864 = vunpack.c.h.b16 %v400
          %v1865 = vunpack.c.l.b16 %v401
          %v1866 = vunpack.c.h.b16 %v401
          %v1867 = vunpack.c.l.b16 %v402
          %v1868 = vunpack.c.h.b16 %v402
          %v1869 = vunpack.c.l.b16 %v403
          %v1870 = vunpack.c.h.b16 %v403
          %v1871 = vunpack.c.l.b16 %v404
          %v1872 = vunpack.c.h.b16 %v404
          %v1873 = vunpack.c.l.b16 %v405
          %v1874 = vunpack.c.h.b16 %v405
          %v1875 = vunpack.c.l.b16 %v406
          %v1876 = vunpack.c.h.b16 %v406
          %v1877 = vunpack.c.l.b16 %v407
          %v1878 = vunpack.c.h.b16 %v407
          %v1879 = vunpack.c.l.b16 %v408
          %v1880 = vunpack.c.h.b16 %v408
          %v1881 = vunpack.c.l.b16 %v409
          %v1882 = vunpack.c.h.b16 %v409
          %v1883 = vunpack.c.l.b16 %v410
          %v1884 = vunpack.c.h.b16 %v410
          %v1885 = vunpack.c.l.b16 %v411
          %v1886 = vunpack.c.h.b16 %v411
          %v1887 = vunpack.c.l.b16 %v412
          %v1888 = vunpack.c.h.b16 %v412
          %v1889 = vunpack.c.l.b16 %v413
          %v1890 = vunpack.c.h.b16 %v413
          %v1891 = vunpack.c.l.b16 %v414
          %v1892 = vunpack.c.h.b16 %v414
          %v1893 = vunpack.c.l.b16 %v415
          %v1894 = vunpack.c.h.b16 %v415
          %v1895 = vunpack.c.l.b16 %v416
          %v1896 = vunpack.c.h.b16 %v416
          %v1897 = vunpack.c.l.b16 %v417
          %v1898 = vunpack.c.h.b16 %v417
          %v1899 = vunpack.c.l.b16 %v418
          %v1900 = vunpack.c.h.b16 %v418
          %v1901 = vunpack.c.l.b16 %v419
          %v1902 = vunpack.c.h.b16 %v419
          %v1903 = vunpack.c.l.b16 %v420
          %v1904 = vunpack.c.h.b16 %v420
          %v1905 = vunpack.c.l.b16 %v421
          %v1906 = vunpack.c.h.b16 %v421
          %v1907 = vunpack.c.l.b16 %v422
          %v1908 = vunpack.c.h.b16 %v422
          %v1909 = vunpack.c.l.b16 %v423
          %v1910 = vunpack.c.h.b16 %v423
          %v1911 = vunpack.c.l.b16 %v424
          %v1912 = vunpack.c.h.b16 %v424
          %v1913 = vunpack.c.l.b16 %v425
          %v1914 = vunpack.c.h.b16 %v425
          %v1915 = vunpack.c.l.b16 %v426
          %v1916 = vunpack.c.h.b16 %v426
          %v1917 = vunpack.c.l.b16 %v427
          %v1918 = vunpack.c.h.b16 %v427
          %v1919 = vunpack.c.l.b16 %v428
          %v1920 = vunpack.c.h.b16 %v428
          %v1921 = vunpack.c.l.b16 %v429
          %v1922 = vunpack.c.h.b16 %v429
          %v1923 = vunpack.c.l.b16 %v430
          %v1924 = vunpack.c.h.b16 %v430
          %v1925 = vunpack.c.l.b16 %v431
          %v1926 = vunpack.c.h.b16 %v431
          %v1927 = vunpack.c.l.b16 %v432
          %v1928 = vunpack.c.h.b16 %v432
          %v1929 = vunpack.c.l.b16 %v433
          %v1930 = vunpack.c.h.b16 %v433
          %v1931 = vunpack.c.l.b16 %v434
          %v1932 = vunpack.c.h.b16 %v434
          %v1933 = vunpack.c.l.b16 %v435
          %v1934 = vunpack.c.h.b16 %v435
          %v1935 = vunpack.c.l.b16 %v436
          %v1936 = vunpack.c.h.b16 %v436
          %v1937 = vunpack.c.l.b16 %v437
          %v1938 = vunpack.c.h.b16 %v437
          %v1939 = vunpack.c.l.b16 %v438
          %v1940 = vunpack.c.h.b16 %v438
          %v1941 = vunpack.c.l.b16 %v439
          %v1942 = vunpack.c.h.b16 %v439
          %v1943 = vunpack.c.l.b16 %v440
          %v1944 = vunpack.c.h.b16 %v440
          %v1945 = vunpack.c.l.b16 %v441
          %v1946 = vunpack.c.h.b16 %v441
          %v1947 = vunpack.c.l.b16 %v442
          %v1948 = vunpack.c.h.b16 %v442
          %v1949 = vunpack.c.l.b16 %v443
          %v1950 = vunpack.c.h.b16 %v443
          %v1951 = vunpack.c.l.b16 %v444
          %v1952 = vunpack.c.h.b16 %v444
          %v1953 = vunpack.c.l.b16 %v445
          %v1954 = vunpack.c.h.b16 %v445
          %v1955 = vunpack.c.l.b16 %v446
          %v1956 = vunpack.c.h.b16 %v446
          %v1957 = vunpack.c.l.b16 %v447
          %v1958 = vunpack.c.h.b16 %v447
          %v1959 = vunpack.c.l.b16 %v448
          %v1960 = vunpack.c.h.b16 %v448
          %v1961 = vunpack.c.l.b16 %v449
          %v1962 = vunpack.c.h.b16 %v449
          %v1963 = vunpack.c.l.b16 %v450
          %v1964 = vunpack.c.h.b16 %v450
          %v1965 = vunpack.c.l.b16 %v451
          %v1966 = vunpack.c.h.b16 %v451
          %v1967 = vunpack.c.l.b16 %v452
          %v1968 = vunpack.c.h.b16 %v452
          %v1969 = vunpack.c.l.b16 %v453
          %v1970 = vunpack.c.h.b16 %v453
          %v1971 = vunpack.c.l.b16 %v454
          %v1972 = vunpack.c.h.b16 %v454
          %v1973 = vunpack.c.l.b16 %v455
          %v1974 = vunpack.c.h.b16 %v455
          %v1975 = vunpack.c.l.b16 %v456
          %v1976 = vunpack.c.h.b16 %v456
          %v1977 = vunpack.c.l.b16 %v457
          %v1978 = vunpack.c.h.b16 %v457
          %v1979 = vunpack.c.l.b16 %v458
          %v1980 = vunpack.c.h.b16 %v458
          %v1981 = vunpack.c.l.b16 %v459
          %v1982 = vunpack.c.h.b16 %v459
          %v1983 = vunpack.c.l.b16 %v460
          %v1984 = vunpack.c.h.b16 %v460
          %v1985 = vunpack.c.l.b16 %v461
          %v1986 = vunpack.c.h.b16 %v461
          %v1987 = vunpack.c.l.b16 %v462
          %v1988 = vunpack.c.h.b16 %v462
          %v1989 = vunpack.c.l.b16 %v463
          %v1990 = vunpack.c.h.b16 %v463
          %v1991 = vunpack.c.l.b16 %v464
          %v1992 = vunpack.c.h.b16 %v464
          %v1993 = vunpack.c.l.b16 %v465
          %v1994 = vunpack.c.h.b16 %v465
          %v1995 = vunpack.c.l.b16 %v466
          %v1996 = vunpack.c.h.b16 %v466
          %v1997 = vunpack.c.l.b16 %v467
          %v1998 = vunpack.c.h.b16 %v467
          %v1999 = vunpack.c.l.b16 %v468
          %v2000 = vunpack.c.h.b16 %v468
          %v2001 = vunpack.c.l.b16 %v469
          %v2002 = vunpack.c.h.b16 %v469
          %v2003 = vunpack.c.l.b16 %v470
          %v2004 = vunpack.c.h.b16 %v470
          %v2005 = vunpack.c.l.b16 %v471
          %v2006 = vunpack.c.h.b16 %v471
          %v2007 = vunpack.c.l.b16 %v472
          %v2008 = vunpack.c.h.b16 %v472
          %v2009 = vunpack.c.l.b16 %v473
          %v2010 = vunpack.c.h.b16 %v473
          %v2011 = vunpack.c.l.b16 %v474
          %v2012 = vunpack.c.h.b16 %v474
          %v2013 = vunpack.c.l.b16 %v475
          %v2014 = vunpack.c.h.b16 %v475
          %v2015 = vunpack.c.l.b16 %v476
          %v2016 = vunpack.c.h.b16 %v476
          %v2017 = vunpack.c.l.b16 %v477
          %v2018 = vunpack.c.h.b16 %v477
          %v2019 = vunpack.c.l.b16 %v478
          %v2020 = vunpack.c.h.b16 %v478
          %v2021 = vunpack.c.l.b16 %v479
          %v2022 = vunpack.c.h.b16 %v479
          %v2023 = vunpack.c.l.b16 %v480
          %v2024 = vunpack.c.h.b16 %v480
          %v2025 = vunpack.c.l.b16 %v481
          %v2026 = vunpack.c.h.b16 %v481
          %v2027 = vunpack.c.l.b16 %v482
          %v2028 = vunpack.c.h.b16 %v482
          %v2029 = vunpack.c.l.b16 %v483
          %v2030 = vunpack.c.h.b16 %v483
          %v2031 = vunpack.c.l.b16 %v484
          %v2032 = vunpack.c.h.b16 %v484
          %v2033 = vunpack.c.l.b16 %v485
          %v2034 = vunpack.c.h.b16 %v485
          %v2035 = vunpack.c.l.b16 %v486
          %v2036 = vunpack.c.h.b16 %v486
          %v2037 = vunpack.c.l.b16 %v487
          %v2038 = vunpack.c.h.b16 %v487
          %v2039 = vunpack.c.l.b16 %v488
          %v2040 = vunpack.c.h.b16 %v488
          %v2041 = vunpack.c.l.b16 %v489
          %v2042 = vunpack.c.h.b16 %v489
          %v2043 = vunpack.c.l.b16 %v490
          %v2044 = vunpack.c.h.b16 %v490
          %v2045 = vunpack.c.l.b16 %v491
          %v2046 = vunpack.c.h.b16 %v491
          %v2047 = vunpack.c.l.b16 %v492
          %v2048 = vunpack.c.h.b16 %v492
          %v2049 = vunpack.c.l.b16 %v493
          %v2050 = vunpack.c.h.b16 %v493
          %v2051 = vunpack.c.l.b16 %v494
          %v2052 = vunpack.c.h.b16 %v494
          %v2053 = vunpack.c.l.b16 %v495
          %v2054 = vunpack.c.h.b16 %v495
          %v2055 = vunpack.c.l.b16 %v496
          %v2056 = vunpack.c.h.b16 %v496
          %v2057 = vunpack.c.l.b16 %v497
          %v2058 = vunpack.c.h.b16 %v497
          %v2059 = vunpack.c.l.b16 %v498
          %v2060 = vunpack.c.h.b16 %v498
          %v2061 = vunpack.c.l.b16 %v499
          %v2062 = vunpack.c.h.b16 %v499
          %v2063 = vunpack.c.l.b16 %v500
          %v2064 = vunpack.c.h.b16 %v500
          %v2065 = vunpack.c.l.b16 %v501
          %v2066 = vunpack.c.h.b16 %v501
          %v2067 = vunpack.c.l.b16 %v502
          %v2068 = vunpack.c.h.b16 %v502
          %v2069 = vunpack.c.l.b16 %v503
          %v2070 = vunpack.c.h.b16 %v503
          %v2071 = vunpack.c.l.b16 %v504
          %v2072 = vunpack.c.h.b16 %v504
          %v2073 = vunpack.c.l.b16 %v505
          %v2074 = vunpack.c.h.b16 %v505
          %v2075 = vunpack.c.l.b16 %v506
          %v2076 = vunpack.c.h.b16 %v506
          %v2077 = vunpack.c.l.b16 %v507
          %v2078 = vunpack.c.h.b16 %v507
          %v2079 = vunpack.c.l.b16 %v508
          %v2080 = vunpack.c.h.b16 %v508
          %v2081 = vunpack.c.l.b16 %v509
          %v2082 = vunpack.c.h.b16 %v509
          %v2083 = vunpack.c.l.b16 %v510
          %v2084 = vunpack.c.h.b16 %v510
          %v2085 = vunpack.c.l.b16 %v511
          %v2086 = vunpack.c.h.b16 %v511
          %v2087 = vunpack.c.l.b16 %v512
          %v2088 = vunpack.c.h.b16 %v512
          %v2089 = vunpack.c.l.b16 %v513
          %v2090 = vunpack.c.h.b16 %v513
          %v2091 = vunpack.c.l.b16 %v514
          %v2092 = vunpack.c.h.b16 %v514
          %v2093 = vunpack.c.l.b16 %v515
          %v2094 = vunpack.c.h.b16 %v515
          %v2095 = vunpack.c.l.b16 %v516
          %v2096 = vunpack.c.h.b16 %v516
          %v2097 = vunpack.c.l.b16 %v517
          %v2098 = vunpack.c.h.b16 %v517
          %v2099 = vunpack.c.l.b16 %v518
          %v2100 = vunpack.c.h.b16 %v518
          %v2101 = vunpack.c.l.b16 %v519
          %v2102 = vunpack.c.h.b16 %v519
          %v2103 = vunpack.c.l.b16 %v520
          %v2104 = vunpack.c.h.b16 %v520
          %v2105 = vunpack.c.l.b16 %v521
          %v2106 = vunpack.c.h.b16 %v521
          %v2107 = vunpack.c.l.b16 %v522
          %v2108 = vunpack.c.h.b16 %v522
          %v2109 = vunpack.c.l.b16 %v523
          %v2110 = vunpack.c.h.b16 %v523
          %v2111 = vunpack.c.l.b16 %v524
          %v2112 = vunpack.c.h.b16 %v524
          %v2113 = vunpack.c.l.b16 %v525
          %v2114 = vunpack.c.h.b16 %v525
          %v2115 = vunpack.c.l.b16 %v526
          %v2116 = vunpack.c.h.b16 %v526
          %v2117 = vunpack.c.l.b16 %v527
          %v2118 = vunpack.c.h.b16 %v527
          %v2119 = vunpack.c.l.b16 %v528
          %v2120 = vunpack.c.h.b16 %v528
          %v2121 = vunpack.c.l.b16 %v529
          %v2122 = vunpack.c.h.b16 %v529
          %v2123 = vunpack.c.l.b16 %v530
          %v2124 = vunpack.c.h.b16 %v530
          %v2125 = vunpack.c.l.b16 %v531
          %v2126 = vunpack.c.h.b16 %v531
          %v2127 = vunpack.c.l.b16 %v532
          %v2128 = vunpack.c.h.b16 %v532
          %v2129 = vunpack.c.l.b16 %v533
          %v2130 = vunpack.c.h.b16 %v533
          %v2131 = vunpack.c.l.b16 %v534
          %v2132 = vunpack.c.h.b16 %v534
          %v2133 = vunpack.c.l.b16 %v535
          %v2134 = vunpack.c.h.b16 %v535
          %v2135 = vunpack.c.l.b16 %v536
          %v2136 = vunpack.c.h.b16 %v536
          %v2137 = vunpack.c.l.b16 %v537
          %v2138 = vunpack.c.h.b16 %v537
          %v2139 = vunpack.c.l.b16 %v538
          %v2140 = vunpack.c.h.b16 %v538
          %v2141 = vunpack.c.l.b16 %v539
          %v2142 = vunpack.c.h.b16 %v539
          %v2143 = vunpack.c.l.b16 %v540
          %v2144 = vunpack.c.h.b16 %v540
          %v2145 = vunpack.c.l.b16 %v541
          %v2146 = vunpack.c.h.b16 %v541
          %v2147 = vunpack.c.l.b16 %v542
          %v2148 = vunpack.c.h.b16 %v542
          %v2149 = vunpack.c.l.b16 %v543
          %v2150 = vunpack.c.h.b16 %v543
          %v2151 = vunpack.c.l.b16 %v544
          %v2152 = vunpack.c.h.b16 %v544
          %v2153 = vunpack.c.l.b16 %v545
          %v2154 = vunpack.c.h.b16 %v545
          %v2155 = vunpack.c.l.b16 %v546
          %v2156 = vunpack.c.h.b16 %v546
          %v2157 = vunpack.c.l.b16 %v547
          %v2158 = vunpack.c.h.b16 %v547
          %v2159 = vunpack.c.l.b16 %v548
          %v2160 = vunpack.c.h.b16 %v548
          %v2161 = vunpack.c.l.b16 %v549
          %v2162 = vunpack.c.h.b16 %v549
          %v2163 = vunpack.c.l.b16 %v550
          %v2164 = vunpack.c.h.b16 %v550
          %v2165 = vunpack.c.l.b16 %v551
          %v2166 = vunpack.c.h.b16 %v551
          %v2167 = vunpack.c.l.b16 %v552
          %v2168 = vunpack.c.h.b16 %v552
          %v2169 = vunpack.c.l.b16 %v553
          %v2170 = vunpack.c.h.b16 %v553
          %v2171 = vunpack.c.l.b16 %v554
          %v2172 = vunpack.c.h.b16 %v554
          %v2173 = vunpack.c.l.b16 %v555
          %v2174 = vunpack.c.h.b16 %v555
          %v2175 = vunpack.c.l.b16 %v556
          %v2176 = vunpack.c.h.b16 %v556
          %v2177 = vunpack.c.l.b16 %v557
          %v2178 = vunpack.c.h.b16 %v557
          %v2179 = vunpack.c.l.b16 %v558
          %v2180 = vunpack.c.h.b16 %v558
          %v2181 = vunpack.c.l.b16 %v559
          %v2182 = vunpack.c.h.b16 %v559
          %v2183 = vunpack.c.l.b16 %v560
          %v2184 = vunpack.c.h.b16 %v560
          %v2185 = vunpack.c.l.b16 %v561
          %v2186 = vunpack.c.h.b16 %v561
          %v2187 = vunpack.c.l.b16 %v562
          %v2188 = vunpack.c.h.b16 %v562
          %v2189 = vunpack.c.l.b16 %v563
          %v2190 = vunpack.c.h.b16 %v563
          %v2191 = vunpack.c.l.b16 %v564
          %v2192 = vunpack.c.h.b16 %v564
          %v2193 = vunpack.c.l.b16 %v565
          %v2194 = vunpack.c.h.b16 %v565
          %v2195 = vunpack.c.l.b16 %v566
          %v2196 = vunpack.c.h.b16 %v566
          %v2197 = vunpack.c.l.b16 %v567
          %v2198 = vunpack.c.h.b16 %v567
          %v2199 = vunpack.c.l.b16 %v568
          %v2200 = vunpack.c.h.b16 %v568
          %v2201 = vunpack.c.l.b16 %v569
          %v2202 = vunpack.c.h.b16 %v569
          %v2203 = vunpack.c.l.b16 %v570
          %v2204 = vunpack.c.h.b16 %v570
          %v2205 = vunpack.c.l.b16 %v571
          %v2206 = vunpack.c.h.b16 %v571
          %v2207 = vunpack.c.l.b16 %v572
          %v2208 = vunpack.c.h.b16 %v572
          %v2209 = vunpack.c.l.b16 %v573
          %v2210 = vunpack.c.h.b16 %v573
          %v2211 = vunpack.c.l.b16 %v574
          %v2212 = vunpack.c.h.b16 %v574
          %v2213 = vunpack.c.l.b16 %v575
          %v2214 = vunpack.c.h.b16 %v575
          %v2215 = vunpack.c.l.b16 %v576
          %v2216 = vunpack.c.h.b16 %v576
          %v2217 = vunpack.c.l.b16 %v577
          %v2218 = vunpack.c.h.b16 %v577
          %v2219 = vunpack.c.l.b16 %v578
          %v2220 = vunpack.c.h.b16 %v578
          %v2221 = vunpack.c.l.b16 %v579
          %v2222 = vunpack.c.h.b16 %v579
          %v2223 = vunpack.c.l.b16 %v580
          %v2224 = vunpack.c.h.b16 %v580
          %v2225 = vunpack.c.l.b16 %v581
          %v2226 = vunpack.c.h.b16 %v581
          %v2227 = vunpack.c.l.b16 %v582
          %v2228 = vunpack.c.h.b16 %v582
          %v2229 = vunpack.c.l.b16 %v583
          %v2230 = vunpack.c.h.b16 %v583
          %v2231 = vunpack.c.l.b16 %v584
          %v2232 = vunpack.c.h.b16 %v584
          %v2233 = vunpack.c.l.b16 %v585
          %v2234 = vunpack.c.h.b16 %v585
          %v2235 = vunpack.c.l.b16 %v586
          %v2236 = vunpack.c.h.b16 %v586
          %v2237 = vunpack.c.l.b16 %v587
          %v2238 = vunpack.c.h.b16 %v587
          %v2239 = vunpack.c.l.b16 %v588
          %v2240 = vunpack.c.h.b16 %v588
          %v2241 = vunpack.c.l.b16 %v589
          %v2242 = vunpack.c.h.b16 %v589
          %v2243 = vunpack.c.l.b16 %v590
          %v2244 = vunpack.c.h.b16 %v590
          %v2245 = vunpack.c.l.b16 %v591
          %v2246 = vunpack.c.h.b16 %v591
          %v2247 = vunpack.c.l.b16 %v592
          %v2248 = vunpack.c.h.b16 %v592
          %v2249 = vunpack.c.l.b16 %v593
          %v2250 = vunpack.c.h.b16 %v593
          %v2251 = vunpack.c.l.b16 %v594
          %v2252 = vunpack.c.h.b16 %v594
          %v2253 = vunpack.c.l.b16 %v595
          %v2254 = vunpack.c.h.b16 %v595
          %v2255 = vunpack.c.l.b16 %v596
          %v2256 = vunpack.c.h.b16 %v596
          %v2257 = vunpack.c.l.b16 %v597
          %v2258 = vunpack.c.h.b16 %v597
          %v2259 = vunpack.c.l.b16 %v598
          %v2260 = vunpack.c.h.b16 %v598
          %v2261 = vunpack.c.l.b16 %v599
          %v2262 = vunpack.c.h.b16 %v599
          %v2263 = vunpack.c.l.b16 %v600
          %v2264 = vunpack.c.h.b16 %v600
          %v2265 = vunpack.c.l.b16 %v601
          %v2266 = vunpack.c.h.b16 %v601
          %v2267 = vunpack.c.l.b16 %v602
          %v2268 = vunpack.c.h.b16 %v602
          %v2269 = vunpack.c.l.b16 %v603
          %v2270 = vunpack.c.h.b16 %v603
          %v2271 = vunpack.c.l.b16 %v604
          %v2272 = vunpack.c.h.b16 %v604
          %v2273 = vunpack.c.l.b16 %v605
          %v2274 = vunpack.c.h.b16 %v605
          %v2275 = vunpack.c.l.b16 %v606
          %v2276 = vunpack.c.h.b16 %v606
          %v2277 = vunpack.c.l.b16 %v607
          %v2278 = vunpack.c.h.b16 %v607
          %v2279 = vunpack.c.l.b16 %v608
          %v2280 = vunpack.c.h.b16 %v608
          %v2281 = vunpack.c.l.b16 %v609
          %v2282 = vunpack.c.h.b16 %v609
          %v2283 = vunpack.c.l.b16 %v610
          %v2284 = vunpack.c.h.b16 %v610
          %v2285 = vunpack.c.l.b16 %v611
          %v2286 = vunpack.c.h.b16 %v611
          %v2287 = vunpack.c.l.b16 %v612
          %v2288 = vunpack.c.h.b16 %v612
          %v2289 = vunpack.c.l.b16 %v613
          %v2290 = vunpack.c.h.b16 %v613
          %v2291 = vunpack.c.l.b16 %v614
          %v2292 = vunpack.c.h.b16 %v614
          %v2293 = vunpack.c.l.b16 %v615
          %v2294 = vunpack.c.h.b16 %v615
          %v2295 = vunpack.c.l.b16 %v616
          %v2296 = vunpack.c.h.b16 %v616
          %v2297 = vunpack.c.l.b16 %v617
          %v2298 = vunpack.c.h.b16 %v617
          %v2299 = vunpack.c.l.b16 %v618
          %v2300 = vunpack.c.h.b16 %v618
          %v2301 = vunpack.c.l.b16 %v619
          %v2302 = vunpack.c.h.b16 %v619
          %v2303 = vunpack.c.l.b16 %v620
          %v2304 = vunpack.c.h.b16 %v620
          %v2305 = vunpack.c.l.b16 %v621
          %v2306 = vunpack.c.h.b16 %v621
          %v2307 = vunpack.c.l.b16 %v622
          %v2308 = vunpack.c.h.b16 %v622
          %v2309 = vunpack.c.l.b16 %v623
          %v2310 = vunpack.c.h.b16 %v623
          %v2311 = vunpack.c.l.b16 %v624
          %v2312 = vunpack.c.h.b16 %v624
          %v2313 = vunpack.c.l.b16 %v625
          %v2314 = vunpack.c.h.b16 %v625
          %v2315 = vunpack.c.l.b16 %v626
          %v2316 = vunpack.c.h.b16 %v626
          %v2317 = vunpack.c.l.b16 %v627
          %v2318 = vunpack.c.h.b16 %v627
          %v2319 = vunpack.c.l.b16 %v628
          %v2320 = vunpack.c.h.b16 %v628
          %v2321 = vunpack.c.l.b16 %v629
          %v2322 = vunpack.c.h.b16 %v629
          %v2323 = vunpack.c.l.b16 %v630
          %v2324 = vunpack.c.h.b16 %v630
          %v2325 = vunpack.c.l.b16 %v631
          %v2326 = vunpack.c.h.b16 %v631
          %v2327 = vunpack.c.l.b16 %v632
          %v2328 = vunpack.c.h.b16 %v632
          %v2329 = vunpack.c.l.b16 %v633
          %v2330 = vunpack.c.h.b16 %v633
          %v2331 = vunpack.c.l.b16 %v634
          %v2332 = vunpack.c.h.b16 %v634
          %v2333 = vunpack.c.l.b16 %v635
          %v2334 = vunpack.c.h.b16 %v635
          %v2335 = vunpack.c.l.b16 %v636
          %v2336 = vunpack.c.h.b16 %v636
          %v2337 = vunpack.c.l.b16 %v637
          %v2338 = vunpack.c.h.b16 %v637
          %v2339 = vunpack.c.l.b16 %v638
          %v2340 = vunpack.c.h.b16 %v638
          %v2341 = vunpack.c.l.b16 %v639
          %v2342 = vunpack.c.h.b16 %v639
          %v2343 = vunpack.c.l.b16 %v640
          %v2344 = vunpack.c.h.b16 %v640
          %v2345 = vunpack.c.l.b16 %v641
          %v2346 = vunpack.c.h.b16 %v641
          %v2347 = vunpack.c.l.b16 %v642
          %v2348 = vunpack.c.h.b16 %v642
          %v2349 = vunpack.c.l.b16 %v643
          %v2350 = vunpack.c.h.b16 %v643
          %v2351 = vunpack.c.l.b16 %v644
          %v2352 = vunpack.c.h.b16 %v644
          %v2353 = vunpack.c.l.b16 %v645
          %v2354 = vunpack.c.h.b16 %v645
          %v2355 = vunpack.c.l.b16 %v646
          %v2356 = vunpack.c.h.b16 %v646
          %v2357 = vunpack.c.l.b16 %v647
          %v2358 = vunpack.c.h.b16 %v647
          %v2359 = vunpack.c.l.b16 %v648
          %v2360 = vunpack.c.h.b16 %v648
          %v2361 = vunpack.c.l.b16 %v649
          %v2362 = vunpack.c.h.b16 %v649
          %v2363 = vunpack.c.l.b16 %v650
          %v2364 = vunpack.c.h.b16 %v650
          %v2365 = vunpack.c.l.b16 %v651
          %v2366 = vunpack.c.h.b16 %v651
          %v2367 = vunpack.c.l.b16 %v652
          %v2368 = vunpack.c.h.b16 %v652
          %v2369 = vunpack.c.l.b16 %v653
          %v2370 = vunpack.c.h.b16 %v653
          %v2371 = vunpack.c.l.b16 %v654
          %v2372 = vunpack.c.h.b16 %v654
          %v2373 = vunpack.c.l.b16 %v655
          %v2374 = vunpack.c.h.b16 %v655
          %v2375 = vunpack.c.l.b16 %v656
          %v2376 = vunpack.c.h.b16 %v656
          %v2377 = vunpack.c.l.b16 %v657
          %v2378 = vunpack.c.h.b16 %v657
          %v2379 = vunpack.c.l.b16 %v658
          %v2380 = vunpack.c.h.b16 %v658
          %v2381 = vunpack.c.l.b16 %v659
          %v2382 = vunpack.c.h.b16 %v659
          %v2383 = vunpack.c.l.b16 %v660
          %v2384 = vunpack.c.h.b16 %v660
          %v2385 = vunpack.c.l.b16 %v661
          %v2386 = vunpack.c.h.b16 %v661
          %v2387 = vunpack.c.l.b16 %v662
          %v2388 = vunpack.c.h.b16 %v662
          %v2389 = vunpack.c.l.b16 %v663
          %v2390 = vunpack.c.h.b16 %v663
          %v2391 = vunpack.c.l.b16 %v664
          %v2392 = vunpack.c.h.b16 %v664
          %v2393 = vunpack.c.l.b16 %v665
          %v2394 = vunpack.c.h.b16 %v665
          %v2395 = vunpack.c.l.b16 %v666
          %v2396 = vunpack.c.h.b16 %v666
          %v2397 = vunpack.c.l.b16 %v667
          %v2398 = vunpack.c.h.b16 %v667
          %v2399 = vunpack.c.l.b16 %v668
          %v2400 = vunpack.c.h.b16 %v668
          %v2401 = vunpack.c.l.b16 %v669
          %v2402 = vunpack.c.h.b16 %v669
          %v2403 = vunpack.c.l.b16 %v670
          %v2404 = vunpack.c.h.b16 %v670
          %v2405 = vunpack.c.l.b16 %v671
          %v2406 = vunpack.c.h.b16 %v671
          %v2407 = vunpack.c.l.b16 %v672
          %v2408 = vunpack.c.h.b16 %v672
          %v2409 = vunpack.c.l.b16 %v673
          %v2410 = vunpack.c.h.b16 %v673
          %v2411 = vunpack.c.l.b16 %v674
          %v2412 = vunpack.c.h.b16 %v674
          %v2413 = vunpack.c.l.b16 %v675
          %v2414 = vunpack.c.h.b16 %v675
          %v2415 = vunpack.c.l.b16 %v676
          %v2416 = vunpack.c.h.b16 %v676
          %v2417 = vunpack.c.l.b16 %v677
          %v2418 = vunpack.c.h.b16 %v677
          %v2419 = vunpack.c.l.b16 %v678
          %v2420 = vunpack.c.h.b16 %v678
          %v2421 = vunpack.c.l.b16 %v679
          %v2422 = vunpack.c.h.b16 %v679
          %v2423 = vunpack.c.l.b16 %v680
          %v2424 = vunpack.c.h.b16 %v680
          %v2425 = vunpack.c.l.b16 %v681
          %v2426 = vunpack.c.h.b16 %v681
          %v2427 = vunpack.c.l.b16 %v682
          %v2428 = vunpack.c.h.b16 %v682
          %v2429 = vunpack.c.l.b16 %v683
          %v2430 = vunpack.c.h.b16 %v683
          %v2431 = vunpack.c.l.b16 %v684
          %v2432 = vunpack.c.h.b16 %v684
          %v2433 = vunpack.c.l.b16 %v685
          %v2434 = vunpack.c.h.b16 %v685
          %v2435 = vunpack.c.l.b16 %v686
          %v2436 = vunpack.c.h.b16 %v686
          %v2437 = vunpack.c.l.b16 %v687
          %v2438 = vunpack.c.h.b16 %v687
          %v2439 = vunpack.c.l.b16 %v688
          %v2440 = vunpack.c.h.b16 %v688
          %v2441 = vunpack.c.l.b16 %v689
          %v2442 = vunpack.c.h.b16 %v689
          %v2443 = vunpack.c.l.b16 %v690
          %v2444 = vunpack.c.h.b16 %v690
          %v2445 = vunpack.c.l.b16 %v691
          %v2446 = vunpack.c.h.b16 %v691
          %v2447 = vunpack.c.l.b16 %v692
          %v2448 = vunpack.c.h.b16 %v692
          %v2449 = vunpack.c.l.b16 %v693
          %v2450 = vunpack.c.h.b16 %v693
          %v2451 = vunpack.c.l.b16 %v694
          %v2452 = vunpack.c.h.b16 %v694
          %v2453 = vunpack.c.l.b16 %v695
          %v2454 = vunpack.c.h.b16 %v695
          %v2455 = vunpack.c.l.b16 %v696
          %v2456 = vunpack.c.h.b16 %v696
          %v2457 = vunpack.c.l.b16 %v697
          %v2458 = vunpack.c.h.b16 %v697
          %v2459 = vunpack.c.l.b16 %v698
          %v2460 = vunpack.c.h.b16 %v698
          %v2461 = vunpack.c.l.b16 %v699
          %v2462 = vunpack.c.h.b16 %v699
          %v2463 = vunpack.c.l.b16 %v700
          %v2464 = vunpack.c.h.b16 %v700
          %v2465 = vunpack.c.l.b16 %v701
          %v2466 = vunpack.c.h.b16 %v701
          %v2467 = vunpack.c.l.b16 %v702
          %v2468 = vunpack.c.h.b16 %v702
          %v2469 = vunpack.c.l.b16 %v703
          %v2470 = vunpack.c.h.b16 %v703
          %v2471 = vunpack.c.l.b16 %v704
          %v2472 = vunpack.c.h.b16 %v704
          %v2473 = vunpack.c.l.b16 %v705
          %v2474 = vunpack.c.h.b16 %v705
          %v2475 = vunpack.c.l.b16 %v706
          %v2476 = vunpack.c.h.b16 %v706
          %v2477 = vunpack.c.l.b16 %v707
          %v2478 = vunpack.c.h.b16 %v707
          %v2479 = vunpack.c.l.b16 %v708
          %v2480 = vunpack.c.h.b16 %v708
          %v2481 = vunpack.c.l.b16 %v709
          %v2482 = vunpack.c.h.b16 %v709
          %v2483 = vunpack.c.l.b16 %v710
          %v2484 = vunpack.c.h.b16 %v710
          %v2485 = vunpack.c.l.b16 %v711
          %v2486 = vunpack.c.h.b16 %v711
          %v2487 = vunpack.c.l.b16 %v712
          %v2488 = vunpack.c.h.b16 %v712
          %v2489 = vunpack.c.l.b16 %v713
          %v2490 = vunpack.c.h.b16 %v713
          %v2491 = vunpack.c.l.b16 %v714
          %v2492 = vunpack.c.h.b16 %v714
          %v2493 = vunpack.c.l.b16 %v715
          %v2494 = vunpack.c.h.b16 %v715
          %v2495 = vunpack.c.l.b16 %v716
          %v2496 = vunpack.c.h.b16 %v716
          %v2497 = vunpack.c.l.b16 %v717
          %v2498 = vunpack.c.h.b16 %v717
          %v2499 = vunpack.c.l.b16 %v718
          %v2500 = vunpack.c.h.b16 %v718
          %v2501 = vunpack.c.l.b16 %v719
          %v2502 = vunpack.c.h.b16 %v719
          %v2503 = vunpack.c.l.b16 %v720
          %v2504 = vunpack.c.h.b16 %v720
          %v2505 = vunpack.c.l.b16 %v721
          %v2506 = vunpack.c.h.b16 %v721
          %v2507 = vunpack.c.l.b16 %v722
          %v2508 = vunpack.c.h.b16 %v722
          %v2509 = vunpack.c.l.b16 %v723
          %v2510 = vunpack.c.h.b16 %v723
          %v2511 = vunpack.c.l.b16 %v724
          %v2512 = vunpack.c.h.b16 %v724
          %v2513 = vunpack.c.l.b16 %v725
          %v2514 = vunpack.c.h.b16 %v725
          %v2515 = vunpack.c.l.b16 %v726
          %v2516 = vunpack.c.h.b16 %v726
          %v2517 = vunpack.c.l.b16 %v727
          %v2518 = vunpack.c.h.b16 %v727
          %v2519 = vunpack.c.l.b16 %v728
          %v2520 = vunpack.c.h.b16 %v728
          %v2521 = vunpack.c.l.b16 %v729
          %v2522 = vunpack.c.h.b16 %v729
          %v2523 = vunpack.c.l.b16 %v730
          %v2524 = vunpack.c.h.b16 %v730
          %v2525 = vunpack.c.l.b16 %v731
          %v2526 = vunpack.c.h.b16 %v731
          %v2527 = vunpack.c.l.b16 %v732
          %v2528 = vunpack.c.h.b16 %v732
          %v2529 = vunpack.c.l.b16 %v733
          %v2530 = vunpack.c.h.b16 %v733
          %v2531 = vunpack.c.l.b16 %v734
          %v2532 = vunpack.c.h.b16 %v734
          %v2533 = vunpack.c.l.b16 %v735
          %v2534 = vunpack.c.h.b16 %v735
          %v2535 = vunpack.c.l.b16 %v736
          %v2536 = vunpack.c.h.b16 %v736
          %v2537 = vunpack.c.l.b16 %v737
          %v2538 = vunpack.c.h.b16 %v737
          %v2539 = vunpack.c.l.b16 %v738
          %v2540 = vunpack.c.h.b16 %v738
          %v2541 = vunpack.c.l.b16 %v739
          %v2542 = vunpack.c.h.b16 %v739
          %v2543 = vunpack.c.l.b16 %v740
          %v2544 = vunpack.c.h.b16 %v740
          %v2545 = vunpack.c.l.b16 %v741
          %v2546 = vunpack.c.h.b16 %v741
          %v2547 = vunpack.c.l.b16 %v742
          %v2548 = vunpack.c.h.b16 %v742
          %v2549 = vunpack.c.l.b16 %v743
          %v2550 = vunpack.c.h.b16 %v743
          %v2551 = vunpack.c.l.b16 %v744
          %v2552 = vunpack.c.h.b16 %v744
          %v2553 = vunpack.c.l.b16 %v745
          %v2554 = vunpack.c.h.b16 %v745
          %v2555 = vunpack.c.l.b16 %v746
          %v2556 = vunpack.c.h.b16 %v746
          %v2557 = vunpack.c.l.b16 %v747
          %v2558 = vunpack.c.h.b16 %v747
          %v2559 = vunpack.c.l.b16 %v748
          %v2560 = vunpack.c.h.b16 %v748
          %v2561 = vunpack.c.l.b16 %v749
          %v2562 = vunpack.c.h.b16 %v749
          %v2563 = vunpack.c.l.b16 %v750
          %v2564 = vunpack.c.h.b16 %v750
          %v2565 = vunpack.c.l.b16 %v751
          %v2566 = vunpack.c.h.b16 %v751
          %v2567 = vunpack.c.l.b16 %v752
          %v2568 = vunpack.c.h.b16 %v752
          %v2569 = vunpack.c.l.b16 %v753
          %v2570 = vunpack.c.h.b16 %v753
          %v2571 = vunpack.c.l.b16 %v754
          %v2572 = vunpack.c.h.b16 %v754
          %v2573 = vunpack.c.l.b16 %v755
          %v2574 = vunpack.c.h.b16 %v755
          %v2575 = vunpack.c.l.b16 %v756
          %v2576 = vunpack.c.h.b16 %v756
          %v2577 = vunpack.c.l.b16 %v757
          %v2578 = vunpack.c.h.b16 %v757
          %v2579 = vunpack.c.l.b16 %v758
          %v2580 = vunpack.c.h.b16 %v758
          %v2581 = vunpack.c.l.b16 %v759
          %v2582 = vunpack.c.h.b16 %v759
          %v2583 = vunpack.c.l.b16 %v760
          %v2584 = vunpack.c.h.b16 %v760
          %v2585 = vunpack.c.l.b16 %v761
          %v2586 = vunpack.c.h.b16 %v761
          %v2587 = vunpack.c.l.b16 %v762
          %v2588 = vunpack.c.h.b16 %v762
          %v2589 = vunpack.c.l.b16 %v763
          %v2590 = vunpack.c.h.b16 %v763
          %v2591 = vunpack.c.l.b16 %v764
          %v2592 = vunpack.c.h.b16 %v764
          %v2593 = vunpack.c.l.b16 %v765
          %v2594 = vunpack.c.h.b16 %v765
          %v2595 = vunpack.c.l.b16 %v766
          %v2596 = vunpack.c.h.b16 %v766
          %v2597 = vunpack.c.l.b16 %v767
          %v2598 = vunpack.c.h.b16 %v767
          %v2599 = vunpack.c.l.b16 %v768
          %v2600 = vunpack.c.h.b16 %v768
          %v2601 = vunpack.c.l.b16 %v769
          %v2602 = vunpack.c.h.b16 %v769
          %v2603 = vunpack.c.l.b16 %v770
          %v2604 = vunpack.c.h.b16 %v770
          %v2605 = vunpack.c.l.b16 %v771
          %v2606 = vunpack.c.h.b16 %v771
          %v2607 = vunpack.c.l.b16 %v772
          %v2608 = vunpack.c.h.b16 %v772
          %v2609 = vunpack.c.l.b16 %v773
          %v2610 = vunpack.c.h.b16 %v773
          %v2611 = vunpack.c.l.b16 %v774
          %v2612 = vunpack.c.h.b16 %v774
          %v2613 = vunpack.c.l.b16 %v775
          %v2614 = vunpack.c.h.b16 %v775
          %v2615 = vunpack.c.l.b16 %v776
          %v2616 = vunpack.c.h.b16 %v776
          %v2617 = vunpack.c.l.b16 %v777
          %v2618 = vunpack.c.h.b16 %v777
          %v2619 = vunpack.c.l.b16 %v778
          %v2620 = vunpack.c.h.b16 %v778
          %v2621 = vunpack.c.l.b16 %v779
          %v2622 = vunpack.c.h.b16 %v779
          %v2623 = vunpack.c.l.b16 %v780
          %v2624 = vunpack.c.h.b16 %v780
          %v2625 = vunpack.c.l.b16 %v781
          %v2626 = vunpack.c.h.b16 %v781
          %v2627 = vunpack.c.l.b16 %v782
          %v2628 = vunpack.c.h.b16 %v782
          %v2629 = vunpack.c.l.b16 %v783
          %v2630 = vunpack.c.h.b16 %v783
          %v2631 = vunpack.c.l.b16 %v784
          %v2632 = vunpack.c.h.b16 %v784
          %v2633 = vunpack.c.l.b16 %v785
          %v2634 = vunpack.c.h.b16 %v785
          %v2635 = vunpack.c.l.b16 %v786
          %v2636 = vunpack.c.h.b16 %v786
          %v2637 = vunpack.c.l.b16 %v787
          %v2638 = vunpack.c.h.b16 %v787
          %v2639 = vunpack.c.l.b16 %v788
          %v2640 = vunpack.c.h.b16 %v788
          %v2641 = vunpack.c.l.b16 %v789
          %v2642 = vunpack.c.h.b16 %v789
          %v2643 = vunpack.c.l.b16 %v790
          %v2644 = vunpack.c.h.b16 %v790
          %v2645 = vunpack.c.l.b16 %v791
          %v2646 = vunpack.c.h.b16 %v791
          %v2647 = vunpack.c.l.b16 %v792
          %v2648 = vunpack.c.h.b16 %v792
          %v2649 = vpack.c.b16 %v1627, %v1625
          %v2650 = vpack.c.b16 %v1628, %v1626
          %v2651 = vpack.c.b16 %v1631, %v1629
          %v2652 = vpack.c.b16 %v1632, %v1630
          %v2653 = vpack.c.b16 %v1635, %v1633
          %v2654 = vpack.c.b16 %v1636, %v1634
          %v2655 = vpack.c.b16 %v1639, %v1637
          %v2656 = vpack.c.b16 %v1640, %v1638
          %v2657 = vpack.c.b16 %v1643, %v1641
          %v2658 = vpack.c.b16 %v1644, %v1642
          %v2659 = vpack.c.b16 %v1647, %v1645
          %v2660 = vpack.c.b16 %v1648, %v1646
          %v2661 = vpack.c.b16 %v1651, %v1649
          %v2662 = vpack.c.b16 %v1652, %v1650
          %v2663 = vpack.c.b16 %v1655, %v1653
          %v2664 = vpack.c.b16 %v1656, %v1654
          %v2665 = vpack.c.b16 %v1659, %v1657
          %v2666 = vpack.c.b16 %v1660, %v1658
          %v2667 = vpack.c.b16 %v1663, %v1661
          %v2668 = vpack.c.b16 %v1664, %v1662
          %v2669 = vpack.c.b16 %v1667, %v1665
          %v2670 = vpack.c.b16 %v1668, %v1666
          %v2671 = vpack.c.b16 %v1671, %v1669
          %v2672 = vpack.c.b16 %v1672, %v1670
          %v2673 = vpack.c.b16 %v1675, %v1673
          %v2674 = vpack.c.b16 %v1676, %v1674
          %v2675 = vpack.c.b16 %v1679, %v1677
          %v2676 = vpack.c.b16 %v1680, %v1678
          %v2677 = vpack.c.b16 %v1683, %v1681
          %v2678 = vpack.c.b16 %v1684, %v1682
          %v2679 = vpack.c.b16 %v1687, %v1685
          %v2680 = vpack.c.b16 %v1688, %v1686
          %v2681 = vpack.c.b16 %v1691, %v1689
          %v2682 = vpack.c.b16 %v1692, %v1690
          %v2683 = vpack.c.b16 %v1695, %v1693
          %v2684 = vpack.c.b16 %v1696, %v1694
          %v2685 = vpack.c.b16 %v1699, %v1697
          %v2686 = vpack.c.b16 %v1700, %v1698
          %v2687 = vpack.c.b16 %v1703, %v1701
          %v2688 = vpack.c.b16 %v1704, %v1702
          %v2689 = vpack.c.b16 %v1707, %v1705
          %v2690 = vpack.c.b16 %v1708, %v1706
          %v2691 = vpack.c.b16 %v1711, %v1709
          %v2692 = vpack.c.b16 %v1712, %v1710
          %v2693 = vpack.c.b16 %v1715, %v1713
          %v2694 = vpack.c.b16 %v1716, %v1714
          %v2695 = vpack.c.b16 %v1719, %v1717
          %v2696 = vpack.c.b16 %v1720, %v1718
          %v2697 = vpack.c.b16 %v1723, %v1721
          %v2698 = vpack.c.b16 %v1724, %v1722
          %v2699 = vpack.c.b16 %v1727, %v1725
          %v2700 = vpack.c.b16 %v1728, %v1726
          %v2701 = vpack.c.b16 %v1731, %v1729
          %v2702 = vpack.c.b16 %v1732, %v1730
          %v2703 = vpack.c.b16 %v1735, %v1733
          %v2704 = vpack.c.b16 %v1736, %v1734
          %v2705 = vpack.c.b16 %v1739, %v1737
          %v2706 = vpack.c.b16 %v1740, %v1738
          %v2707 = vpack.c.b16 %v1743, %v1741
          %v2708 = vpack.c.b16 %v1744, %v1742
          %v2709 = vpack.c.b16 %v1747, %v1745
          %v2710 = vpack.c.b16 %v1748, %v1746
          %v2711 = vpack.c.b16 %v1751, %v1749
          %v2712 = vpack.c.b16 %v1752, %v1750
          %v2713 = vpack.c.b16 %v1755, %v1753
          %v2714 = vpack.c.b16 %v1756, %v1754
          %v2715 = vpack.c.b16 %v1759, %v1757
          %v2716 = vpack.c.b16 %v1760, %v1758
          %v2717 = vpack.c.b16 %v1763, %v1761
          %v2718 = vpack.c.b16 %v1764, %v1762
          %v2719 = vpack.c.b16 %v1767, %v1765
          %v2720 = vpack.c.b16 %v1768, %v1766
          %v2721 = vpack.c.b16 %v1771, %v1769
          %v2722 = vpack.c.b16 %v1772, %v1770
          %v2723 = vpack.c.b16 %v1775, %v1773
          %v2724 = vpack.c.b16 %v1776, %v1774
          %v2725 = vpack.c.b16 %v1779, %v1777
          %v2726 = vpack.c.b16 %v1780, %v1778
          %v2727 = vpack.c.b16 %v1783, %v1781
          %v2728 = vpack.c.b16 %v1784, %v1782
          %v2729 = vpack.c.b16 %v1787, %v1785
          %v2730 = vpack.c.b16 %v1788, %v1786
          %v2731 = vpack.c.b16 %v1791, %v1789
          %v2732 = vpack.c.b16 %v1792, %v1790
          %v2733 = vpack.c.b16 %v1795, %v1793
          %v2734 = vpack.c.b16 %v1796, %v1794
          %v2735 = vpack.c.b16 %v1799, %v1797
          %v2736 = vpack.c.b16 %v1800, %v1798
          %v2737 = vpack.c.b16 %v1803, %v1801
          %v2738 = vpack.c.b16 %v1804, %v1802
          %v2739 = vpack.c.b16 %v1807, %v1805
          %v2740 = vpack.c.b16 %v1808, %v1806
          %v2741 = vpack.c.b16 %v1811, %v1809
          %v2742 = vpack.c.b16 %v1812, %v1810
          %v2743 = vpack.c.b16 %v1815, %v1813
          %v2744 = vpack.c.b16 %v1816, %v1814
          %v2745 = vpack.c.b16 %v1819, %v1817
          %v2746 = vpack.c.b16 %v1820, %v1818
          %v2747 = vpack.c.b16 %v1823, %v1821
          %v2748 = vpack.c.b16 %v1824, %v1822
          %v2749 = vpack.c.b16 %v1827, %v1825
          %v2750 = vpack.c.b16 %v1828, %v1826
          %v2751 = vpack.c.b16 %v1831, %v1829
          %v2752 = vpack.c.b16 %v1832, %v1830
          %v2753 = vpack.c.b16 %v1835, %v1833
          %v2754 = vpack.c.b16 %v1836, %v1834
          %v2755 = vpack.c.b16 %v1839, %v1837
          %v2756 = vpack.c.b16 %v1840, %v1838
          %v2757 = vpack.c.b16 %v1843, %v1841
          %v2758 = vpack.c.b16 %v1844, %v1842
          %v2759 = vpack.c.b16 %v1847, %v1845
          %v2760 = vpack.c.b16 %v1848, %v1846
          %v2761 = vpack.c.b16 %v1851, %v1849
          %v2762 = vpack.c.b16 %v1852, %v1850
          %v2763 = vpack.c.b16 %v1855, %v1853
          %v2764 = vpack.c.b16 %v1856, %v1854
          %v2765 = vpack.c.b16 %v1859, %v1857
          %v2766 = vpack.c.b16 %v1860, %v1858
          %v2767 = vpack.c.b16 %v1863, %v1861
          %v2768 = vpack.c.b16 %v1864, %v1862
          %v2769 = vpack.c.b16 %v1867, %v1865
          %v2770 = vpack.c.b16 %v1868, %v1866
          %v2771 = vpack.c.b16 %v1871, %v1869
          %v2772 = vpack.c.b16 %v1872, %v1870
          %v2773 = vpack.c.b16 %v1875, %v1873
          %v2774 = vpack.c.b16 %v1876, %v1874
          %v2775 = vpack.c.b16 %v1879, %v1877
          %v2776 = vpack.c.b16 %v1880, %v1878
          %v2777 = vpack.c.b16 %v1883, %v1881
          %v2778 = vpack.c.b16 %v1884, %v1882
          %v2779 = vpack.c.b16 %v1887, %v1885
          %v2780 = vpack.c.b16 %v1888, %v1886
          %v2781 = vpack.c.b16 %v1891, %v1889
          %v2782 = vpack.c.b16 %v1892, %v1890
          %v2783 = vpack.c.b16 %v1895, %v1893
          %v2784 = vpack.c.b16 %v1896, %v1894
          %v2785 = vpack.c.b16 %v1899, %v1897
          %v2786 = vpack.c.b16 %v1900, %v1898
          %v2787 = vpack.c.b16 %v1903, %v1901
          %v2788 = vpack.c.b16 %v1904, %v1902
          %v2789 = vpack.c.b16 %v1907, %v1905
          %v2790 = vpack.c.b16 %v1908, %v1906
          %v2791 = vpack.c.b16 %v1911, %v1909
          %v2792 = vpack.c.b16 %v1912, %v1910
          %v2793 = vpack.c.b16 %v1915, %v1913
          %v2794 = vpack.c.b16 %v1916, %v1914
          %v2795 = vpack.c.b16 %v1919, %v1917
          %v2796 = vpack.c.b16 %v1920, %v1918
          %v2797 = vpack.c.b16 %v1923, %v1921
          %v2798 = vpack.c.b16 %v1924, %v1922
          %v2799 = vpack.c.b16 %v1927, %v1925
          %v2800 = vpack.c.b16 %v1928, %v1926
          %v2801 = vpack.c.b16 %v1931, %v1929
          %v2802 = vpack.c.b16 %v1932, %v1930
          %v2803 = vpack.c.b16 %v1935, %v1933
          %v2804 = vpack.c.b16 %v1936, %v1934
          %v2805 = vpack.c.b16 %v1939, %v1937
          %v2806 = vpack.c.b16 %v1940, %v1938
          %v2807 = vpack.c.b16 %v1943, %v1941
          %v2808 = vpack.c.b16 %v1944, %v1942
          %v2809 = vpack.c.b16 %v1947, %v1945
          %v2810 = vpack.c.b16 %v1948, %v1946
          %v2811 = vpack.c.b16 %v1951, %v1949
          %v2812 = vpack.c.b16 %v1952, %v1950
          %v2813 = vpack.c.b16 %v1955, %v1953
          %v2814 = vpack.c.b16 %v1956, %v1954
          %v2815 = vpack.c.b16 %v1959, %v1957
          %v2816 = vpack.c.b16 %v1960, %v1958
          %v2817 = vpack.c.b16 %v1963, %v1961
          %v2818 = vpack.c.b16 %v1964, %v1962
          %v2819 = vpack.c.b16 %v1967, %v1965
          %v2820 = vpack.c.b16 %v1968, %v1966
          %v2821 = vpack.c.b16 %v1971, %v1969
          %v2822 = vpack.c.b16 %v1972, %v1970
          %v2823 = vpack.c.b16 %v1975, %v1973
          %v2824 = vpack.c.b16 %v1976, %v1974
          %v2825 = vpack.c.b16 %v1979, %v1977
          %v2826 = vpack.c.b16 %v1980, %v1978
          %v2827 = vpack.c.b16 %v1983, %v1981
          %v2828 = vpack.c.b16 %v1984, %v1982
          %v2829 = vpack.c.b16 %v1987, %v1985
          %v2830 = vpack.c.b16 %v1988, %v1986
          %v2831 = vpack.c.b16 %v1991, %v1989
          %v2832 = vpack.c.b16 %v1992, %v1990
          %v2833 = vpack.c.b16 %v1995, %v1993
          %v2834 = vpack.c.b16 %v1996, %v1994
          %v2835 = vpack.c.b16 %v1999, %v1997
          %v2836 = vpack.c.b16 %v2000, %v1998
          %v2837 = vpack.c.b16 %v2003, %v2001
          %v2838 = vpack.c.b16 %v2004, %v2002
          %v2839 = vpack.c.b16 %v2007, %v2005
          %v2840 = vpack.c.b16 %v2008, %v2006
          %v2841 = vpack.c.b16 %v2011, %v2009
          %v2842 = vpack.c.b16 %v2012, %v2010
          %v2843 = vpack.c.b16 %v2015, %v2013
          %v2844 = vpack.c.b16 %v2016, %v2014
          %v2845 = vpack.c.b16 %v2019, %v2017
          %v2846 = vpack.c.b16 %v2020, %v2018
          %v2847 = vpack.c.b16 %v2023, %v2021
          %v2848 = vpack.c.b16 %v2024, %v2022
          %v2849 = vpack.c.b16 %v2027, %v2025
          %v2850 = vpack.c.b16 %v2028, %v2026
          %v2851 = vpack.c.b16 %v2031, %v2029
          %v2852 = vpack.c.b16 %v2032, %v2030
          %v2853 = vpack.c.b16 %v2035, %v2033
          %v2854 = vpack.c.b16 %v2036, %v2034
          %v2855 = vpack.c.b16 %v2039, %v2037
          %v2856 = vpack.c.b16 %v2040, %v2038
          %v2857 = vpack.c.b16 %v2043, %v2041
          %v2858 = vpack.c.b16 %v2044, %v2042
          %v2859 = vpack.c.b16 %v2047, %v2045
          %v2860 = vpack.c.b16 %v2048, %v2046
          %v2861 = vpack.c.b16 %v2051, %v2049
          %v2862 = vpack.c.b16 %v2052, %v2050
          %v2863 = vpack.c.b16 %v2055, %v2053
          %v2864 = vpack.c.b16 %v2056, %v2054
          %v2865 = vpack.c.b16 %v2059, %v2057
          %v2866 = vpack.c.b16 %v2060, %v2058
          %v2867 = vpack.c.b16 %v2063, %v2061
          %v2868 = vpack.c.b16 %v2064, %v2062
          %v2869 = vpack.c.b16 %v2067, %v2065
          %v2870 = vpack.c.b16 %v2068, %v2066
          %v2871 = vpack.c.b16 %v2071, %v2069
          %v2872 = vpack.c.b16 %v2072, %v2070
          %v2873 = vpack.c.b16 %v2075, %v2073
          %v2874 = vpack.c.b16 %v2076, %v2074
          %v2875 = vpack.c.b16 %v2079, %v2077
          %v2876 = vpack.c.b16 %v2080, %v2078
          %v2877 = vpack.c.b16 %v2083, %v2081
          %v2878 = vpack.c.b16 %v2084, %v2082
          %v2879 = vpack.c.b16 %v2087, %v2085
          %v2880 = vpack.c.b16 %v2088, %v2086
          %v2881 = vpack.c.b16 %v2091, %v2089
          %v2882 = vpack.c.b16 %v2092, %v2090
          %v2883 = vpack.c.b16 %v2095, %v2093
          %v2884 = vpack.c.b16 %v2096, %v2094
          %v2885 = vpack.c.b16 %v2099, %v2097
          %v2886 = vpack.c.b16 %v2100, %v2098
          %v2887 = vpack.c.b16 %v2103, %v2101
          %v2888 = vpack.c.b16 %v2104, %v2102
          %v2889 = vpack.c.b16 %v2107, %v2105
          %v2890 = vpack.c.b16 %v2108, %v2106
          %v2891 = vpack.c.b16 %v2111, %v2109
          %v2892 = vpack.c.b16 %v2112, %v2110
          %v2893 = vpack.c.b16 %v2115, %v2113
          %v2894 = vpack.c.b16 %v2116, %v2114
          %v2895 = vpack.c.b16 %v2119, %v2117
          %v2896 = vpack.c.b16 %v2120, %v2118
          %v2897 = vpack.c.b16 %v2123, %v2121
          %v2898 = vpack.c.b16 %v2124, %v2122
          %v2899 = vpack.c.b16 %v2127, %v2125
          %v2900 = vpack.c.b16 %v2128, %v2126
          %v2901 = vpack.c.b16 %v2131, %v2129
          %v2902 = vpack.c.b16 %v2132, %v2130
          %v2903 = vpack.c.b16 %v2135, %v2133
          %v2904 = vpack.c.b16 %v2136, %v2134
          %v2905 = vpack.c.b16 %v2139, %v2137
          %v2906 = vpack.c.b16 %v2140, %v2138
          %v2907 = vpack.c.b16 %v2143, %v2141
          %v2908 = vpack.c.b16 %v2144, %v2142
          %v2909 = vpack.c.b16 %v2147, %v2145
          %v2910 = vpack.c.b16 %v2148, %v2146
          %v2911 = vpack.c.b16 %v2151, %v2149
          %v2912 = vpack.c.b16 %v2152, %v2150
          %v2913 = vpack.c.b16 %v2155, %v2153
          %v2914 = vpack.c.b16 %v2156, %v2154
          %v2915 = vpack.c.b16 %v2159, %v2157
          %v2916 = vpack.c.b16 %v2160, %v2158
          %v2917 = vpack.c.b16 %v2163, %v2161
          %v2918 = vpack.c.b16 %v2164, %v2162
          %v2919 = vpack.c.b16 %v2167, %v2165
          %v2920 = vpack.c.b16 %v2168, %v2166
          %v2921 = vpack.c.b16 %v2171, %v2169
          %v2922 = vpack.c.b16 %v2172, %v2170
          %v2923 = vpack.c.b16 %v2175, %v2173
          %v2924 = vpack.c.b16 %v2176, %v2174
          %v2925 = vpack.c.b16 %v2179, %v2177
          %v2926 = vpack.c.b16 %v2180, %v2178
          %v2927 = vpack.c.b16 %v2183, %v2181
          %v2928 = vpack.c.b16 %v2184, %v2182
          %v2929 = vpack.c.b16 %v2187, %v2185
          %v2930 = vpack.c.b16 %v2188, %v2186
          %v2931 = vpack.c.b16 %v2191, %v2189
          %v2932 = vpack.c.b16 %v2192, %v2190
          %v2933 = vpack.c.b16 %v2195, %v2193
          %v2934 = vpack.c.b16 %v2196, %v2194
          %v2935 = vpack.c.b16 %v2199, %v2197
          %v2936 = vpack.c.b16 %v2200, %v2198
          %v2937 = vpack.c.b16 %v2203, %v2201
          %v2938 = vpack.c.b16 %v2204, %v2202
          %v2939 = vpack.c.b16 %v2207, %v2205
          %v2940 = vpack.c.b16 %v2208, %v2206
          %v2941 = vpack.c.b16 %v2211, %v2209
          %v2942 = vpack.c.b16 %v2212, %v2210
          %v2943 = vpack.c.b16 %v2215, %v2213
          %v2944 = vpack.c.b16 %v2216, %v2214
          %v2945 = vpack.c.b16 %v2219, %v2217
          %v2946 = vpack.c.b16 %v2220, %v2218
          %v2947 = vpack.c.b16 %v2223, %v2221
          %v2948 = vpack.c.b16 %v2224, %v2222
          %v2949 = vpack.c.b16 %v2227, %v2225
          %v2950 = vpack.c.b16 %v2228, %v2226
          %v2951 = vpack.c.b16 %v2231, %v2229
          %v2952 = vpack.c.b16 %v2232, %v2230
          %v2953 = vpack.c.b16 %v2235, %v2233
          %v2954 = vpack.c.b16 %v2236, %v2234
          %v2955 = vpack.c.b16 %v2239, %v2237
          %v2956 = vpack.c.b16 %v2240, %v2238
          %v2957 = vpack.c.b16 %v2243, %v2241
          %v2958 = vpack.c.b16 %v2244, %v2242
          %v2959 = vpack.c.b16 %v2247, %v2245
          %v2960 = vpack.c.b16 %v2248, %v2246
          %v2961 = vpack.c.b16 %v2251, %v2249
          %v2962 = vpack.c.b16 %v2252, %v2250
          %v2963 = vpack.c.b16 %v2255, %v2253
          %v2964 = vpack.c.b16 %v2256, %v2254
          %v2965 = vpack.c.b16 %v2259, %v2257
          %v2966 = vpack.c.b16 %v2260, %v2258
          %v2967 = vpack.c.b16 %v2263, %v2261
          %v2968 = vpack.c.b16 %v2264, %v2262
          %v2969 = vpack.c.b16 %v2267, %v2265
          %v2970 = vpack.c.b16 %v2268, %v2266
          %v2971 = vpack.c.b16 %v2271, %v2269
          %v2972 = vpack.c.b16 %v2272, %v2270
          %v2973 = vpack.c.b16 %v2275, %v2273
          %v2974 = vpack.c.b16 %v2276, %v2274
          %v2975 = vpack.c.b16 %v2279, %v2277
          %v2976 = vpack.c.b16 %v2280, %v2278
          %v2977 = vpack.c.b16 %v2283, %v2281
          %v2978 = vpack.c.b16 %v2284, %v2282
          %v2979 = vpack.c.b16 %v2287, %v2285
          %v2980 = vpack.c.b16 %v2288, %v2286
          %v2981 = vpack.c.b16 %v2291, %v2289
          %v2982 = vpack.c.b16 %v2292, %v2290
          %v2983 = vpack.c.b16 %v2295, %v2293
          %v2984 = vpack.c.b16 %v2296, %v2294
          %v2985 = vpack.c.b16 %v2299, %v2297
          %v2986 = vpack.c.b16 %v2300, %v2298
          %v2987 = vpack.c.b16 %v2303, %v2301
          %v2988 = vpack.c.b16 %v2304, %v2302
          %v2989 = vpack.c.b16 %v2307, %v2305
          %v2990 = vpack.c.b16 %v2308, %v2306
          %v2991 = vpack.c.b16 %v2311, %v2309
          %v2992 = vpack.c.b16 %v2312, %v2310
          %v2993 = vpack.c.b16 %v2315, %v2313
          %v2994 = vpack.c.b16 %v2316, %v2314
          %v2995 = vpack.c.b16 %v2319, %v2317
          %v2996 = vpack.c.b16 %v2320, %v2318
          %v2997 = vpack.c.b16 %v2323, %v2321
          %v2998 = vpack.c.b16 %v2324, %v2322
          %v2999 = vpack.c.b16 %v2327, %v2325
          %v3000 = vpack.c.b16 %v2328, %v2326
          %v3001 = vpack.c.b16 %v2331, %v2329
          %v3002 = vpack.c.b16 %v2332, %v2330
          %v3003 = vpack.c.b16 %v2335, %v2333
          %v3004 = vpack.c.b16 %v2336, %v2334
          %v3005 = vpack.c.b16 %v2339, %v2337
          %v3006 = vpack.c.b16 %v2340, %v2338
          %v3007 = vpack.c.b16 %v2343, %v2341
          %v3008 = vpack.c.b16 %v2344, %v2342
          %v3009 = vpack.c.b16 %v2347, %v2345
          %v3010 = vpack.c.b16 %v2348, %v2346
          %v3011 = vpack.c.b16 %v2351, %v2349
          %v3012 = vpack.c.b16 %v2352, %v2350
          %v3013 = vpack.c.b16 %v2355, %v2353
          %v3014 = vpack.c.b16 %v2356, %v2354
          %v3015 = vpack.c.b16 %v2359, %v2357
          %v3016 = vpack.c.b16 %v2360, %v2358
          %v3017 = vpack.c.b16 %v2363, %v2361
          %v3018 = vpack.c.b16 %v2364, %v2362
          %v3019 = vpack.c.b16 %v2367, %v2365
          %v3020 = vpack.c.b16 %v2368, %v2366
          %v3021 = vpack.c.b16 %v2371, %v2369
          %v3022 = vpack.c.b16 %v2372, %v2370
          %v3023 = vpack.c.b16 %v2375, %v2373
          %v3024 = vpack.c.b16 %v2376, %v2374
          %v3025 = vpack.c.b16 %v2379, %v2377
          %v3026 = vpack.c.b16 %v2380, %v2378
          %v3027 = vpack.c.b16 %v2383, %v2381
          %v3028 = vpack.c.b16 %v2384, %v2382
          %v3029 = vpack.c.b16 %v2387, %v2385
          %v3030 = vpack.c.b16 %v2388, %v2386
          %v3031 = vpack.c.b16 %v2391, %v2389
          %v3032 = vpack.c.b16 %v2392, %v2390
          %v3033 = vpack.c.b16 %v2395, %v2393
          %v3034 = vpack.c.b16 %v2396, %v2394
          %v3035 = vpack.c.b16 %v2399, %v2397
          %v3036 = vpack.c.b16 %v2400, %v2398
          %v3037 = vpack.c.b16 %v2403, %v2401
          %v3038 = vpack.c.b16 %v2404, %v2402
          %v3039 = vpack.c.b16 %v2407, %v2405
          %v3040 = vpack.c.b16 %v2408, %v2406
          %v3041 = vpack.c.b16 %v2411, %v2409
          %v3042 = vpack.c.b16 %v2412, %v2410
          %v3043 = vpack.c.b16 %v2415, %v2413
          %v3044 = vpack.c.b16 %v2416, %v2414
          %v3045 = vpack.c.b16 %v2419, %v2417
          %v3046 = vpack.c.b16 %v2420, %v2418
          %v3047 = vpack.c.b16 %v2423, %v2421
          %v3048 = vpack.c.b16 %v2424, %v2422
          %v3049 = vpack.c.b16 %v2427, %v2425
          %v3050 = vpack.c.b16 %v2428, %v2426
          %v3051 = vpack.c.b16 %v2431, %v2429
          %v3052 = vpack.c.b16 %v2432, %v2430
          %v3053 = vpack.c.b16 %v2435, %v2433
          %v3054 = vpack.c.b16 %v2436, %v2434
          %v3055 = vpack.c.b16 %v2439, %v2437
          %v3056 = vpack.c.b16 %v2440, %v2438
          %v3057 = vpack.c.b16 %v2443, %v2441
          %v3058 = vpack.c.b16 %v2444, %v2442
          %v3059 = vpack.c.b16 %v2447, %v2445
          %v3060 = vpack.c.b16 %v2448, %v2446
          %v3061 = vpack.c.b16 %v2451, %v2449
          %v3062 = vpack.c.b16 %v2452, %v2450
          %v3063 = vpack.c.b16 %v2455, %v2453
          %v3064 = vpack.c.b16 %v2456, %v2454
          %v3065 = vpack.c.b16 %v2459, %v2457
          %v3066 = vpack.c.b16 %v2460, %v2458
          %v3067 = vpack.c.b16 %v2463, %v2461
          %v3068 = vpack.c.b16 %v2464, %v2462
          %v3069 = vpack.c.b16 %v2467, %v2465
          %v3070 = vpack.c.b16 %v2468, %v2466
          %v3071 = vpack.c.b16 %v2471, %v2469
          %v3072 = vpack.c.b16 %v2472, %v2470
          %v3073 = vpack.c.b16 %v2475, %v2473
          %v3074 = vpack.c.b16 %v2476, %v2474
          %v3075 = vpack.c.b16 %v2479, %v2477
          %v3076 = vpack.c.b16 %v2480, %v2478
          %v3077 = vpack.c.b16 %v2483, %v2481
          %v3078 = vpack.c.b16 %v2484, %v2482
          %v3079 = vpack.c.b16 %v2487, %v2485
          %v3080 = vpack.c.b16 %v2488, %v2486
          %v3081 = vpack.c.b16 %v2491, %v2489
          %v3082 = vpack.c.b16 %v2492, %v2490
          %v3083 = vpack.c.b16 %v2495, %v2493
          %v3084 = vpack.c.b16 %v2496, %v2494
          %v3085 = vpack.c.b16 %v2499, %v2497
          %v3086 = vpack.c.b16 %v2500, %v2498
          %v3087 = vpack.c.b16 %v2503, %v2501
          %v3088 = vpack.c.b16 %v2504, %v2502
          %v3089 = vpack.c.b16 %v2507, %v2505
          %v3090 = vpack.c.b16 %v2508, %v2506
          %v3091 = vpack.c.b16 %v2511, %v2509
          %v3092 = vpack.c.b16 %v2512, %v2510
          %v3093 = vpack.c.b16 %v2515, %v2513
          %v3094 = vpack.c.b16 %v2516, %v2514
          %v3095 = vpack.c.b16 %v2519, %v2517
          %v3096 = vpack.c.b16 %v2520, %v2518
          %v3097 = vpack.c.b16 %v2523, %v2521
          %v3098 = vpack.c.b16 %v2524, %v2522
          %v3099 = vpack.c.b16 %v2527, %v2525
          %v3100 = vpack.c.b16 %v2528, %v2526
          %v3101 = vpack.c.b16 %v2531, %v2529
          %v3102 = vpack.c.b16 %v2532, %v2530
          %v3103 = vpack.c.b16 %v2535, %v2533
          %v3104 = vpack.c.b16 %v2536, %v2534
          %v3105 = vpack.c.b16 %v2539, %v2537
          %v3106 = vpack.c.b16 %v2540, %v2538
          %v3107 = vpack.c.b16 %v2543, %v2541
          %v3108 = vpack.c.b16 %v2544, %v2542
          %v3109 = vpack.c.b16 %v2547, %v2545
          %v3110 = vpack.c.b16 %v2548, %v2546
          %v3111 = vpack.c.b16 %v2551, %v2549
          %v3112 = vpack.c.b16 %v2552, %v2550
          %v3113 = vpack.c.b16 %v2555, %v2553
          %v3114 = vpack.c.b16 %v2556, %v2554
          %v3115 = vpack.c.b16 %v2559, %v2557
          %v3116 = vpack.c.b16 %v2560, %v2558
          %v3117 = vpack.c.b16 %v2563, %v2561
          %v3118 = vpack.c.b16 %v2564, %v2562
          %v3119 = vpack.c.b16 %v2567, %v2565
          %v3120 = vpack.c.b16 %v2568, %v2566
          %v3121 = vpack.c.b16 %v2571, %v2569
          %v3122 = vpack.c.b16 %v2572, %v2570
          %v3123 = vpack.c.b16 %v2575, %v2573
          %v3124 = vpack.c.b16 %v2576, %v2574
          %v3125 = vpack.c.b16 %v2579, %v2577
          %v3126 = vpack.c.b16 %v2580, %v2578
          %v3127 = vpack.c.b16 %v2583, %v2581
          %v3128 = vpack.c.b16 %v2584, %v2582
          %v3129 = vpack.c.b16 %v2587, %v2585
          %v3130 = vpack.c.b16 %v2588, %v2586
          %v3131 = vpack.c.b16 %v2591, %v2589
          %v3132 = vpack.c.b16 %v2592, %v2590
          %v3133 = vpack.c.b16 %v2595, %v2593
          %v3134 = vpack.c.b16 %v2596, %v2594
          %v3135 = vpack.c.b16 %v2599, %v2597
          %v3136 = vpack.c.b16 %v2600, %v2598
          %v3137 = vpack.c.b16 %v2603, %v2601
          %v3138 = vpack.c.b16 %v2604, %v2602
          %v3139 = vpack.c.b16 %v2607, %v2605
          %v3140 = vpack.c.b16 %v2608, %v2606
          %v3141 = vpack.c.b16 %v2611, %v2609
          %v3142 = vpack.c.b16 %v2612, %v2610
          %v3143 = vpack.c.b16 %v2615, %v2613
          %v3144 = vpack.c.b16 %v2616, %v2614
          %v3145 = vpack.c.b16 %v2619, %v2617
          %v3146 = vpack.c.b16 %v2620, %v2618
          %v3147 = vpack.c.b16 %v2623, %v2621
          %v3148 = vpack.c.b16 %v2624, %v2622
          %v3149 = vpack.c.b16 %v2627, %v2625
          %v3150 = vpack.c.b16 %v2628, %v2626
          %v3151 = vpack.c.b16 %v2631, %v2629
          %v3152 = vpack.c.b16 %v2632, %v2630
          %v3153 = vpack.c.b16 %v2635, %v2633
          %v3154 = vpack.c.b16 %v2636, %v2634
          %v3155 = vpack.c.b16 %v2639, %v2637
          %v3156 = vpack.c.b16 %v2640, %v2638
          %v3157 = vpack.c.b16 %v2643, %v2641
          %v3158 = vpack.c.b16 %v2644, %v2642
          %v3159 = vpack.c.b16 %v2647, %v2645
          %v3160 = vpack.c.b16 %v2648, %v2646
          %3673 = vmatpush.bf16.msra.mxu0 %v2663
          %3674 = vmatpush.bf16.msra.mxu0 %v2661
          %3675 = vmatpush.bf16.msra.mxu0 %v2659
          %3676 = vmatpush.bf16.msra.mxu0 %v2657
          %3677 = vmatpush.bf16.msra.mxu0 %v2655
          %3678 = vmatpush.bf16.msra.mxu0 %v2653
          %3679 = vmatpush.bf16.msra.mxu0 %v2651
          %3680 = vmatpush.bf16.msra.mxu0 %v2649
          %3681 = vmatmul.bf16.gmra.mxu0 %v985
          %v3682 = vpop.f32.mrf.mxu0
          %v3683 = vadd.f32 0.0, %v3682
          %v3684 = vpop.f32.mrf.mxu0
          %v3685 = vadd.f32 0.0, %v3684
          %3686 = vmatmul.bf16.gmra.mxu0 %v1017
          %v3687 = vpop.f32.mrf.mxu0
          %v3688 = vadd.f32 0.0, %v3687
          %v3689 = vpop.f32.mrf.mxu0
          %v3690 = vadd.f32 0.0, %v3689
          %3691 = vdwg.mxu0
          %3692 = vmatpush.bf16.msra.mxu0 %v2679
          %3693 = vmatpush.bf16.msra.mxu0 %v2677
          %3694 = vmatpush.bf16.msra.mxu0 %v2675
          %3695 = vmatpush.bf16.msra.mxu0 %v2673
          %3696 = vmatpush.bf16.msra.mxu0 %v2671
          %3697 = vmatpush.bf16.msra.mxu0 %v2669
          %3698 = vmatpush.bf16.msra.mxu0 %v2667
          %3699 = vmatpush.bf16.msra.mxu0 %v2665
          %3700 = vmatmul.bf16.gmra.mxu0 %v986
          %v3701 = vpop.f32.mrf.mxu0
          %v3702 = vadd.f32 %v3683, %v3701
          %v3703 = vpop.f32.mrf.mxu0
          %v3704 = vadd.f32 %v3685, %v3703
          %3705 = vmatmul.bf16.gmra.mxu0 %v1018
          %v3706 = vpop.f32.mrf.mxu0
          %v3707 = vadd.f32 %v3688, %v3706
          %v3708 = vpop.f32.mrf.mxu0
          %v3709 = vadd.f32 %v3690, %v3708
          %3710 = vdwg.mxu0
          %3711 = vmatpush.bf16.msra.mxu0 %v2695
          %3712 = vmatpush.bf16.msra.mxu0 %v2693
          %3713 = vmatpush.bf16.msra.mxu0 %v2691
          %3714 = vmatpush.bf16.msra.mxu0 %v2689
          %3715 = vmatpush.bf16.msra.mxu0 %v2687
          %3716 = vmatpush.bf16.msra.mxu0 %v2685
          %3717 = vmatpush.bf16.msra.mxu0 %v2683
          %3718 = vmatpush.bf16.msra.mxu0 %v2681
          %3719 = vmatmul.bf16.gmra.mxu0 %v987
          %v3720 = vpop.f32.mrf.mxu0
          %v3721 = vadd.f32 %v3702, %v3720
          %v3722 = vpop.f32.mrf.mxu0
          %v3723 = vadd.f32 %v3704, %v3722
          %3724 = vmatmul.bf16.gmra.mxu0 %v1019
          %v3725 = vpop.f32.mrf.mxu0
          %v3726 = vadd.f32 %v3707, %v3725
          %v3727 = vpop.f32.mrf.mxu0
          %v3728 = vadd.f32 %v3709, %v3727
          %3729 = vdwg.mxu0
          %3730 = vmatpush.bf16.msra.mxu0 %v2711
          %3731 = vmatpush.bf16.msra.mxu0 %v2709
          %3732 = vmatpush.bf16.msra.mxu0 %v2707
          %3733 = vmatpush.bf16.msra.mxu0 %v2705
          %3734 = vmatpush.bf16.msra.mxu0 %v2703
          %3735 = vmatpush.bf16.msra.mxu0 %v2701
          %3736 = vmatpush.bf16.msra.mxu0 %v2699
          %3737 = vmatpush.bf16.msra.mxu0 %v2697
          %3738 = vmatmul.bf16.gmra.mxu0 %v988
          %v3739 = vpop.f32.mrf.mxu0
          %v3740 = vadd.f32 %v3721, %v3739
          %v3741 = vpop.f32.mrf.mxu0
          %v3742 = vadd.f32 %v3723, %v3741
          %3743 = vmatmul.bf16.gmra.mxu0 %v1020
          %v3744 = vpop.f32.mrf.mxu0
          %v3745 = vadd.f32 %v3726, %v3744
          %v3746 = vpop.f32.mrf.mxu0
          %v3747 = vadd.f32 %v3728, %v3746
          %3748 = vdwg.mxu0
          %3749 = vmatpush.bf16.msra.mxu0 %v2727
          %3750 = vmatpush.bf16.msra.mxu0 %v2725
          %3751 = vmatpush.bf16.msra.mxu0 %v2723
          %3752 = vmatpush.bf16.msra.mxu0 %v2721
          %3753 = vmatpush.bf16.msra.mxu0 %v2719
          %3754 = vmatpush.bf16.msra.mxu0 %v2717
          %3755 = vmatpush.bf16.msra.mxu0 %v2715
          %3756 = vmatpush.bf16.msra.mxu0 %v2713
          %3757 = vmatmul.bf16.gmra.mxu0 %v989
          %v3758 = vpop.f32.mrf.mxu0
          %v3759 = vadd.f32 %v3740, %v3758
          %v3760 = vpop.f32.mrf.mxu0
          %v3761 = vadd.f32 %v3742, %v3760
          %3762 = vmatmul.bf16.gmra.mxu0 %v1021
          %v3763 = vpop.f32.mrf.mxu0
          %v3764 = vadd.f32 %v3745, %v3763
          %v3765 = vpop.f32.mrf.mxu0
          %v3766 = vadd.f32 %v3747, %v3765
          %3767 = vdwg.mxu0
          %3768 = vmatpush.bf16.msra.mxu0 %v2743
          %3769 = vmatpush.bf16.msra.mxu0 %v2741
          %3770 = vmatpush.bf16.msra.mxu0 %v2739
          %3771 = vmatpush.bf16.msra.mxu0 %v2737
          %3772 = vmatpush.bf16.msra.mxu0 %v2735
          %3773 = vmatpush.bf16.msra.mxu0 %v2733
          %3774 = vmatpush.bf16.msra.mxu0 %v2731
          %3775 = vmatpush.bf16.msra.mxu0 %v2729
          %3776 = vmatmul.bf16.gmra.mxu0 %v990
          %v3777 = vpop.f32.mrf.mxu0
          %v3778 = vadd.f32 %v3759, %v3777
          %v3779 = vpop.f32.mrf.mxu0
          %v3780 = vadd.f32 %v3761, %v3779
          %3781 = vmatmul.bf16.gmra.mxu0 %v1022
          %v3782 = vpop.f32.mrf.mxu0
          %v3783 = vadd.f32 %v3764, %v3782
          %v3784 = vpop.f32.mrf.mxu0
          %v3785 = vadd.f32 %v3766, %v3784
          %3786 = vdwg.mxu0
          %3787 = vmatpush.bf16.msra.mxu0 %v2759
          %3788 = vmatpush.bf16.msra.mxu0 %v2757
          %3789 = vmatpush.bf16.msra.mxu0 %v2755
          %3790 = vmatpush.bf16.msra.mxu0 %v2753
          %3791 = vmatpush.bf16.msra.mxu0 %v2751
          %3792 = vmatpush.bf16.msra.mxu0 %v2749
          %3793 = vmatpush.bf16.msra.mxu0 %v2747
          %3794 = vmatpush.bf16.msra.mxu0 %v2745
          %3795 = vmatmul.bf16.gmra.mxu0 %v991
          %v3796 = vpop.f32.mrf.mxu0
          %v3797 = vadd.f32 %v3778, %v3796
          %v3798 = vpop.f32.mrf.mxu0
          %v3799 = vadd.f32 %v3780, %v3798
          %3800 = vmatmul.bf16.gmra.mxu0 %v1023
          %v3801 = vpop.f32.mrf.mxu0
          %v3802 = vadd.f32 %v3783, %v3801
          %v3803 = vpop.f32.mrf.mxu0
          %v3804 = vadd.f32 %v3785, %v3803
          %3805 = vdwg.mxu0
          %3806 = vmatpush.bf16.msra.mxu0 %v2775
          %3807 = vmatpush.bf16.msra.mxu0 %v2773
          %3808 = vmatpush.bf16.msra.mxu0 %v2771
          %3809 = vmatpush.bf16.msra.mxu0 %v2769
          %3810 = vmatpush.bf16.msra.mxu0 %v2767
          %3811 = vmatpush.bf16.msra.mxu0 %v2765
          %3812 = vmatpush.bf16.msra.mxu0 %v2763
          %3813 = vmatpush.bf16.msra.mxu0 %v2761
          %3814 = vmatmul.bf16.gmra.mxu0 %v992
          %v3815 = vpop.f32.mrf.mxu0
          %v3816 = vadd.f32 %v3797, %v3815
          %v3817 = vpop.f32.mrf.mxu0
          %v3818 = vadd.f32 %v3799, %v3817
          %3819 = vmatmul.bf16.gmra.mxu0 %v1024
          %v3820 = vpop.f32.mrf.mxu0
          %v3821 = vadd.f32 %v3802, %v3820
          %v3822 = vpop.f32.mrf.mxu0
          %v3823 = vadd.f32 %v3804, %v3822
          %3824 = vdwg.mxu0
          %3825 = vmatpush.bf16.msra.mxu0 %v2791
          %3826 = vmatpush.bf16.msra.mxu0 %v2789
          %3827 = vmatpush.bf16.msra.mxu0 %v2787
          %3828 = vmatpush.bf16.msra.mxu0 %v2785
          %3829 = vmatpush.bf16.msra.mxu0 %v2783
          %3830 = vmatpush.bf16.msra.mxu0 %v2781
          %3831 = vmatpush.bf16.msra.mxu0 %v2779
          %3832 = vmatpush.bf16.msra.mxu0 %v2777
          %3833 = vmatmul.bf16.gmra.mxu0 %v993
          %v3834 = vpop.f32.mrf.mxu0
          %v3835 = vadd.f32 %v3816, %v3834
          %v3836 = vpop.f32.mrf.mxu0
          %v3837 = vadd.f32 %v3818, %v3836
          %3838 = vmatmul.bf16.gmra.mxu0 %v1025
          %v3839 = vpop.f32.mrf.mxu0
          %v3840 = vadd.f32 %v3821, %v3839
          %v3841 = vpop.f32.mrf.mxu0
          %v3842 = vadd.f32 %v3823, %v3841
          %3843 = vdwg.mxu0
          %3844 = vmatpush.bf16.msra.mxu0 %v2807
          %3845 = vmatpush.bf16.msra.mxu0 %v2805
          %3846 = vmatpush.bf16.msra.mxu0 %v2803
          %3847 = vmatpush.bf16.msra.mxu0 %v2801
          %3848 = vmatpush.bf16.msra.mxu0 %v2799
          %3849 = vmatpush.bf16.msra.mxu0 %v2797
          %3850 = vmatpush.bf16.msra.mxu0 %v2795
          %3851 = vmatpush.bf16.msra.mxu0 %v2793
          %3852 = vmatmul.bf16.gmra.mxu0 %v994
          %v3853 = vpop.f32.mrf.mxu0
          %v3854 = vadd.f32 %v3835, %v3853
          %v3855 = vpop.f32.mrf.mxu0
          %v3856 = vadd.f32 %v3837, %v3855
          %3857 = vmatmul.bf16.gmra.mxu0 %v1026
          %v3858 = vpop.f32.mrf.mxu0
          %v3859 = vadd.f32 %v3840, %v3858
          %v3860 = vpop.f32.mrf.mxu0
          %v3861 = vadd.f32 %v3842, %v3860
          %3862 = vdwg.mxu0
          %3863 = vmatpush.bf16.msra.mxu0 %v2823
          %3864 = vmatpush.bf16.msra.mxu0 %v2821
          %3865 = vmatpush.bf16.msra.mxu0 %v2819
          %3866 = vmatpush.bf16.msra.mxu0 %v2817
          %3867 = vmatpush.bf16.msra.mxu0 %v2815
          %3868 = vmatpush.bf16.msra.mxu0 %v2813
          %3869 = vmatpush.bf16.msra.mxu0 %v2811
          %3870 = vmatpush.bf16.msra.mxu0 %v2809
          %3871 = vmatmul.bf16.gmra.mxu0 %v995
          %v3872 = vpop.f32.mrf.mxu0
          %v3873 = vadd.f32 %v3854, %v3872
          %v3874 = vpop.f32.mrf.mxu0
          %v3875 = vadd.f32 %v3856, %v3874
          %3876 = vmatmul.bf16.gmra.mxu0 %v1027
          %v3877 = vpop.f32.mrf.mxu0
          %v3878 = vadd.f32 %v3859, %v3877
          %v3879 = vpop.f32.mrf.mxu0
          %v3880 = vadd.f32 %v3861, %v3879
          %3881 = vdwg.mxu0
          %3882 = vmatpush.bf16.msra.mxu0 %v2839
          %3883 = vmatpush.bf16.msra.mxu0 %v2837
          %3884 = vmatpush.bf16.msra.mxu0 %v2835
          %3885 = vmatpush.bf16.msra.mxu0 %v2833
          %3886 = vmatpush.bf16.msra.mxu0 %v2831
          %3887 = vmatpush.bf16.msra.mxu0 %v2829
          %3888 = vmatpush.bf16.msra.mxu0 %v2827
          %3889 = vmatpush.bf16.msra.mxu0 %v2825
          %3890 = vmatmul.bf16.gmra.mxu0 %v996
          %v3891 = vpop.f32.mrf.mxu0
          %v3892 = vadd.f32 %v3873, %v3891
          %v3893 = vpop.f32.mrf.mxu0
          %v3894 = vadd.f32 %v3875, %v3893
          %3895 = vmatmul.bf16.gmra.mxu0 %v1028
          %v3896 = vpop.f32.mrf.mxu0
          %v3897 = vadd.f32 %v3878, %v3896
          %v3898 = vpop.f32.mrf.mxu0
          %v3899 = vadd.f32 %v3880, %v3898
          %3900 = vdwg.mxu0
          %3901 = vmatpush.bf16.msra.mxu0 %v2855
          %3902 = vmatpush.bf16.msra.mxu0 %v2853
          %3903 = vmatpush.bf16.msra.mxu0 %v2851
          %3904 = vmatpush.bf16.msra.mxu0 %v2849
          %3905 = vmatpush.bf16.msra.mxu0 %v2847
          %3906 = vmatpush.bf16.msra.mxu0 %v2845
          %3907 = vmatpush.bf16.msra.mxu0 %v2843
          %3908 = vmatpush.bf16.msra.mxu0 %v2841
          %3909 = vmatmul.bf16.gmra.mxu0 %v997
          %v3910 = vpop.f32.mrf.mxu0
          %v3911 = vadd.f32 %v3892, %v3910
          %v3912 = vpop.f32.mrf.mxu0
          %v3913 = vadd.f32 %v3894, %v3912
          %3914 = vmatmul.bf16.gmra.mxu0 %v1029
          %v3915 = vpop.f32.mrf.mxu0
          %v3916 = vadd.f32 %v3897, %v3915
          %v3917 = vpop.f32.mrf.mxu0
          %v3918 = vadd.f32 %v3899, %v3917
          %3919 = vdwg.mxu0
          %3920 = vmatpush.bf16.msra.mxu0 %v2871
          %3921 = vmatpush.bf16.msra.mxu0 %v2869
          %3922 = vmatpush.bf16.msra.mxu0 %v2867
          %3923 = vmatpush.bf16.msra.mxu0 %v2865
          %3924 = vmatpush.bf16.msra.mxu0 %v2863
          %3925 = vmatpush.bf16.msra.mxu0 %v2861
          %3926 = vmatpush.bf16.msra.mxu0 %v2859
          %3927 = vmatpush.bf16.msra.mxu0 %v2857
          %3928 = vmatmul.bf16.gmra.mxu0 %v998
          %v3929 = vpop.f32.mrf.mxu0
          %v3930 = vadd.f32 %v3911, %v3929
          %v3931 = vpop.f32.mrf.mxu0
          %v3932 = vadd.f32 %v3913, %v3931
          %3933 = vmatmul.bf16.gmra.mxu0 %v1030
          %v3934 = vpop.f32.mrf.mxu0
          %v3935 = vadd.f32 %v3916, %v3934
          %v3936 = vpop.f32.mrf.mxu0
          %v3937 = vadd.f32 %v3918, %v3936
          %3938 = vdwg.mxu0
          %3939 = vmatpush.bf16.msra.mxu0 %v2887
          %3940 = vmatpush.bf16.msra.mxu0 %v2885
          %3941 = vmatpush.bf16.msra.mxu0 %v2883
          %3942 = vmatpush.bf16.msra.mxu0 %v2881
          %3943 = vmatpush.bf16.msra.mxu0 %v2879
          %3944 = vmatpush.bf16.msra.mxu0 %v2877
          %3945 = vmatpush.bf16.msra.mxu0 %v2875
          %3946 = vmatpush.bf16.msra.mxu0 %v2873
          %3947 = vmatmul.bf16.gmra.mxu0 %v999
          %v3948 = vpop.f32.mrf.mxu0
          %v3949 = vadd.f32 %v3930, %v3948
          %v3950 = vpop.f32.mrf.mxu0
          %v3951 = vadd.f32 %v3932, %v3950
          %3952 = vmatmul.bf16.gmra.mxu0 %v1031
          %v3953 = vpop.f32.mrf.mxu0
          %v3954 = vadd.f32 %v3935, %v3953
          %v3955 = vpop.f32.mrf.mxu0
          %v3956 = vadd.f32 %v3937, %v3955
          %3957 = vdwg.mxu0
          %3958 = vmatpush.bf16.msra.mxu0 %v2903
          %3959 = vmatpush.bf16.msra.mxu0 %v2901
          %3960 = vmatpush.bf16.msra.mxu0 %v2899
          %3961 = vmatpush.bf16.msra.mxu0 %v2897
          %3962 = vmatpush.bf16.msra.mxu0 %v2895
          %3963 = vmatpush.bf16.msra.mxu0 %v2893
          %3964 = vmatpush.bf16.msra.mxu0 %v2891
          %3965 = vmatpush.bf16.msra.mxu0 %v2889
          %3966 = vmatmul.bf16.gmra.mxu0 %v1000
          %v3967 = vpop.f32.mrf.mxu0
          %v3968 = vadd.f32 %v3949, %v3967
          %v3969 = vpop.f32.mrf.mxu0
          %v3970 = vadd.f32 %v3951, %v3969
          %3971 = vmatmul.bf16.gmra.mxu0 %v1032
          %v3972 = vpop.f32.mrf.mxu0
          %v3973 = vadd.f32 %v3954, %v3972
          %v3974 = vpop.f32.mrf.mxu0
          %v3975 = vadd.f32 %v3956, %v3974
          %3976 = vdwg.mxu0
          %3977 = vmatpush.bf16.msra.mxu0 %v2919
          %3978 = vmatpush.bf16.msra.mxu0 %v2917
          %3979 = vmatpush.bf16.msra.mxu0 %v2915
          %3980 = vmatpush.bf16.msra.mxu0 %v2913
          %3981 = vmatpush.bf16.msra.mxu0 %v2911
          %3982 = vmatpush.bf16.msra.mxu0 %v2909
          %3983 = vmatpush.bf16.msra.mxu0 %v2907
          %3984 = vmatpush.bf16.msra.mxu0 %v2905
          %3985 = vmatmul.bf16.gmra.mxu0 %v1001
          %v3986 = vpop.f32.mrf.mxu0
          %v3987 = vadd.f32 %v3968, %v3986
          %v3988 = vpop.f32.mrf.mxu0
          %v3989 = vadd.f32 %v3970, %v3988
          %3990 = vmatmul.bf16.gmra.mxu0 %v1033
          %v3991 = vpop.f32.mrf.mxu0
          %v3992 = vadd.f32 %v3973, %v3991
          %v3993 = vpop.f32.mrf.mxu0
          %v3994 = vadd.f32 %v3975, %v3993
          %3995 = vdwg.mxu0
          %3996 = vmatpush.bf16.msra.mxu0 %v2935
          %3997 = vmatpush.bf16.msra.mxu0 %v2933
          %3998 = vmatpush.bf16.msra.mxu0 %v2931
          %3999 = vmatpush.bf16.msra.mxu0 %v2929
          %4000 = vmatpush.bf16.msra.mxu0 %v2927
          %4001 = vmatpush.bf16.msra.mxu0 %v2925
          %4002 = vmatpush.bf16.msra.mxu0 %v2923
          %4003 = vmatpush.bf16.msra.mxu0 %v2921
          %4004 = vmatmul.bf16.gmra.mxu0 %v1002
          %v4005 = vpop.f32.mrf.mxu0
          %v4006 = vadd.f32 %v3987, %v4005
          %v4007 = vpop.f32.mrf.mxu0
          %v4008 = vadd.f32 %v3989, %v4007
          %4009 = vmatmul.bf16.gmra.mxu0 %v1034
          %v4010 = vpop.f32.mrf.mxu0
          %v4011 = vadd.f32 %v3992, %v4010
          %v4012 = vpop.f32.mrf.mxu0
          %v4013 = vadd.f32 %v3994, %v4012
          %4014 = vdwg.mxu0
          %4015 = vmatpush.bf16.msra.mxu0 %v2951
          %4016 = vmatpush.bf16.msra.mxu0 %v2949
          %4017 = vmatpush.bf16.msra.mxu0 %v2947
          %4018 = vmatpush.bf16.msra.mxu0 %v2945
          %4019 = vmatpush.bf16.msra.mxu0 %v2943
          %4020 = vmatpush.bf16.msra.mxu0 %v2941
          %4021 = vmatpush.bf16.msra.mxu0 %v2939
          %4022 = vmatpush.bf16.msra.mxu0 %v2937
          %4023 = vmatmul.bf16.gmra.mxu0 %v1003
          %v4024 = vpop.f32.mrf.mxu0
          %v4025 = vadd.f32 %v4006, %v4024
          %v4026 = vpop.f32.mrf.mxu0
          %v4027 = vadd.f32 %v4008, %v4026
          %4028 = vmatmul.bf16.gmra.mxu0 %v1035
          %v4029 = vpop.f32.mrf.mxu0
          %v4030 = vadd.f32 %v4011, %v4029
          %v4031 = vpop.f32.mrf.mxu0
          %v4032 = vadd.f32 %v4013, %v4031
          %4033 = vdwg.mxu0
          %4034 = vmatpush.bf16.msra.mxu0 %v2967
          %4035 = vmatpush.bf16.msra.mxu0 %v2965
          %4036 = vmatpush.bf16.msra.mxu0 %v2963
          %4037 = vmatpush.bf16.msra.mxu0 %v2961
          %4038 = vmatpush.bf16.msra.mxu0 %v2959
          %4039 = vmatpush.bf16.msra.mxu0 %v2957
          %4040 = vmatpush.bf16.msra.mxu0 %v2955
          %4041 = vmatpush.bf16.msra.mxu0 %v2953
          %4042 = vmatmul.bf16.gmra.mxu0 %v1004
          %v4043 = vpop.f32.mrf.mxu0
          %v4044 = vadd.f32 %v4025, %v4043
          %v4045 = vpop.f32.mrf.mxu0
          %v4046 = vadd.f32 %v4027, %v4045
          %4047 = vmatmul.bf16.gmra.mxu0 %v1036
          %v4048 = vpop.f32.mrf.mxu0
          %v4049 = vadd.f32 %v4030, %v4048
          %v4050 = vpop.f32.mrf.mxu0
          %v4051 = vadd.f32 %v4032, %v4050
          %4052 = vdwg.mxu0
          %4053 = vmatpush.bf16.msra.mxu0 %v2983
          %4054 = vmatpush.bf16.msra.mxu0 %v2981
          %4055 = vmatpush.bf16.msra.mxu0 %v2979
          %4056 = vmatpush.bf16.msra.mxu0 %v2977
          %4057 = vmatpush.bf16.msra.mxu0 %v2975
          %4058 = vmatpush.bf16.msra.mxu0 %v2973
          %4059 = vmatpush.bf16.msra.mxu0 %v2971
          %4060 = vmatpush.bf16.msra.mxu0 %v2969
          %4061 = vmatmul.bf16.gmra.mxu0 %v1005
          %v4062 = vpop.f32.mrf.mxu0
          %v4063 = vadd.f32 %v4044, %v4062
          %v4064 = vpop.f32.mrf.mxu0
          %v4065 = vadd.f32 %v4046, %v4064
          %4066 = vmatmul.bf16.gmra.mxu0 %v1037
          %v4067 = vpop.f32.mrf.mxu0
          %v4068 = vadd.f32 %v4049, %v4067
          %v4069 = vpop.f32.mrf.mxu0
          %v4070 = vadd.f32 %v4051, %v4069
          %4071 = vdwg.mxu0
          %4072 = vmatpush.bf16.msra.mxu0 %v2999
          %4073 = vmatpush.bf16.msra.mxu0 %v2997
          %4074 = vmatpush.bf16.msra.mxu0 %v2995
          %4075 = vmatpush.bf16.msra.mxu0 %v2993
          %4076 = vmatpush.bf16.msra.mxu0 %v2991
          %4077 = vmatpush.bf16.msra.mxu0 %v2989
          %4078 = vmatpush.bf16.msra.mxu0 %v2987
          %4079 = vmatpush.bf16.msra.mxu0 %v2985
          %4080 = vmatmul.bf16.gmra.mxu0 %v1006
          %v4081 = vpop.f32.mrf.mxu0
          %v4082 = vadd.f32 %v4063, %v4081
          %v4083 = vpop.f32.mrf.mxu0
          %v4084 = vadd.f32 %v4065, %v4083
          %4085 = vmatmul.bf16.gmra.mxu0 %v1038
          %v4086 = vpop.f32.mrf.mxu0
          %v4087 = vadd.f32 %v4068, %v4086
          %v4088 = vpop.f32.mrf.mxu0
          %v4089 = vadd.f32 %v4070, %v4088
          %4090 = vdwg.mxu0
          %4091 = vmatpush.bf16.msra.mxu0 %v3015
          %4092 = vmatpush.bf16.msra.mxu0 %v3013
          %4093 = vmatpush.bf16.msra.mxu0 %v3011
          %4094 = vmatpush.bf16.msra.mxu0 %v3009
          %4095 = vmatpush.bf16.msra.mxu0 %v3007
          %4096 = vmatpush.bf16.msra.mxu0 %v3005
          %4097 = vmatpush.bf16.msra.mxu0 %v3003
          %4098 = vmatpush.bf16.msra.mxu0 %v3001
          %4099 = vmatmul.bf16.gmra.mxu0 %v1007
          %v4100 = vpop.f32.mrf.mxu0
          %v4101 = vadd.f32 %v4082, %v4100
          %v4102 = vpop.f32.mrf.mxu0
          %v4103 = vadd.f32 %v4084, %v4102
          %4104 = vmatmul.bf16.gmra.mxu0 %v1039
          %v4105 = vpop.f32.mrf.mxu0
          %v4106 = vadd.f32 %v4087, %v4105
          %v4107 = vpop.f32.mrf.mxu0
          %v4108 = vadd.f32 %v4089, %v4107
          %4109 = vdwg.mxu0
          %4110 = vmatpush.bf16.msra.mxu0 %v3031
          %4111 = vmatpush.bf16.msra.mxu0 %v3029
          %4112 = vmatpush.bf16.msra.mxu0 %v3027
          %4113 = vmatpush.bf16.msra.mxu0 %v3025
          %4114 = vmatpush.bf16.msra.mxu0 %v3023
          %4115 = vmatpush.bf16.msra.mxu0 %v3021
          %4116 = vmatpush.bf16.msra.mxu0 %v3019
          %4117 = vmatpush.bf16.msra.mxu0 %v3017
          %4118 = vmatmul.bf16.gmra.mxu0 %v1008
          %v4119 = vpop.f32.mrf.mxu0
          %v4120 = vadd.f32 %v4101, %v4119
          %v4121 = vpop.f32.mrf.mxu0
          %v4122 = vadd.f32 %v4103, %v4121
          %4123 = vmatmul.bf16.gmra.mxu0 %v1040
          %v4124 = vpop.f32.mrf.mxu0
          %v4125 = vadd.f32 %v4106, %v4124
          %v4126 = vpop.f32.mrf.mxu0
          %v4127 = vadd.f32 %v4108, %v4126
          %4128 = vdwg.mxu0
          %4129 = vmatpush.bf16.msra.mxu0 %v3047
          %4130 = vmatpush.bf16.msra.mxu0 %v3045
          %4131 = vmatpush.bf16.msra.mxu0 %v3043
          %4132 = vmatpush.bf16.msra.mxu0 %v3041
          %4133 = vmatpush.bf16.msra.mxu0 %v3039
          %4134 = vmatpush.bf16.msra.mxu0 %v3037
          %4135 = vmatpush.bf16.msra.mxu0 %v3035
          %4136 = vmatpush.bf16.msra.mxu0 %v3033
          %4137 = vmatmul.bf16.gmra.mxu0 %v1009
          %v4138 = vpop.f32.mrf.mxu0
          %v4139 = vadd.f32 %v4120, %v4138
          %v4140 = vpop.f32.mrf.mxu0
          %v4141 = vadd.f32 %v4122, %v4140
          %4142 = vmatmul.bf16.gmra.mxu0 %v1041
          %v4143 = vpop.f32.mrf.mxu0
          %v4144 = vadd.f32 %v4125, %v4143
          %v4145 = vpop.f32.mrf.mxu0
          %v4146 = vadd.f32 %v4127, %v4145
          %4147 = vdwg.mxu0
          %4148 = vmatpush.bf16.msra.mxu0 %v3063
          %4149 = vmatpush.bf16.msra.mxu0 %v3061
          %4150 = vmatpush.bf16.msra.mxu0 %v3059
          %4151 = vmatpush.bf16.msra.mxu0 %v3057
          %4152 = vmatpush.bf16.msra.mxu0 %v3055
          %4153 = vmatpush.bf16.msra.mxu0 %v3053
          %4154 = vmatpush.bf16.msra.mxu0 %v3051
          %4155 = vmatpush.bf16.msra.mxu0 %v3049
          %4156 = vmatmul.bf16.gmra.mxu0 %v1010
          %v4157 = vpop.f32.mrf.mxu0
          %v4158 = vadd.f32 %v4139, %v4157
          %v4159 = vpop.f32.mrf.mxu0
          %v4160 = vadd.f32 %v4141, %v4159
          %4161 = vmatmul.bf16.gmra.mxu0 %v1042
          %v4162 = vpop.f32.mrf.mxu0
          %v4163 = vadd.f32 %v4144, %v4162
          %v4164 = vpop.f32.mrf.mxu0
          %v4165 = vadd.f32 %v4146, %v4164
          %4166 = vdwg.mxu0
          %4167 = vmatpush.bf16.msra.mxu0 %v3079
          %4168 = vmatpush.bf16.msra.mxu0 %v3077
          %4169 = vmatpush.bf16.msra.mxu0 %v3075
          %4170 = vmatpush.bf16.msra.mxu0 %v3073
          %4171 = vmatpush.bf16.msra.mxu0 %v3071
          %4172 = vmatpush.bf16.msra.mxu0 %v3069
          %4173 = vmatpush.bf16.msra.mxu0 %v3067
          %4174 = vmatpush.bf16.msra.mxu0 %v3065
          %4175 = vmatmul.bf16.gmra.mxu0 %v1011
          %v4176 = vpop.f32.mrf.mxu0
          %v4177 = vadd.f32 %v4158, %v4176
          %v4178 = vpop.f32.mrf.mxu0
          %v4179 = vadd.f32 %v4160, %v4178
          %4180 = vmatmul.bf16.gmra.mxu0 %v1043
          %v4181 = vpop.f32.mrf.mxu0
          %v4182 = vadd.f32 %v4163, %v4181
          %v4183 = vpop.f32.mrf.mxu0
          %v4184 = vadd.f32 %v4165, %v4183
          %4185 = vdwg.mxu0
          %4186 = vmatpush.bf16.msra.mxu0 %v3095
          %4187 = vmatpush.bf16.msra.mxu0 %v3093
          %4188 = vmatpush.bf16.msra.mxu0 %v3091
          %4189 = vmatpush.bf16.msra.mxu0 %v3089
          %4190 = vmatpush.bf16.msra.mxu0 %v3087
          %4191 = vmatpush.bf16.msra.mxu0 %v3085
          %4192 = vmatpush.bf16.msra.mxu0 %v3083
          %4193 = vmatpush.bf16.msra.mxu0 %v3081
          %4194 = vmatmul.bf16.gmra.mxu0 %v1012
          %v4195 = vpop.f32.mrf.mxu0
          %v4196 = vadd.f32 %v4177, %v4195
          %v4197 = vpop.f32.mrf.mxu0
          %v4198 = vadd.f32 %v4179, %v4197
          %4199 = vmatmul.bf16.gmra.mxu0 %v1044
          %v4200 = vpop.f32.mrf.mxu0
          %v4201 = vadd.f32 %v4182, %v4200
          %v4202 = vpop.f32.mrf.mxu0
          %v4203 = vadd.f32 %v4184, %v4202
          %4204 = vdwg.mxu0
          %4205 = vmatpush.bf16.msra.mxu0 %v3111
          %4206 = vmatpush.bf16.msra.mxu0 %v3109
          %4207 = vmatpush.bf16.msra.mxu0 %v3107
          %4208 = vmatpush.bf16.msra.mxu0 %v3105
          %4209 = vmatpush.bf16.msra.mxu0 %v3103
          %4210 = vmatpush.bf16.msra.mxu0 %v3101
          %4211 = vmatpush.bf16.msra.mxu0 %v3099
          %4212 = vmatpush.bf16.msra.mxu0 %v3097
          %4213 = vmatmul.bf16.gmra.mxu0 %v1013
          %v4214 = vpop.f32.mrf.mxu0
          %v4215 = vadd.f32 %v4196, %v4214
          %v4216 = vpop.f32.mrf.mxu0
          %v4217 = vadd.f32 %v4198, %v4216
          %4218 = vmatmul.bf16.gmra.mxu0 %v1045
          %v4219 = vpop.f32.mrf.mxu0
          %v4220 = vadd.f32 %v4201, %v4219
          %v4221 = vpop.f32.mrf.mxu0
          %v4222 = vadd.f32 %v4203, %v4221
          %4223 = vdwg.mxu0
          %4224 = vmatpush.bf16.msra.mxu0 %v3127
          %4225 = vmatpush.bf16.msra.mxu0 %v3125
          %4226 = vmatpush.bf16.msra.mxu0 %v3123
          %4227 = vmatpush.bf16.msra.mxu0 %v3121
          %4228 = vmatpush.bf16.msra.mxu0 %v3119
          %4229 = vmatpush.bf16.msra.mxu0 %v3117
          %4230 = vmatpush.bf16.msra.mxu0 %v3115
          %4231 = vmatpush.bf16.msra.mxu0 %v3113
          %4232 = vmatmul.bf16.gmra.mxu0 %v1014
          %v4233 = vpop.f32.mrf.mxu0
          %v4234 = vadd.f32 %v4215, %v4233
          %v4235 = vpop.f32.mrf.mxu0
          %v4236 = vadd.f32 %v4217, %v4235
          %4237 = vmatmul.bf16.gmra.mxu0 %v1046
          %v4238 = vpop.f32.mrf.mxu0
          %v4239 = vadd.f32 %v4220, %v4238
          %v4240 = vpop.f32.mrf.mxu0
          %v4241 = vadd.f32 %v4222, %v4240
          %4242 = vdwg.mxu0
          %4243 = vmatpush.bf16.msra.mxu0 %v3143
          %4244 = vmatpush.bf16.msra.mxu0 %v3141
          %4245 = vmatpush.bf16.msra.mxu0 %v3139
          %4246 = vmatpush.bf16.msra.mxu0 %v3137
          %4247 = vmatpush.bf16.msra.mxu0 %v3135
          %4248 = vmatpush.bf16.msra.mxu0 %v3133
          %4249 = vmatpush.bf16.msra.mxu0 %v3131
          %4250 = vmatpush.bf16.msra.mxu0 %v3129
          %4251 = vmatmul.bf16.gmra.mxu0 %v1015
          %v4252 = vpop.f32.mrf.mxu0
          %v4253 = vadd.f32 %v4234, %v4252
          %v4254 = vpop.f32.mrf.mxu0
          %v4255 = vadd.f32 %v4236, %v4254
          %4256 = vmatmul.bf16.gmra.mxu0 %v1047
          %v4257 = vpop.f32.mrf.mxu0
          %v4258 = vadd.f32 %v4239, %v4257
          %v4259 = vpop.f32.mrf.mxu0
          %v4260 = vadd.f32 %v4241, %v4259
          %4261 = vdwg.mxu0
          %4262 = vmatpush.bf16.msra.mxu0 %v3159
          %4263 = vmatpush.bf16.msra.mxu0 %v3157
          %4264 = vmatpush.bf16.msra.mxu0 %v3155
          %4265 = vmatpush.bf16.msra.mxu0 %v3153
          %4266 = vmatpush.bf16.msra.mxu0 %v3151
          %4267 = vmatpush.bf16.msra.mxu0 %v3149
          %4268 = vmatpush.bf16.msra.mxu0 %v3147
          %4269 = vmatpush.bf16.msra.mxu0 %v3145
          %4270 = vmatmul.bf16.gmra.mxu0 %v1016
          %v4271 = vpop.f32.mrf.mxu0
          %v4272 = vadd.f32 %v4253, %v4271
          %v4273 = vpop.f32.mrf.mxu0
          %v4274 = vadd.f32 %v4255, %v4273
          %4275 = vmatmul.bf16.gmra.mxu0 %v1048
          %v4276 = vpop.f32.mrf.mxu0
          %v4277 = vadd.f32 %v4258, %v4276
          %v4278 = vpop.f32.mrf.mxu0
          %v4279 = vadd.f32 %v4260, %v4278
          %4280 = vdwg.mxu0
          %4281 = vmatpush.bf16.msra.mxu0 %v2664
          %4282 = vmatpush.bf16.msra.mxu0 %v2662
          %4283 = vmatpush.bf16.msra.mxu0 %v2660
          %4284 = vmatpush.bf16.msra.mxu0 %v2658
          %4285 = vmatpush.bf16.msra.mxu0 %v2656
          %4286 = vmatpush.bf16.msra.mxu0 %v2654
          %4287 = vmatpush.bf16.msra.mxu0 %v2652
          %4288 = vmatpush.bf16.msra.mxu0 %v2650
          %4289 = vmatmul.bf16.gmra.mxu0 %v985
          %v4290 = vpop.f32.mrf.mxu0
          %v4291 = vadd.f32 0.0, %v4290
          %v4292 = vpop.f32.mrf.mxu0
          %v4293 = vadd.f32 0.0, %v4292
          %4294 = vmatmul.bf16.gmra.mxu0 %v1017
          %v4295 = vpop.f32.mrf.mxu0
          %v4296 = vadd.f32 0.0, %v4295
          %v4297 = vpop.f32.mrf.mxu0
          %v4298 = vadd.f32 0.0, %v4297
          %4299 = vdwg.mxu0
          %4300 = vmatpush.bf16.msra.mxu0 %v2680
          %4301 = vmatpush.bf16.msra.mxu0 %v2678
          %4302 = vmatpush.bf16.msra.mxu0 %v2676
          %4303 = vmatpush.bf16.msra.mxu0 %v2674
          %4304 = vmatpush.bf16.msra.mxu0 %v2672
          %4305 = vmatpush.bf16.msra.mxu0 %v2670
          %4306 = vmatpush.bf16.msra.mxu0 %v2668
          %4307 = vmatpush.bf16.msra.mxu0 %v2666
          %4308 = vmatmul.bf16.gmra.mxu0 %v986
          %v4309 = vpop.f32.mrf.mxu0
          %v4310 = vadd.f32 %v4291, %v4309
          %v4311 = vpop.f32.mrf.mxu0
          %v4312 = vadd.f32 %v4293, %v4311
          %4313 = vmatmul.bf16.gmra.mxu0 %v1018
          %v4314 = vpop.f32.mrf.mxu0
          %v4315 = vadd.f32 %v4296, %v4314
          %v4316 = vpop.f32.mrf.mxu0
          %v4317 = vadd.f32 %v4298, %v4316
          %4318 = vdwg.mxu0
          %4319 = vmatpush.bf16.msra.mxu0 %v2696
          %4320 = vmatpush.bf16.msra.mxu0 %v2694
          %4321 = vmatpush.bf16.msra.mxu0 %v2692
          %4322 = vmatpush.bf16.msra.mxu0 %v2690
          %4323 = vmatpush.bf16.msra.mxu0 %v2688
          %4324 = vmatpush.bf16.msra.mxu0 %v2686
          %4325 = vmatpush.bf16.msra.mxu0 %v2684
          %4326 = vmatpush.bf16.msra.mxu0 %v2682
          %4327 = vmatmul.bf16.gmra.mxu0 %v987
          %v4328 = vpop.f32.mrf.mxu0
          %v4329 = vadd.f32 %v4310, %v4328
          %v4330 = vpop.f32.mrf.mxu0
          %v4331 = vadd.f32 %v4312, %v4330
          %4332 = vmatmul.bf16.gmra.mxu0 %v1019
          %v4333 = vpop.f32.mrf.mxu0
          %v4334 = vadd.f32 %v4315, %v4333
          %v4335 = vpop.f32.mrf.mxu0
          %v4336 = vadd.f32 %v4317, %v4335
          %4337 = vdwg.mxu0
          %4338 = vmatpush.bf16.msra.mxu0 %v2712
          %4339 = vmatpush.bf16.msra.mxu0 %v2710
          %4340 = vmatpush.bf16.msra.mxu0 %v2708
          %4341 = vmatpush.bf16.msra.mxu0 %v2706
          %4342 = vmatpush.bf16.msra.mxu0 %v2704
          %4343 = vmatpush.bf16.msra.mxu0 %v2702
          %4344 = vmatpush.bf16.msra.mxu0 %v2700
          %4345 = vmatpush.bf16.msra.mxu0 %v2698
          %4346 = vmatmul.bf16.gmra.mxu0 %v988
          %v4347 = vpop.f32.mrf.mxu0
          %v4348 = vadd.f32 %v4329, %v4347
          %v4349 = vpop.f32.mrf.mxu0
          %v4350 = vadd.f32 %v4331, %v4349
          %4351 = vmatmul.bf16.gmra.mxu0 %v1020
          %v4352 = vpop.f32.mrf.mxu0
          %v4353 = vadd.f32 %v4334, %v4352
          %v4354 = vpop.f32.mrf.mxu0
          %v4355 = vadd.f32 %v4336, %v4354
          %4356 = vdwg.mxu0
          %4357 = vmatpush.bf16.msra.mxu0 %v2728
          %4358 = vmatpush.bf16.msra.mxu0 %v2726
          %4359 = vmatpush.bf16.msra.mxu0 %v2724
          %4360 = vmatpush.bf16.msra.mxu0 %v2722
          %4361 = vmatpush.bf16.msra.mxu0 %v2720
          %4362 = vmatpush.bf16.msra.mxu0 %v2718
          %4363 = vmatpush.bf16.msra.mxu0 %v2716
          %4364 = vmatpush.bf16.msra.mxu0 %v2714
          %4365 = vmatmul.bf16.gmra.mxu0 %v989
          %v4366 = vpop.f32.mrf.mxu0
          %v4367 = vadd.f32 %v4348, %v4366
          %v4368 = vpop.f32.mrf.mxu0
          %v4369 = vadd.f32 %v4350, %v4368
          %4370 = vmatmul.bf16.gmra.mxu0 %v1021
          %v4371 = vpop.f32.mrf.mxu0
          %v4372 = vadd.f32 %v4353, %v4371
          %v4373 = vpop.f32.mrf.mxu0
          %v4374 = vadd.f32 %v4355, %v4373
          %4375 = vdwg.mxu0
          %4376 = vmatpush.bf16.msra.mxu0 %v2744
          %4377 = vmatpush.bf16.msra.mxu0 %v2742
          %4378 = vmatpush.bf16.msra.mxu0 %v2740
          %4379 = vmatpush.bf16.msra.mxu0 %v2738
          %4380 = vmatpush.bf16.msra.mxu0 %v2736
          %4381 = vmatpush.bf16.msra.mxu0 %v2734
          %4382 = vmatpush.bf16.msra.mxu0 %v2732
          %4383 = vmatpush.bf16.msra.mxu0 %v2730
          %4384 = vmatmul.bf16.gmra.mxu0 %v990
          %v4385 = vpop.f32.mrf.mxu0
          %v4386 = vadd.f32 %v4367, %v4385
          %v4387 = vpop.f32.mrf.mxu0
          %v4388 = vadd.f32 %v4369, %v4387
          %4389 = vmatmul.bf16.gmra.mxu0 %v1022
          %v4390 = vpop.f32.mrf.mxu0
          %v4391 = vadd.f32 %v4372, %v4390
          %v4392 = vpop.f32.mrf.mxu0
          %v4393 = vadd.f32 %v4374, %v4392
          %4394 = vdwg.mxu0
          %4395 = vmatpush.bf16.msra.mxu0 %v2760
          %4396 = vmatpush.bf16.msra.mxu0 %v2758
          %4397 = vmatpush.bf16.msra.mxu0 %v2756
          %4398 = vmatpush.bf16.msra.mxu0 %v2754
          %4399 = vmatpush.bf16.msra.mxu0 %v2752
          %4400 = vmatpush.bf16.msra.mxu0 %v2750
          %4401 = vmatpush.bf16.msra.mxu0 %v2748
          %4402 = vmatpush.bf16.msra.mxu0 %v2746
          %4403 = vmatmul.bf16.gmra.mxu0 %v991
          %v4404 = vpop.f32.mrf.mxu0
          %v4405 = vadd.f32 %v4386, %v4404
          %v4406 = vpop.f32.mrf.mxu0
          %v4407 = vadd.f32 %v4388, %v4406
          %4408 = vmatmul.bf16.gmra.mxu0 %v1023
          %v4409 = vpop.f32.mrf.mxu0
          %v4410 = vadd.f32 %v4391, %v4409
          %v4411 = vpop.f32.mrf.mxu0
          %v4412 = vadd.f32 %v4393, %v4411
          %4413 = vdwg.mxu0
          %4414 = vmatpush.bf16.msra.mxu0 %v2776
          %4415 = vmatpush.bf16.msra.mxu0 %v2774
          %4416 = vmatpush.bf16.msra.mxu0 %v2772
          %4417 = vmatpush.bf16.msra.mxu0 %v2770
          %4418 = vmatpush.bf16.msra.mxu0 %v2768
          %4419 = vmatpush.bf16.msra.mxu0 %v2766
          %4420 = vmatpush.bf16.msra.mxu0 %v2764
          %4421 = vmatpush.bf16.msra.mxu0 %v2762
          %4422 = vmatmul.bf16.gmra.mxu0 %v992
          %v4423 = vpop.f32.mrf.mxu0
          %v4424 = vadd.f32 %v4405, %v4423
          %v4425 = vpop.f32.mrf.mxu0
          %v4426 = vadd.f32 %v4407, %v4425
          %4427 = vmatmul.bf16.gmra.mxu0 %v1024
          %v4428 = vpop.f32.mrf.mxu0
          %v4429 = vadd.f32 %v4410, %v4428
          %v4430 = vpop.f32.mrf.mxu0
          %v4431 = vadd.f32 %v4412, %v4430
          %4432 = vdwg.mxu0
          %4433 = vmatpush.bf16.msra.mxu0 %v2792
          %4434 = vmatpush.bf16.msra.mxu0 %v2790
          %4435 = vmatpush.bf16.msra.mxu0 %v2788
          %4436 = vmatpush.bf16.msra.mxu0 %v2786
          %4437 = vmatpush.bf16.msra.mxu0 %v2784
          %4438 = vmatpush.bf16.msra.mxu0 %v2782
          %4439 = vmatpush.bf16.msra.mxu0 %v2780
          %4440 = vmatpush.bf16.msra.mxu0 %v2778
          %4441 = vmatmul.bf16.gmra.mxu0 %v993
          %v4442 = vpop.f32.mrf.mxu0
          %v4443 = vadd.f32 %v4424, %v4442
          %v4444 = vpop.f32.mrf.mxu0
          %v4445 = vadd.f32 %v4426, %v4444
          %4446 = vmatmul.bf16.gmra.mxu0 %v1025
          %v4447 = vpop.f32.mrf.mxu0
          %v4448 = vadd.f32 %v4429, %v4447
          %v4449 = vpop.f32.mrf.mxu0
          %v4450 = vadd.f32 %v4431, %v4449
          %4451 = vdwg.mxu0
          %4452 = vmatpush.bf16.msra.mxu0 %v2808
          %4453 = vmatpush.bf16.msra.mxu0 %v2806
          %4454 = vmatpush.bf16.msra.mxu0 %v2804
          %4455 = vmatpush.bf16.msra.mxu0 %v2802
          %4456 = vmatpush.bf16.msra.mxu0 %v2800
          %4457 = vmatpush.bf16.msra.mxu0 %v2798
          %4458 = vmatpush.bf16.msra.mxu0 %v2796
          %4459 = vmatpush.bf16.msra.mxu0 %v2794
          %4460 = vmatmul.bf16.gmra.mxu0 %v994
          %v4461 = vpop.f32.mrf.mxu0
          %v4462 = vadd.f32 %v4443, %v4461
          %v4463 = vpop.f32.mrf.mxu0
          %v4464 = vadd.f32 %v4445, %v4463
          %4465 = vmatmul.bf16.gmra.mxu0 %v1026
          %v4466 = vpop.f32.mrf.mxu0
          %v4467 = vadd.f32 %v4448, %v4466
          %v4468 = vpop.f32.mrf.mxu0
          %v4469 = vadd.f32 %v4450, %v4468
          %4470 = vdwg.mxu0
          %4471 = vmatpush.bf16.msra.mxu0 %v2824
          %4472 = vmatpush.bf16.msra.mxu0 %v2822
          %4473 = vmatpush.bf16.msra.mxu0 %v2820
          %4474 = vmatpush.bf16.msra.mxu0 %v2818
          %4475 = vmatpush.bf16.msra.mxu0 %v2816
          %4476 = vmatpush.bf16.msra.mxu0 %v2814
          %4477 = vmatpush.bf16.msra.mxu0 %v2812
          %4478 = vmatpush.bf16.msra.mxu0 %v2810
          %4479 = vmatmul.bf16.gmra.mxu0 %v995
          %v4480 = vpop.f32.mrf.mxu0
          %v4481 = vadd.f32 %v4462, %v4480
          %v4482 = vpop.f32.mrf.mxu0
          %v4483 = vadd.f32 %v4464, %v4482
          %4484 = vmatmul.bf16.gmra.mxu0 %v1027
          %v4485 = vpop.f32.mrf.mxu0
          %v4486 = vadd.f32 %v4467, %v4485
          %v4487 = vpop.f32.mrf.mxu0
          %v4488 = vadd.f32 %v4469, %v4487
          %4489 = vdwg.mxu0
          %4490 = vmatpush.bf16.msra.mxu0 %v2840
          %4491 = vmatpush.bf16.msra.mxu0 %v2838
          %4492 = vmatpush.bf16.msra.mxu0 %v2836
          %4493 = vmatpush.bf16.msra.mxu0 %v2834
          %4494 = vmatpush.bf16.msra.mxu0 %v2832
          %4495 = vmatpush.bf16.msra.mxu0 %v2830
          %4496 = vmatpush.bf16.msra.mxu0 %v2828
          %4497 = vmatpush.bf16.msra.mxu0 %v2826
          %4498 = vmatmul.bf16.gmra.mxu0 %v996
          %v4499 = vpop.f32.mrf.mxu0
          %v4500 = vadd.f32 %v4481, %v4499
          %v4501 = vpop.f32.mrf.mxu0
          %v4502 = vadd.f32 %v4483, %v4501
          %4503 = vmatmul.bf16.gmra.mxu0 %v1028
          %v4504 = vpop.f32.mrf.mxu0
          %v4505 = vadd.f32 %v4486, %v4504
          %v4506 = vpop.f32.mrf.mxu0
          %v4507 = vadd.f32 %v4488, %v4506
          %4508 = vdwg.mxu0
          %4509 = vmatpush.bf16.msra.mxu0 %v2856
          %4510 = vmatpush.bf16.msra.mxu0 %v2854
          %4511 = vmatpush.bf16.msra.mxu0 %v2852
          %4512 = vmatpush.bf16.msra.mxu0 %v2850
          %4513 = vmatpush.bf16.msra.mxu0 %v2848
          %4514 = vmatpush.bf16.msra.mxu0 %v2846
          %4515 = vmatpush.bf16.msra.mxu0 %v2844
          %4516 = vmatpush.bf16.msra.mxu0 %v2842
          %4517 = vmatmul.bf16.gmra.mxu0 %v997
          %v4518 = vpop.f32.mrf.mxu0
          %v4519 = vadd.f32 %v4500, %v4518
          %v4520 = vpop.f32.mrf.mxu0
          %v4521 = vadd.f32 %v4502, %v4520
          %4522 = vmatmul.bf16.gmra.mxu0 %v1029
          %v4523 = vpop.f32.mrf.mxu0
          %v4524 = vadd.f32 %v4505, %v4523
          %v4525 = vpop.f32.mrf.mxu0
          %v4526 = vadd.f32 %v4507, %v4525
          %4527 = vdwg.mxu0
          %4528 = vmatpush.bf16.msra.mxu0 %v2872
          %4529 = vmatpush.bf16.msra.mxu0 %v2870
          %4530 = vmatpush.bf16.msra.mxu0 %v2868
          %4531 = vmatpush.bf16.msra.mxu0 %v2866
          %4532 = vmatpush.bf16.msra.mxu0 %v2864
          %4533 = vmatpush.bf16.msra.mxu0 %v2862
          %4534 = vmatpush.bf16.msra.mxu0 %v2860
          %4535 = vmatpush.bf16.msra.mxu0 %v2858
          %4536 = vmatmul.bf16.gmra.mxu0 %v998
          %v4537 = vpop.f32.mrf.mxu0
          %v4538 = vadd.f32 %v4519, %v4537
          %v4539 = vpop.f32.mrf.mxu0
          %v4540 = vadd.f32 %v4521, %v4539
          %4541 = vmatmul.bf16.gmra.mxu0 %v1030
          %v4542 = vpop.f32.mrf.mxu0
          %v4543 = vadd.f32 %v4524, %v4542
          %v4544 = vpop.f32.mrf.mxu0
          %v4545 = vadd.f32 %v4526, %v4544
          %4546 = vdwg.mxu0
          %4547 = vmatpush.bf16.msra.mxu0 %v2888
          %4548 = vmatpush.bf16.msra.mxu0 %v2886
          %4549 = vmatpush.bf16.msra.mxu0 %v2884
          %4550 = vmatpush.bf16.msra.mxu0 %v2882
          %4551 = vmatpush.bf16.msra.mxu0 %v2880
          %4552 = vmatpush.bf16.msra.mxu0 %v2878
          %4553 = vmatpush.bf16.msra.mxu0 %v2876
          %4554 = vmatpush.bf16.msra.mxu0 %v2874
          %4555 = vmatmul.bf16.gmra.mxu0 %v999
          %v4556 = vpop.f32.mrf.mxu0
          %v4557 = vadd.f32 %v4538, %v4556
          %v4558 = vpop.f32.mrf.mxu0
          %v4559 = vadd.f32 %v4540, %v4558
          %4560 = vmatmul.bf16.gmra.mxu0 %v1031
          %v4561 = vpop.f32.mrf.mxu0
          %v4562 = vadd.f32 %v4543, %v4561
          %v4563 = vpop.f32.mrf.mxu0
          %v4564 = vadd.f32 %v4545, %v4563
          %4565 = vdwg.mxu0
          %4566 = vmatpush.bf16.msra.mxu0 %v2904
          %4567 = vmatpush.bf16.msra.mxu0 %v2902
          %4568 = vmatpush.bf16.msra.mxu0 %v2900
          %4569 = vmatpush.bf16.msra.mxu0 %v2898
          %4570 = vmatpush.bf16.msra.mxu0 %v2896
          %4571 = vmatpush.bf16.msra.mxu0 %v2894
          %4572 = vmatpush.bf16.msra.mxu0 %v2892
          %4573 = vmatpush.bf16.msra.mxu0 %v2890
          %4574 = vmatmul.bf16.gmra.mxu0 %v1000
          %v4575 = vpop.f32.mrf.mxu0
          %v4576 = vadd.f32 %v4557, %v4575
          %v4577 = vpop.f32.mrf.mxu0
          %v4578 = vadd.f32 %v4559, %v4577
          %4579 = vmatmul.bf16.gmra.mxu0 %v1032
          %v4580 = vpop.f32.mrf.mxu0
          %v4581 = vadd.f32 %v4562, %v4580
          %v4582 = vpop.f32.mrf.mxu0
          %v4583 = vadd.f32 %v4564, %v4582
          %4584 = vdwg.mxu0
          %4585 = vmatpush.bf16.msra.mxu0 %v2920
          %4586 = vmatpush.bf16.msra.mxu0 %v2918
          %4587 = vmatpush.bf16.msra.mxu0 %v2916
          %4588 = vmatpush.bf16.msra.mxu0 %v2914
          %4589 = vmatpush.bf16.msra.mxu0 %v2912
          %4590 = vmatpush.bf16.msra.mxu0 %v2910
          %4591 = vmatpush.bf16.msra.mxu0 %v2908
          %4592 = vmatpush.bf16.msra.mxu0 %v2906
          %4593 = vmatmul.bf16.gmra.mxu0 %v1001
          %v4594 = vpop.f32.mrf.mxu0
          %v4595 = vadd.f32 %v4576, %v4594
          %v4596 = vpop.f32.mrf.mxu0
          %v4597 = vadd.f32 %v4578, %v4596
          %4598 = vmatmul.bf16.gmra.mxu0 %v1033
          %v4599 = vpop.f32.mrf.mxu0
          %v4600 = vadd.f32 %v4581, %v4599
          %v4601 = vpop.f32.mrf.mxu0
          %v4602 = vadd.f32 %v4583, %v4601
          %4603 = vdwg.mxu0
          %4604 = vmatpush.bf16.msra.mxu0 %v2936
          %4605 = vmatpush.bf16.msra.mxu0 %v2934
          %4606 = vmatpush.bf16.msra.mxu0 %v2932
          %4607 = vmatpush.bf16.msra.mxu0 %v2930
          %4608 = vmatpush.bf16.msra.mxu0 %v2928
          %4609 = vmatpush.bf16.msra.mxu0 %v2926
          %4610 = vmatpush.bf16.msra.mxu0 %v2924
          %4611 = vmatpush.bf16.msra.mxu0 %v2922
          %4612 = vmatmul.bf16.gmra.mxu0 %v1002
          %v4613 = vpop.f32.mrf.mxu0
          %v4614 = vadd.f32 %v4595, %v4613
          %v4615 = vpop.f32.mrf.mxu0
          %v4616 = vadd.f32 %v4597, %v4615
          %4617 = vmatmul.bf16.gmra.mxu0 %v1034
          %v4618 = vpop.f32.mrf.mxu0
          %v4619 = vadd.f32 %v4600, %v4618
          %v4620 = vpop.f32.mrf.mxu0
          %v4621 = vadd.f32 %v4602, %v4620
          %4622 = vdwg.mxu0
          %4623 = vmatpush.bf16.msra.mxu0 %v2952
          %4624 = vmatpush.bf16.msra.mxu0 %v2950
          %4625 = vmatpush.bf16.msra.mxu0 %v2948
          %4626 = vmatpush.bf16.msra.mxu0 %v2946
          %4627 = vmatpush.bf16.msra.mxu0 %v2944
          %4628 = vmatpush.bf16.msra.mxu0 %v2942
          %4629 = vmatpush.bf16.msra.mxu0 %v2940
          %4630 = vmatpush.bf16.msra.mxu0 %v2938
          %4631 = vmatmul.bf16.gmra.mxu0 %v1003
          %v4632 = vpop.f32.mrf.mxu0
          %v4633 = vadd.f32 %v4614, %v4632
          %v4634 = vpop.f32.mrf.mxu0
          %v4635 = vadd.f32 %v4616, %v4634
          %4636 = vmatmul.bf16.gmra.mxu0 %v1035
          %v4637 = vpop.f32.mrf.mxu0
          %v4638 = vadd.f32 %v4619, %v4637
          %v4639 = vpop.f32.mrf.mxu0
          %v4640 = vadd.f32 %v4621, %v4639
          %4641 = vdwg.mxu0
          %4642 = vmatpush.bf16.msra.mxu0 %v2968
          %4643 = vmatpush.bf16.msra.mxu0 %v2966
          %4644 = vmatpush.bf16.msra.mxu0 %v2964
          %4645 = vmatpush.bf16.msra.mxu0 %v2962
          %4646 = vmatpush.bf16.msra.mxu0 %v2960
          %4647 = vmatpush.bf16.msra.mxu0 %v2958
          %4648 = vmatpush.bf16.msra.mxu0 %v2956
          %4649 = vmatpush.bf16.msra.mxu0 %v2954
          %4650 = vmatmul.bf16.gmra.mxu0 %v1004
          %v4651 = vpop.f32.mrf.mxu0
          %v4652 = vadd.f32 %v4633, %v4651
          %v4653 = vpop.f32.mrf.mxu0
          %v4654 = vadd.f32 %v4635, %v4653
          %4655 = vmatmul.bf16.gmra.mxu0 %v1036
          %v4656 = vpop.f32.mrf.mxu0
          %v4657 = vadd.f32 %v4638, %v4656
          %v4658 = vpop.f32.mrf.mxu0
          %v4659 = vadd.f32 %v4640, %v4658
          %4660 = vdwg.mxu0
          %4661 = vmatpush.bf16.msra.mxu0 %v2984
          %4662 = vmatpush.bf16.msra.mxu0 %v2982
          %4663 = vmatpush.bf16.msra.mxu0 %v2980
          %4664 = vmatpush.bf16.msra.mxu0 %v2978
          %4665 = vmatpush.bf16.msra.mxu0 %v2976
          %4666 = vmatpush.bf16.msra.mxu0 %v2974
          %4667 = vmatpush.bf16.msra.mxu0 %v2972
          %4668 = vmatpush.bf16.msra.mxu0 %v2970
          %4669 = vmatmul.bf16.gmra.mxu0 %v1005
          %v4670 = vpop.f32.mrf.mxu0
          %v4671 = vadd.f32 %v4652, %v4670
          %v4672 = vpop.f32.mrf.mxu0
          %v4673 = vadd.f32 %v4654, %v4672
          %4674 = vmatmul.bf16.gmra.mxu0 %v1037
          %v4675 = vpop.f32.mrf.mxu0
          %v4676 = vadd.f32 %v4657, %v4675
          %v4677 = vpop.f32.mrf.mxu0
          %v4678 = vadd.f32 %v4659, %v4677
          %4679 = vdwg.mxu0
          %4680 = vmatpush.bf16.msra.mxu0 %v3000
          %4681 = vmatpush.bf16.msra.mxu0 %v2998
          %4682 = vmatpush.bf16.msra.mxu0 %v2996
          %4683 = vmatpush.bf16.msra.mxu0 %v2994
          %4684 = vmatpush.bf16.msra.mxu0 %v2992
          %4685 = vmatpush.bf16.msra.mxu0 %v2990
          %4686 = vmatpush.bf16.msra.mxu0 %v2988
          %4687 = vmatpush.bf16.msra.mxu0 %v2986
          %4688 = vmatmul.bf16.gmra.mxu0 %v1006
          %v4689 = vpop.f32.mrf.mxu0
          %v4690 = vadd.f32 %v4671, %v4689
          %v4691 = vpop.f32.mrf.mxu0
          %v4692 = vadd.f32 %v4673, %v4691
          %4693 = vmatmul.bf16.gmra.mxu0 %v1038
          %v4694 = vpop.f32.mrf.mxu0
          %v4695 = vadd.f32 %v4676, %v4694
          %v4696 = vpop.f32.mrf.mxu0
          %v4697 = vadd.f32 %v4678, %v4696
          %4698 = vdwg.mxu0
          %4699 = vmatpush.bf16.msra.mxu0 %v3016
          %4700 = vmatpush.bf16.msra.mxu0 %v3014
          %4701 = vmatpush.bf16.msra.mxu0 %v3012
          %4702 = vmatpush.bf16.msra.mxu0 %v3010
          %4703 = vmatpush.bf16.msra.mxu0 %v3008
          %4704 = vmatpush.bf16.msra.mxu0 %v3006
          %4705 = vmatpush.bf16.msra.mxu0 %v3004
          %4706 = vmatpush.bf16.msra.mxu0 %v3002
          %4707 = vmatmul.bf16.gmra.mxu0 %v1007
          %v4708 = vpop.f32.mrf.mxu0
          %v4709 = vadd.f32 %v4690, %v4708
          %v4710 = vpop.f32.mrf.mxu0
          %v4711 = vadd.f32 %v4692, %v4710
          %4712 = vmatmul.bf16.gmra.mxu0 %v1039
          %v4713 = vpop.f32.mrf.mxu0
          %v4714 = vadd.f32 %v4695, %v4713
          %v4715 = vpop.f32.mrf.mxu0
          %v4716 = vadd.f32 %v4697, %v4715
          %4717 = vdwg.mxu0
          %4718 = vmatpush.bf16.msra.mxu0 %v3032
          %4719 = vmatpush.bf16.msra.mxu0 %v3030
          %4720 = vmatpush.bf16.msra.mxu0 %v3028
          %4721 = vmatpush.bf16.msra.mxu0 %v3026
          %4722 = vmatpush.bf16.msra.mxu0 %v3024
          %4723 = vmatpush.bf16.msra.mxu0 %v3022
          %4724 = vmatpush.bf16.msra.mxu0 %v3020
          %4725 = vmatpush.bf16.msra.mxu0 %v3018
          %4726 = vmatmul.bf16.gmra.mxu0 %v1008
          %v4727 = vpop.f32.mrf.mxu0
          %v4728 = vadd.f32 %v4709, %v4727
          %v4729 = vpop.f32.mrf.mxu0
          %v4730 = vadd.f32 %v4711, %v4729
          %4731 = vmatmul.bf16.gmra.mxu0 %v1040
          %v4732 = vpop.f32.mrf.mxu0
          %v4733 = vadd.f32 %v4714, %v4732
          %v4734 = vpop.f32.mrf.mxu0
          %v4735 = vadd.f32 %v4716, %v4734
          %4736 = vdwg.mxu0
          %4737 = vmatpush.bf16.msra.mxu0 %v3048
          %4738 = vmatpush.bf16.msra.mxu0 %v3046
          %4739 = vmatpush.bf16.msra.mxu0 %v3044
          %4740 = vmatpush.bf16.msra.mxu0 %v3042
          %4741 = vmatpush.bf16.msra.mxu0 %v3040
          %4742 = vmatpush.bf16.msra.mxu0 %v3038
          %4743 = vmatpush.bf16.msra.mxu0 %v3036
          %4744 = vmatpush.bf16.msra.mxu0 %v3034
          %4745 = vmatmul.bf16.gmra.mxu0 %v1009
          %v4746 = vpop.f32.mrf.mxu0
          %v4747 = vadd.f32 %v4728, %v4746
          %v4748 = vpop.f32.mrf.mxu0
          %v4749 = vadd.f32 %v4730, %v4748
          %4750 = vmatmul.bf16.gmra.mxu0 %v1041
          %v4751 = vpop.f32.mrf.mxu0
          %v4752 = vadd.f32 %v4733, %v4751
          %v4753 = vpop.f32.mrf.mxu0
          %v4754 = vadd.f32 %v4735, %v4753
          %4755 = vdwg.mxu0
          %4756 = vmatpush.bf16.msra.mxu0 %v3064
          %4757 = vmatpush.bf16.msra.mxu0 %v3062
          %4758 = vmatpush.bf16.msra.mxu0 %v3060
          %4759 = vmatpush.bf16.msra.mxu0 %v3058
          %4760 = vmatpush.bf16.msra.mxu0 %v3056
          %4761 = vmatpush.bf16.msra.mxu0 %v3054
          %4762 = vmatpush.bf16.msra.mxu0 %v3052
          %4763 = vmatpush.bf16.msra.mxu0 %v3050
          %4764 = vmatmul.bf16.gmra.mxu0 %v1010
          %v4765 = vpop.f32.mrf.mxu0
          %v4766 = vadd.f32 %v4747, %v4765
          %v4767 = vpop.f32.mrf.mxu0
          %v4768 = vadd.f32 %v4749, %v4767
          %4769 = vmatmul.bf16.gmra.mxu0 %v1042
          %v4770 = vpop.f32.mrf.mxu0
          %v4771 = vadd.f32 %v4752, %v4770
          %v4772 = vpop.f32.mrf.mxu0
          %v4773 = vadd.f32 %v4754, %v4772
          %4774 = vdwg.mxu0
          %4775 = vmatpush.bf16.msra.mxu0 %v3080
          %4776 = vmatpush.bf16.msra.mxu0 %v3078
          %4777 = vmatpush.bf16.msra.mxu0 %v3076
          %4778 = vmatpush.bf16.msra.mxu0 %v3074
          %4779 = vmatpush.bf16.msra.mxu0 %v3072
          %4780 = vmatpush.bf16.msra.mxu0 %v3070
          %4781 = vmatpush.bf16.msra.mxu0 %v3068
          %4782 = vmatpush.bf16.msra.mxu0 %v3066
          %4783 = vmatmul.bf16.gmra.mxu0 %v1011
          %v4784 = vpop.f32.mrf.mxu0
          %v4785 = vadd.f32 %v4766, %v4784
          %v4786 = vpop.f32.mrf.mxu0
          %v4787 = vadd.f32 %v4768, %v4786
          %4788 = vmatmul.bf16.gmra.mxu0 %v1043
          %v4789 = vpop.f32.mrf.mxu0
          %v4790 = vadd.f32 %v4771, %v4789
          %v4791 = vpop.f32.mrf.mxu0
          %v4792 = vadd.f32 %v4773, %v4791
          %4793 = vdwg.mxu0
          %4794 = vmatpush.bf16.msra.mxu0 %v3096
          %4795 = vmatpush.bf16.msra.mxu0 %v3094
          %4796 = vmatpush.bf16.msra.mxu0 %v3092
          %4797 = vmatpush.bf16.msra.mxu0 %v3090
          %4798 = vmatpush.bf16.msra.mxu0 %v3088
          %4799 = vmatpush.bf16.msra.mxu0 %v3086
          %4800 = vmatpush.bf16.msra.mxu0 %v3084
          %4801 = vmatpush.bf16.msra.mxu0 %v3082
          %4802 = vmatmul.bf16.gmra.mxu0 %v1012
          %v4803 = vpop.f32.mrf.mxu0
          %v4804 = vadd.f32 %v4785, %v4803
          %v4805 = vpop.f32.mrf.mxu0
          %v4806 = vadd.f32 %v4787, %v4805
          %4807 = vmatmul.bf16.gmra.mxu0 %v1044
          %v4808 = vpop.f32.mrf.mxu0
          %v4809 = vadd.f32 %v4790, %v4808
          %v4810 = vpop.f32.mrf.mxu0
          %v4811 = vadd.f32 %v4792, %v4810
          %4812 = vdwg.mxu0
          %4813 = vmatpush.bf16.msra.mxu0 %v3112
          %4814 = vmatpush.bf16.msra.mxu0 %v3110
          %4815 = vmatpush.bf16.msra.mxu0 %v3108
          %4816 = vmatpush.bf16.msra.mxu0 %v3106
          %4817 = vmatpush.bf16.msra.mxu0 %v3104
          %4818 = vmatpush.bf16.msra.mxu0 %v3102
          %4819 = vmatpush.bf16.msra.mxu0 %v3100
          %4820 = vmatpush.bf16.msra.mxu0 %v3098
          %4821 = vmatmul.bf16.gmra.mxu0 %v1013
          %v4822 = vpop.f32.mrf.mxu0
          %v4823 = vadd.f32 %v4804, %v4822
          %v4824 = vpop.f32.mrf.mxu0
          %v4825 = vadd.f32 %v4806, %v4824
          %4826 = vmatmul.bf16.gmra.mxu0 %v1045
          %v4827 = vpop.f32.mrf.mxu0
          %v4828 = vadd.f32 %v4809, %v4827
          %v4829 = vpop.f32.mrf.mxu0
          %v4830 = vadd.f32 %v4811, %v4829
          %4831 = vdwg.mxu0
          %4832 = vmatpush.bf16.msra.mxu0 %v3128
          %4833 = vmatpush.bf16.msra.mxu0 %v3126
          %4834 = vmatpush.bf16.msra.mxu0 %v3124
          %4835 = vmatpush.bf16.msra.mxu0 %v3122
          %4836 = vmatpush.bf16.msra.mxu0 %v3120
          %4837 = vmatpush.bf16.msra.mxu0 %v3118
          %4838 = vmatpush.bf16.msra.mxu0 %v3116
          %4839 = vmatpush.bf16.msra.mxu0 %v3114
          %4840 = vmatmul.bf16.gmra.mxu0 %v1014
          %v4841 = vpop.f32.mrf.mxu0
          %v4842 = vadd.f32 %v4823, %v4841
          %v4843 = vpop.f32.mrf.mxu0
          %v4844 = vadd.f32 %v4825, %v4843
          %4845 = vmatmul.bf16.gmra.mxu0 %v1046
          %v4846 = vpop.f32.mrf.mxu0
          %v4847 = vadd.f32 %v4828, %v4846
          %v4848 = vpop.f32.mrf.mxu0
          %v4849 = vadd.f32 %v4830, %v4848
          %4850 = vdwg.mxu0
          %4851 = vmatpush.bf16.msra.mxu0 %v3144
          %4852 = vmatpush.bf16.msra.mxu0 %v3142
          %4853 = vmatpush.bf16.msra.mxu0 %v3140
          %4854 = vmatpush.bf16.msra.mxu0 %v3138
          %4855 = vmatpush.bf16.msra.mxu0 %v3136
          %4856 = vmatpush.bf16.msra.mxu0 %v3134
          %4857 = vmatpush.bf16.msra.mxu0 %v3132
          %4858 = vmatpush.bf16.msra.mxu0 %v3130
          %4859 = vmatmul.bf16.gmra.mxu0 %v1015
          %v4860 = vpop.f32.mrf.mxu0
          %v4861 = vadd.f32 %v4842, %v4860
          %v4862 = vpop.f32.mrf.mxu0
          %v4863 = vadd.f32 %v4844, %v4862
          %4864 = vmatmul.bf16.gmra.mxu0 %v1047
          %v4865 = vpop.f32.mrf.mxu0
          %v4866 = vadd.f32 %v4847, %v4865
          %v4867 = vpop.f32.mrf.mxu0
          %v4868 = vadd.f32 %v4849, %v4867
          %4869 = vdwg.mxu0
          %4870 = vmatpush.bf16.msra.mxu0 %v3160
          %4871 = vmatpush.bf16.msra.mxu0 %v3158
          %4872 = vmatpush.bf16.msra.mxu0 %v3156
          %4873 = vmatpush.bf16.msra.mxu0 %v3154
          %4874 = vmatpush.bf16.msra.mxu0 %v3152
          %4875 = vmatpush.bf16.msra.mxu0 %v3150
          %4876 = vmatpush.bf16.msra.mxu0 %v3148
          %4877 = vmatpush.bf16.msra.mxu0 %v3146
          %4878 = vmatmul.bf16.gmra.mxu0 %v1016
          %v4879 = vpop.f32.mrf.mxu0
          %v4880 = vadd.f32 %v4861, %v4879
          %v4881 = vpop.f32.mrf.mxu0
          %v4882 = vadd.f32 %v4863, %v4881
          %4883 = vmatmul.bf16.gmra.mxu0 %v1048
          %v4884 = vpop.f32.mrf.mxu0
          %v4885 = vadd.f32 %v4866, %v4884
          %v4886 = vpop.f32.mrf.mxu0
          %v4887 = vadd.f32 %v4868, %v4886
          %4888 = vdwg.mxu0
          %v4889 = vmul.f32 %v4272, %v4272
          %v4890 = vmul.f32 %v4274, %v4274
          %v4891 = vmul.f32 %v4277, %v4277
          %v4892 = vmul.f32 %v4279, %v4279
          %v4893 = vmul.f32 %v4880, %v4880
          %v4894 = vmul.f32 %v4882, %v4882
          %v4895 = vmul.f32 %v4885, %v4885
          %v4896 = vmul.f32 %v4887, %v4887
          %v4897 = vadd.f32 %v4889, %v4893
          %v4898 = vadd.f32 %v4890, %v4894
          %v4899 = vadd.f32 %v4891, %v4895
          %v4900 = vadd.f32 %v4892, %v4896
          %v4901 = vrsqrt.pop %v4897
          %v4902 = vmul.f32 %v4901, %v4897
          %v4903 = vmul.f32 %v4902, %v4901
          %v4904 = vmul.f32 0.5, %v4903
          %v4905 = vsub.f32 1.5, %v4904
          %v4906 = vmul.f32 %v4901, %v4905
          %v4907 = vmul.f32 %v4897, %v4906
          %vm4908 = vcmp.eq.f32.partialorder %v4897, inf
          %v4909 = vsel %vm4908, %v4897, %v4907
          %vm4910 = vcmp.eq.f32.partialorder %v4897, 0.0
          %v4911 = vand.u32 %v4897, 2147483648
          %v4912 = vsel %vm4910, %v4911, %v4909
          %v4913 = vrsqrt.pop %v4898
          %v4914 = vmul.f32 %v4913, %v4898
          %v4915 = vmul.f32 %v4914, %v4913
          %v4916 = vmul.f32 0.5, %v4915
          %v4917 = vsub.f32 1.5, %v4916
          %v4918 = vmul.f32 %v4913, %v4917
          %v4919 = vmul.f32 %v4898, %v4918
          %vm4920 = vcmp.eq.f32.partialorder %v4898, inf
          %v4921 = vsel %vm4920, %v4898, %v4919
          %vm4922 = vcmp.eq.f32.partialorder %v4898, 0.0
          %v4923 = vand.u32 %v4898, 2147483648
          %v4924 = vsel %vm4922, %v4923, %v4921
          %v4925 = vrsqrt.pop %v4899
          %v4926 = vmul.f32 %v4925, %v4899
          %v4927 = vmul.f32 %v4926, %v4925
          %v4928 = vmul.f32 0.5, %v4927
          %v4929 = vsub.f32 1.5, %v4928
          %v4930 = vmul.f32 %v4925, %v4929
          %v4931 = vmul.f32 %v4899, %v4930
          %vm4932 = vcmp.eq.f32.partialorder %v4899, inf
          %v4933 = vsel %vm4932, %v4899, %v4931
          %vm4934 = vcmp.eq.f32.partialorder %v4899, 0.0
          %v4935 = vand.u32 %v4899, 2147483648
          %v4936 = vsel %vm4934, %v4935, %v4933
          %v4937 = vrsqrt.pop %v4900
          %v4938 = vmul.f32 %v4937, %v4900
          %v4939 = vmul.f32 %v4938, %v4937
          %v4940 = vmul.f32 0.5, %v4939
          %v4941 = vsub.f32 1.5, %v4940
          %v4942 = vmul.f32 %v4937, %v4941
          %v4943 = vmul.f32 %v4900, %v4942
          %vm4944 = vcmp.eq.f32.partialorder %v4900, inf
          %v4945 = vsel %vm4944, %v4900, %v4943
          %vm4946 = vcmp.eq.f32.partialorder %v4900, 0.0
          %v4947 = vand.u32 %v4900, 2147483648
          %v4948 = vsel %vm4946, %v4947, %v4945
          %s4949 = sadd.s32 %s211, 32
          %p4950 = scmp.le.s32.totalorder %s4949, %s212
          // Predicated region
          $region41: #{tpu_custom_call.1} parent=39 // pred_check
            %p4951 = pneg %p4950
          $region42: #{tpu_custom_call.1} parent=39 // pred_check_branch
            %4953 = sbr.rel (%p4951) target = $region44
          $region43: #{tpu_custom_call.1} parent=39 // pred_region
            %4954 = vst [vmem:[%s208] sm:$0xff] %v4912
            %4955 = vst [vmem:[%s208 + $0x8] sm:$0xff] %v4924
            %4956 = vst [vmem:[%s208 + $0x10] sm:$0xff] %v4936
            %4957 = vst [vmem:[%s208 + $0x18] sm:$0xff] %v4948
          $region44: #{tpu_custom_call.1} parent=39 // pred_fallthru
            _
          %p4958 = scmp.gt.s32.totalorder %s4949, %s212
          // Predicated region
          $region45: #{tpu_custom_call.1} parent=39 // pred_check
            %p4959 = pneg %p4958
          $region46: #{tpu_custom_call.1} parent=39 // pred_check_branch
            %4961 = sbr.rel (%p4959) target = $region48
          $region47: #{tpu_custom_call.1} parent=39 // pred_region
            %v4962 = vlaneseq
            %v4963 = vshrl.u32 %v4962, 7
            %v4964 = vadd.s32 %v4963, 8
            %v4965 = vadd.s32 %v4963, 16
            %v4966 = vadd.s32 %v4963, 24
            %v4967 = vstv %s211
            %v4968 = vadd.s32 %v4963, %v4967
            %v4969 = vadd.s32 %v4964, %v4967
            %v4970 = vadd.s32 %v4965, %v4967
            %v4971 = vadd.s32 %v4966, %v4967
            %v4972 = vstv %s212
            %vm4973 = vcmp.lt.s32.totalorder %v4968, %v4972
            %vm4974 = vcmp.lt.s32.totalorder %v4969, %v4972
            %vm4975 = vcmp.lt.s32.totalorder %v4970, %v4972
            %vm4976 = vcmp.lt.s32.totalorder %v4971, %v4972
            %v4977 = vsel %vm4973, %v4912, 0.0
            %v4978 = vsel %vm4974, %v4924, 0.0
            %v4979 = vsel %vm4975, %v4936, 0.0
            %v4980 = vsel %vm4976, %v4948, 0.0
            %4981 = vst [vmem:[%s208] sm:$0xff] %v4977
            %4982 = vst [vmem:[%s208 + $0x8] sm:$0xff] %v4978
            %4983 = vst [vmem:[%s208 + $0x10] sm:$0xff] %v4979
            %4984 = vst [vmem:[%s208 + $0x18] sm:$0xff] %v4980
          $region48: #{tpu_custom_call.1} parent=39 // pred_fallthru
            _
        $region40: #{tpu_custom_call.1} parent=27 // pred_fallthru
          _
        %p4985 = scmp.ge.s32.totalorder %s211, %s212
        // Predicated region
        $region49: #{tpu_custom_call.1} parent=27 // pred_check
          %p4986 = pneg %p4985
        $region50: #{tpu_custom_call.1} parent=27 // pred_check_branch
          %4988 = sbr.rel (%p4986) target = $region52
        $region51: #{tpu_custom_call.1} parent=27 // pred_region
          %4989 = vst [vmem:[%s208] sm:$0xff] 0.0
          %4990 = vst [vmem:[%s208 + $0x8] sm:$0xff] 0.0
          %4991 = vst [vmem:[%s208 + $0x10] sm:$0xff] 0.0
          %4992 = vst [vmem:[%s208 + $0x18] sm:$0xff] 0.0
        $region52: #{tpu_custom_call.1} parent=27 // pred_fallthru
          _
        %s4993 = sand.u32 %s100, 1
        %s4994 = scalar_lea.sflag [#allocation6], %s4993
        %s4995 = sand.u32 %s100, 1
        %s4996 = smul.addr %s4995, 32
        %s4997 = scalar_lea.vmem [#allocation9], %s4996
        // Predicated region
        $region53: #{tpu_custom_call.1} parent=27 // pred_check
          %p4998 = pneg %p110
        $region54: #{tpu_custom_call.1} parent=27 // pred_check_branch
          %5000 = sbr.rel (%p4998) target = $region56
        $region55: #{tpu_custom_call.1} parent=27 // pred_region
          %s5001 = smul.u32 4, %s34
          %5003 = vsyncadd %s4994, 0
          %s5004 = smul.addr %s33, 4
          %s5005 = sadd.s32 %s5001, %s5004
          %s5006 = smul.addr %s5005, 8
          %s5007 = scalar_lea.hbm %s3, %s5006
          %s5008 = sshll.u32 %s4997, 4
          %s5009 = int_to_ptr.vmem [resolvable:$true] %s5008
          %s5010 = sshll.u32 %s5007, 4
          %s5011 = int_to_ptr.hbm [resolvable:$true] %s5010
          %5016 = dma.vmem_to_hbm [thread:$0]  %s5009, 512, %s5011, %s4994, 128, 128, 8
        $region56: #{tpu_custom_call.1} parent=27 // pred_fallthru
          _
      $region28: #{tpu_custom_call.1} parent=5 // pred_fallthru
        _
      %p5017 = scmp.le.s32.totalorder 2, %s24
      // Predicated region
      $region57: #{tpu_custom_call.1} parent=5 // pred_check
        %p5018 = pneg %p5017
      $region58: #{tpu_custom_call.1} parent=5 // pred_check_branch
        %5020 = sbr.rel (%p5018) target = $region60
      $region59: #{tpu_custom_call.1} parent=5 // pred_region
        %s5021 = ssub.s32 %s24, 2
        // Predicated region
        $region61: #{tpu_custom_call.1} parent=59 // pred_check
          %p5022 = pneg %p116
        $region62: #{tpu_custom_call.1} parent=59 // pred_check_branch
          %5024 = sbr.rel (%p5022) target = $region64
        $region63: #{tpu_custom_call.1} parent=59 // pred_region
          %s5025 = sand.u32 %s101, 1
          %s5026 = scalar_lea.sflag [#allocation6], %s5025
          %s5027 = sand.u32 %s101, 1
          %s5028 = smul.addr %s5027, 32
          %s5029 = scalar_lea.vmem [#allocation9], %s5028
          %5031 = dma.done %s5026, 512
        $region64: #{tpu_custom_call.1} parent=59 // pred_fallthru
          _
      $region60: #{tpu_custom_call.1} parent=5 // pred_fallthru
        _
    $region6: #{tpu_custom_call.1} parent=1 // loop_footer
      %s28 = sadd.s32 1, %s24
    $region7: #{tpu_custom_call.1} parent=1 // loop_footer_branch
      %23 = sbr.rel target = $region3
    $region8: #{tpu_custom_call.1} parent=1 // loop_exit
      _
    %5032 = vsyncpa [#allocation5], 1
    %s5033 = scalar_lea.sflag [#allocation5], 1
    %5034 = vsyncpa %s5033, 1
    %5035 = vsyncpa [#allocation8], 1
    %5036 = vsyncpa [#allocation6], 1
    %s5037 = scalar_lea.sflag [#allocation6], 1
    %5038 = vsyncpa %s5037, 1

</llo_original>
